<compile_context>
chip_gen: v7x
topology: tpu7x:2x2x1
jax: 0.10.0
libtpu: 0.0.40
codegen_flags: <defaults>
</compile_context>

<pallas_src>
import math
from functools import partial

import jax
import jax.numpy as jnp
from jax.experimental import pallas as pl
from jax.experimental.pallas import tpu as pltpu

LN_EPS = 1e-5  # torch.nn.LayerNorm default


# ---------------------------------------------------------------------------
# Fused kernel: full encoder stack.  grid = (batch_blocks, num_layers)
# ---------------------------------------------------------------------------
def _encoder_stack_kernel(
    x_ref,
    wqkv_ref, bqkv_ref, wo_ref, bo_ref,
    w1_ref, b1_ref, w2_ref, b2_ref,
    g1_ref, be1_ref, g2_ref, be2_ref,
    o_ref,
    act_ref,
    *, nhead, kv_chunk, ffn_chunk, compute_dtype):
  layer = pl.program_id(1)
  num_layers = pl.num_programs(1)

  bt, seq, d_model = act_ref.shape          # batch-major activation tile
  m = bt * seq
  dh = d_model // nhead
  g = bt * nhead
  scale = 1.0 / math.sqrt(dh)

  # ---- layer 0: load the (batch-major, PE-already-added) input block --------
  @pl.when(layer == 0)
  def _():
    act_ref[...] = x_ref[...].astype(jnp.float32)

  x2 = act_ref[...].reshape(m, d_model)     # (M, D) f32 residual stream
  xc = x2.astype(compute_dtype)

  # ---- fused QKV projection: one MXU matmul with M = bt*S rows --------------
  qkv = jnp.dot(xc, wqkv_ref[...], preferred_element_type=jnp.float32) + bqkv_ref[...]
  q = (qkv[:, :d_model] * scale).astype(compute_dtype)
  k = qkv[:, d_model:2 * d_model].astype(compute_dtype)
  v = qkv[:, 2 * d_model:].astype(compute_dtype)

  # ---- split heads: reshape + one transpose (no per-head slice / concat) -----
  def to_heads(t):                          # (M, D) -> (G, S, dh), G = bt*nhead
    return jnp.transpose(t.reshape(bt, seq, nhead, dh), (0, 2, 1, 3)).reshape(g, seq, dh)

  q_g, k_g, v_g = to_heads(q), to_heads(k), to_heads(v)

  # ---- attention: flash-style online softmax over KV chunks ------------------
  # Never materializes the full (G, S, S) f32 score matrix.
  n_kv = seq // kv_chunk
  m_run = jnp.full((g, seq, 1), -jnp.inf, jnp.float32)
  l_run = jnp.zeros((g, seq, 1), jnp.float32)
  acc = jnp.zeros((g, seq, dh), jnp.float32)
  for c in range(n_kv):                      # static, small trip count
    k_c = k_g[:, c * kv_chunk:(c + 1) * kv_chunk, :]
    v_c = v_g[:, c * kv_chunk:(c + 1) * kv_chunk, :]
    s = jnp.einsum('gqd,gkd->gqk', q_g, k_c,
                   preferred_element_type=jnp.float32)       # (G, S, kc) f32
    m_new = jnp.maximum(m_run, jnp.max(s, axis=-1, keepdims=True))
    alpha = jnp.exp(m_run - m_new)
    p = jnp.exp(s - m_new)
    l_run = alpha * l_run + jnp.sum(p, axis=-1, keepdims=True)
    acc = alpha * acc + jnp.einsum('gqk,gkd->gqd', p.astype(compute_dtype), v_c,
                                   preferred_element_type=jnp.float32)
    m_run = m_new
  o_g = acc * pl.reciprocal(l_run, approx=True)              # (G, S, dh) f32

  # ---- merge heads (reshape + one transpose) and out-projection --------------
  attn = jnp.transpose(o_g.reshape(bt, nhead, seq, dh), (0, 2, 1, 3)).reshape(m, d_model)
  attn = jnp.dot(attn.astype(compute_dtype), wo_ref[...],
                 preferred_element_type=jnp.float32) + bo_ref[...]

  # ---- residual + LayerNorm 1 (f32 statistics) -------------------------------
  y = x2 + attn
  mu = jnp.mean(y, axis=-1, keepdims=True)
  var = jnp.mean((y - mu) ** 2, axis=-1, keepdims=True)
  y = (y - mu) * jax.lax.rsqrt(var + LN_EPS) * g1_ref[...] + be1_ref[...]

  # ---- feed-forward (ReLU), hidden dim processed in column chunks ------------
  # ReLU output is cast to bf16 so the (M, 4D) f32 intermediate is never fully live.
  d_ff = w1_ref.shape[-1]
  n_ff = d_ff // ffn_chunk
  yc = y.astype(compute_dtype)
  h2 = None
  for c in range(n_ff):                      # static
    lo = c * ffn_chunk
    h1 = jnp.dot(yc, w1_ref[:, lo:lo + ffn_chunk],
                 preferred_element_type=jnp.float32) + b1_ref[:, lo:lo + ffn_chunk]
    h1 = jnp.maximum(h1, 0.0).astype(compute_dtype)
    part = jnp.dot(h1, w2_ref[lo:lo + ffn_chunk, :],
                   preferred_element_type=jnp.float32)
    h2 = part if h2 is None else h2 + part

  # ---- residual + LayerNorm 2 -------------------------------------------------
  z = y + h2 + b2_ref[...]
  mu2 = jnp.mean(z, axis=-1, keepdims=True)
  var2 = jnp.mean((z - mu2) ** 2, axis=-1, keepdims=True)
  z = (z - mu2) * jax.lax.rsqrt(var2 + LN_EPS) * g2_ref[...] + be2_ref[...]

  z3 = z.reshape(bt, seq, d_model)

  @pl.when(layer < num_layers - 1)           # keep residual stream resident in VMEM
  def _():
    act_ref[...] = z3

  @pl.when(layer == num_layers - 1)          # lane/sublane-dense output store
  def _():
    o_ref[...] = z3.astype(o_ref.dtype)


# ---------------------------------------------------------------------------
# Parameter construction (deterministic, synthetic) and packing
# ---------------------------------------------------------------------------
def make_positional_encoding(S, D):
  position = jnp.arange(S, dtype=jnp.float32)[:, None]
  div_term = jnp.exp(jnp.arange(0, D, 2, dtype=jnp.float32) * (-math.log(10000.0) / D))
  pe = jnp.zeros((S, D), jnp.float32)
  pe = pe.at[:, 0::2].set(jnp.sin(position * div_term))
  pe = pe.at[:, 1::2].set(jnp.cos(position * div_term))
  return pe[:, None, :]                      # (S, 1, D), matching torch buffer


def init_layer_params(key, D):
  ks = jax.random.split(key, 8)

  def rnd(k, shape, scale=0.05):
    return jax.random.normal(k, shape, jnp.float32) * scale

  # torch parameter shapes
  return dict(
      in_proj_weight=rnd(ks[0], (3 * D, D)), in_proj_bias=rnd(ks[1], (3 * D,)),
      out_proj_weight=rnd(ks[2], (D, D)),    out_proj_bias=rnd(ks[3], (D,)),
      linear1_weight=rnd(ks[4], (4 * D, D)), linear1_bias=rnd(ks[5], (4 * D,)),
      linear2_weight=rnd(ks[6], (D, 4 * D)), linear2_bias=rnd(ks[7], (D,)),
      norm1_weight=jnp.ones((D,), jnp.float32), norm1_bias=jnp.zeros((D,), jnp.float32),
      norm2_weight=jnp.ones((D,), jnp.float32), norm2_bias=jnp.zeros((D,), jnp.float32),
  )


def pack_params(layers, compute_dtype=jnp.bfloat16):
  """Stack per-layer torch-shaped params along a leading layer dim, pre-transpose
  the big matrices for x @ W, cast matmul weights to bf16 (biases/LN stay f32)."""
  def stk(name):
    return jnp.stack([p[name] for p in layers])

  wqkv = jnp.transpose(stk('in_proj_weight'), (0, 2, 1)).astype(compute_dtype)  # (L, D, 3D)
  wo = jnp.transpose(stk('out_proj_weight'), (0, 2, 1)).astype(compute_dtype)   # (L, D, D)
  w1 = jnp.transpose(stk('linear1_weight'), (0, 2, 1)).astype(compute_dtype)    # (L, D, 4D)
  w2 = jnp.transpose(stk('linear2_weight'), (0, 2, 1)).astype(compute_dtype)    # (L, 4D, D)
  bqkv = stk('in_proj_bias')[:, None, :]                                        # (L, 1, 3D)
  bo = stk('out_proj_bias')[:, None, :]
  b1 = stk('linear1_bias')[:, None, :]
  b2 = stk('linear2_bias')[:, None, :]
  g1 = stk('norm1_weight')[:, None, :]
  be1 = stk('norm1_bias')[:, None, :]
  g2 = stk('norm2_weight')[:, None, :]
  be2 = stk('norm2_bias')[:, None, :]
  return (wqkv, bqkv, wo, bo, w1, b1, w2, b2, g1, be1, g2, be2)


# ---------------------------------------------------------------------------
# Per-generation sizing helpers
# ---------------------------------------------------------------------------
def _derive_vmem_limit():
  """~96 MiB on v5e/v6e (128 MiB VMEM), ~48 MiB on v7x (64 MiB VMEM)."""
  cap = None
  try:
    cap = getattr(pltpu.get_tpu_info(), "vmem_capacity_bytes", None)
  except Exception:
    cap = None
  if not cap:
    return 48 * 1024 * 1024            # safe on every generation
  return max(32 * 1024 * 1024, min(cap * 3 // 4, cap - 16 * 1024 * 1024))


def _pick_chunk(total, target):
  """Largest divisor of `total` that is <= target, preferring 256/128 alignment."""
  if total <= target:
    return total
  for align in (256, 128, 8, 1):
    start = target - target % align
    for c in range(start, 0, -align):
      if c > 0 and total % c == 0:
        return c
  return total


def _pick_batch_block(B, S, D, vmem_limit):
  """Largest divisor of B whose activation footprint fits ~1/3 of the VMEM budget;
  prefer >= 2 batch blocks (v7x megacore) when M = bt*S stays reasonably large."""
  bytes_per_b = S * D * (4 + 2 * 2 + 2 * 2)   # f32 scratch + 2x bf16 in + 2x bf16 out
  budget = max(vmem_limit // 3, bytes_per_b)
  bt = 1
  for d in range(1, B + 1):
    if B % d == 0 and d * bytes_per_b <= budget:
      bt = d
  if bt == B and B >= 2:
    proper = max(d for d in range(1, B) if B % d == 0)   # largest proper divisor
    if proper * S >= 256:                                # keep M large enough for MXU
      bt = proper
  return bt


# ---------------------------------------------------------------------------
# Full forward pass (matches TransformerEncoder.forward, eval mode)
# ---------------------------------------------------------------------------
def transformer_encoder_forward(x_sbd, packed_params, nhead, *,
                                batch_block=None, kv_chunk=None, ffn_chunk=None,
                                compute_dtype=jnp.bfloat16, io_dtype=jnp.bfloat16):
  S, B, D = x_sbd.shape
  L = packed_params[0].shape[0]
  d_ff = packed_params[4].shape[-1]
  assert D % nhead == 0, "hidden_size must be divisible by nhead"
  assert D % 2 == 0, "sinusoidal PE assumes an even hidden_size"

  vmem_limit = _derive_vmem_limit()
  bt = batch_block if batch_block is not None else _pick_batch_block(B, S, D, vmem_limit)
  assert B % bt == 0, "batch block must tile the batch"
  kc = kv_chunk if kv_chunk is not None else _pick_chunk(S, 512)
  assert S % kc == 0, "kv_chunk must divide the sequence length"
  fc = ffn_chunk if ffn_chunk is not None else _pick_chunk(d_ff, 2048)
  assert d_ff % fc == 0, "ffn_chunk must divide dim_feedforward"

  # Positional-encoding add (dropout is identity in eval) + batch-major layout +
  # bf16 cast are done here as fused XLA ops, so kernel blocks are lane/sublane dense.
  pe = make_positional_encoding(S, D)                       # (S, 1, D) f32
  xb = jnp.transpose(x_sbd + pe, (1, 0, 2)).astype(io_dtype)  # (B, S, D)

  # Per-layer weight streams: Squeezed leading layer dim; deeper buffering only
  # when M is small (DMA-bound regime) and the stack is deep enough to benefit.
  deep_buffer = (bt * S < 512) and (L >= 3)
  big_mats = {0, 2, 4, 6}                                   # wqkv, wo, w1, w2
  weight_specs = []
  for i, p in enumerate(packed_params):
    bs = (pl.Squeezed(),) + p.shape[1:]
    if deep_buffer and i in big_mats:
      weight_specs.append(pl.BlockSpec(bs, lambda b, l: (l, 0, 0),
                                       pipeline_mode=pl.Buffered(3)))
    else:
      weight_specs.append(pl.BlockSpec(bs, lambda b, l: (l, 0, 0)))

  kernel = partial(_encoder_stack_kernel, nhead=nhead, kv_chunk=kc, ffn_chunk=fc,
                   compute_dtype=compute_dtype)

  out = pl.pallas_call(
      kernel,
      out_shape=jax.ShapeDtypeStruct((B, S, D), io_dtype),
      grid=(B // bt, L),
      in_specs=[
          pl.BlockSpec((bt, S, D), lambda b, l: (b, 0, 0)),   # x block (batch-major)
          *weight_specs,                                      # per-layer weight stream
      ],
      out_specs=pl.BlockSpec((bt, S, D), lambda b, l: (b, 0, 0)),
      scratch_shapes=[pltpu.VMEM((bt, S, D), jnp.float32)],   # resident activation
      compiler_params=pltpu.CompilerParams(
          dimension_semantics=("parallel", "arbitrary"),
          vmem_limit_bytes=vmem_limit),
  )(xb, *packed_params)

  # back to PyTorch's [seq, batch, hidden] convention and the input dtype
  return jnp.transpose(out, (1, 0, 2)).astype(x_sbd.dtype)


if __name__ == "__main__":
  SEQ, BATCH, HIDDEN = 8, 2, 32
  NHEAD, NUM_LAYERS = 8, 2

  key = jax.random.PRNGKey(0)
  kx, kp = jax.random.split(key)
  x = jax.random.normal(kx, (SEQ, BATCH, HIDDEN), jnp.float32)
  layer_params = [init_layer_params(jax.random.fold_in(kp, i), HIDDEN)
                  for i in range(NUM_LAYERS)]
  packed = pack_params(layer_params, compute_dtype=jnp.bfloat16)

  out = transformer_encoder_forward(x, packed, NHEAD)
  out = jax.block_until_ready(out)

  assert out.shape == (SEQ, BATCH, HIDDEN)
  assert out.dtype == x.dtype
  assert bool(jnp.all(jnp.isfinite(out)))
  print("KERNEL_OK")
</pallas_src>

<mosaic_0001>
module attributes {stable_mosaic.version = 11 : i64} {
  func.func @_encoder_stack_kernel(%arg0: i32, %arg1: i32, %arg2: memref<2x8x32xbf16, #tpu.memory_space<vmem>>, %arg3: memref<1x32x96xbf16, #tpu.memory_space<vmem>>, %arg4: memref<1x1x96xf32, #tpu.memory_space<vmem>>, %arg5: memref<1x32x32xbf16, #tpu.memory_space<vmem>>, %arg6: memref<1x1x32xf32, #tpu.memory_space<vmem>>, %arg7: memref<1x32x128xbf16, #tpu.memory_space<vmem>>, %arg8: memref<1x1x128xf32, #tpu.memory_space<vmem>>, %arg9: memref<1x128x32xbf16, #tpu.memory_space<vmem>>, %arg10: memref<1x1x32xf32, #tpu.memory_space<vmem>>, %arg11: memref<1x1x32xf32, #tpu.memory_space<vmem>>, %arg12: memref<1x1x32xf32, #tpu.memory_space<vmem>>, %arg13: memref<1x1x32xf32, #tpu.memory_space<vmem>>, %arg14: memref<1x1x32xf32, #tpu.memory_space<vmem>>, %arg15: memref<2x8x32xbf16, #tpu.memory_space<vmem>>, %arg16: memref<2x8x32xf32, #tpu.memory_space<vmem>>) attributes {dimension_semantics = [#tpu.dimension_semantics<parallel>, #tpu.dimension_semantics<arbitrary>], iteration_bounds = array<i64: 1, 2>, scalar_prefetch = 0 : i64, scratch_operands = 1 : i64, tpu.core_type = #tpu.core_type<tc>, window_params = [{transform_indices = @transform_0, window_bounds = array<i64: 2, 8, 32>}, {transform_indices = @transform_1, window_bounds = array<i64: 1, 32, 96>}, {transform_indices = @transform_2, window_bounds = array<i64: 1, 1, 96>}, {transform_indices = @transform_3, window_bounds = array<i64: 1, 32, 32>}, {transform_indices = @transform_4, window_bounds = array<i64: 1, 1, 32>}, {transform_indices = @transform_5, window_bounds = array<i64: 1, 32, 128>}, {transform_indices = @transform_6, window_bounds = array<i64: 1, 1, 128>}, {transform_indices = @transform_7, window_bounds = array<i64: 1, 128, 32>}, {transform_indices = @transform_8, window_bounds = array<i64: 1, 1, 32>}, {transform_indices = @transform_9, window_bounds = array<i64: 1, 1, 32>}, {transform_indices = @transform_10, window_bounds = array<i64: 1, 1, 32>}, {transform_indices = @transform_11, window_bounds = array<i64: 1, 1, 32>}, {transform_indices = @transform_12, window_bounds = array<i64: 1, 1, 32>}, {transform_indices = @transform_13, window_bounds = array<i64: 2, 8, 32>}]} {
    %c0_i32 = arith.constant 0 : i32
    %0 = arith.cmpi eq, %arg1, %c0_i32 : i32
    %1 = arith.extui %0 : i1 to i32
    %c0_i32_0 = arith.constant 0 : i32
    %2 = arith.cmpi ne, %1, %c0_i32_0 : i32
    scf.if %2 {
      %c0_64 = arith.constant 0 : index
      %c0_65 = arith.constant 0 : index
      %c0_66 = arith.constant 0 : index
      %144 = vector.load %arg2[%c0_64, %c0_65, %c0_66] : memref<2x8x32xbf16, #tpu.memory_space<vmem>>, vector<2x8x32xbf16>
      %145 = arith.extf %144 : vector<2x8x32xbf16> to vector<2x8x32xf32>
      %c0_67 = arith.constant 0 : index
      %c0_68 = arith.constant 0 : index
      %c0_69 = arith.constant 0 : index
      %146 = vector.load %arg16[%c0_67, %c0_68, %c0_69] : memref<2x8x32xf32, #tpu.memory_space<vmem>>, vector<2x8x32xf32>
      tpu.vector_store %arg16[%c0_67, %c0_68, %c0_69], %145 {strides = array<i32>} : memref<2x8x32xf32, #tpu.memory_space<vmem>>, vector<2x8x32xf32>,
    } else {
    }
    %c0 = arith.constant 0 : index
    %c0_1 = arith.constant 0 : index
    %c0_2 = arith.constant 0 : index
    %3 = vector.load %arg16[%c0, %c0_1, %c0_2] : memref<2x8x32xf32, #tpu.memory_space<vmem>>, vector<2x8x32xf32>
    %4 = vector.shape_cast %3 : vector<2x8x32xf32> to vector<16x32xf32>
    %5 = arith.truncf %4 : vector<16x32xf32> to vector<16x32xbf16>
    %c0_3 = arith.constant 0 : index
    %c0_4 = arith.constant 0 : index
    %c0_5 = arith.constant 0 : index
    %6 = vector.load %arg3[%c0_3, %c0_4, %c0_5] : memref<1x32x96xbf16, #tpu.memory_space<vmem>>, vector<1x32x96xbf16>
    %7 = vector.shape_cast %6 : vector<1x32x96xbf16> to vector<32x96xbf16>
    %cst = arith.constant dense<0.000000e+00> : vector<16x96xf32>
    %8 = tpu.matmul %5, %7, %cst {dimension_numbers = #tpu.dot_dimension_numbers<[1], [0], [0], [1], [0, 0, 1, 1], [], []>} : vector<16x32xbf16>, vector<32x96xbf16>, vector<16x96xf32> -> vector<16x96xf32>
    %c0_6 = arith.constant 0 : index
    %c0_7 = arith.constant 0 : index
    %c0_8 = arith.constant 0 : index
    %9 = vector.load %arg4[%c0_6, %c0_7, %c0_8] : memref<1x1x96xf32, #tpu.memory_space<vmem>>, vector<1x1x96xf32>
    %10 = vector.shape_cast %9 : vector<1x1x96xf32> to vector<1x96xf32>
    %11 = vector.broadcast %10 : vector<1x96xf32> to vector<16x96xf32>
    %12 = arith.addf %8, %11 : vector<16x96xf32>
    %13 = vector.extract_strided_slice %12 {offsets = [0, 0], sizes = [16, 32], strides = [1, 1]} : vector<16x96xf32> to vector<16x32xf32>
    %cst_9 = arith.constant 5.000000e-01 : f32
    %14 = vector.broadcast %cst_9 : f32 to vector<16x32xf32>
    %15 = arith.mulf %13, %14 : vector<16x32xf32>
    %16 = arith.truncf %15 : vector<16x32xf32> to vector<16x32xbf16>
    %17 = vector.extract_strided_slice %12 {offsets = [0, 32], sizes = [16, 32], strides = [1, 1]} : vector<16x96xf32> to vector<16x32xf32>
    %18 = arith.truncf %17 : vector<16x32xf32> to vector<16x32xbf16>
    %19 = vector.extract_strided_slice %12 {offsets = [0, 64], sizes = [16, 32], strides = [1, 1]} : vector<16x96xf32> to vector<16x32xf32>
    %20 = arith.truncf %19 : vector<16x32xf32> to vector<16x32xbf16>
    %21 = vector.shape_cast %16 : vector<16x32xbf16> to vector<2x8x8x4xbf16>
    %22 = tpu.transpose %21, [0, 2, 1, 3] : vector<2x8x8x4xbf16> -> vector<2x8x8x4xbf16>
    %23 = vector.shape_cast %22 : vector<2x8x8x4xbf16> to vector<16x8x4xbf16>
    %24 = vector.shape_cast %18 : vector<16x32xbf16> to vector<2x8x8x4xbf16>
    %25 = tpu.transpose %24, [0, 2, 1, 3] : vector<2x8x8x4xbf16> -> vector<2x8x8x4xbf16>
    %26 = vector.shape_cast %25 : vector<2x8x8x4xbf16> to vector<16x8x4xbf16>
    %27 = vector.shape_cast %20 : vector<16x32xbf16> to vector<2x8x8x4xbf16>
    %28 = tpu.transpose %27, [0, 2, 1, 3] : vector<2x8x8x4xbf16> -> vector<2x8x8x4xbf16>
    %29 = vector.shape_cast %28 : vector<2x8x8x4xbf16> to vector<16x8x4xbf16>
    %cst_10 = arith.constant 0xFF800000 : f32
    %30 = vector.broadcast %cst_10 : f32 to vector<16x8x1xf32>
    %cst_11 = arith.constant 0.000000e+00 : f32
    %31 = vector.broadcast %cst_11 : f32 to vector<16x8x1xf32>
    %cst_12 = arith.constant 0.000000e+00 : f32
    %32 = vector.broadcast %cst_12 : f32 to vector<16x8x4xf32>
    "tpu.trace_start"() <{level = 10 : i32, message = "gqd,gkd->gqk"}> : () -> ()
    %cst_13 = arith.constant dense<0.000000e+00> : vector<16x8x8xf32>
    %33 = tpu.matmul %23, %26, %cst_13 {dimension_numbers = #tpu.dot_dimension_numbers<[2], [2], [1], [1], [0, 0, 0, 1, 1, 1], [0], [0]>} : vector<16x8x4xbf16>, vector<16x8x4xbf16>, vector<16x8x8xf32> -> vector<16x8x8xf32>
    "tpu.trace_stop"() : () -> ()
    %cst_14 = arith.constant dense<0xFF800000> : vector<16x8xf32>
    %34 = vector.multi_reduction <maximumf>, %33, %cst_14 [2] : vector<16x8x8xf32> to vector<16x8xf32>
    %35 = vector.shape_cast %34 : vector<16x8xf32> to vector<16x8x1xf32>
    %36 = arith.maximumf %30, %35 : vector<16x8x1xf32>
    %37 = arith.subf %30, %36 : vector<16x8x1xf32>
    %38 = math.exp %37 : vector<16x8x1xf32>
    %39 = vector.broadcast %36 : vector<16x8x1xf32> to vector<16x8x8xf32>
    %40 = arith.subf %33, %39 : vector<16x8x8xf32>
    %41 = math.exp %40 : vector<16x8x8xf32>
    %42 = arith.mulf %38, %31 : vector<16x8x1xf32>
    %cst_15 = arith.constant dense<0.000000e+00> : vector<16x8xf32>
    %43 = vector.multi_reduction <add>, %41, %cst_15 [2] : vector<16x8x8xf32> to vector<16x8xf32>
    %44 = vector.shape_cast %43 : vector<16x8xf32> to vector<16x8x1xf32>
    %45 = arith.addf %42, %44 : vector<16x8x1xf32>
    %46 = vector.broadcast %38 : vector<16x8x1xf32> to vector<16x8x4xf32>
    %47 = arith.mulf %46, %32 : vector<16x8x4xf32>
    %48 = arith.truncf %41 : vector<16x8x8xf32> to vector<16x8x8xbf16>
    "tpu.trace_start"() <{level = 10 : i32, message = "gqk,gkd->gqd"}> : () -> ()
    %cst_16 = arith.constant dense<0.000000e+00> : vector<16x8x4xf32>
    %49 = tpu.matmul %48, %29, %cst_16 {dimension_numbers = #tpu.dot_dimension_numbers<[2], [1], [1], [2], [0, 0, 0, 1, 1, 2], [0], [0]>} : vector<16x8x8xbf16>, vector<16x8x4xbf16>, vector<16x8x4xf32> -> vector<16x8x4xf32>
    "tpu.trace_stop"() : () -> ()
    %50 = arith.addf %47, %49 : vector<16x8x4xf32>
    %51 = tpu.reciprocal %45 {approx = true} : vector<16x8x1xf32> -> vector<16x8x1xf32>
    %52 = vector.broadcast %51 : vector<16x8x1xf32> to vector<16x8x4xf32>
    %53 = arith.mulf %50, %52 : vector<16x8x4xf32>
    %54 = vector.shape_cast %53 : vector<16x8x4xf32> to vector<2x8x8x4xf32>
    %55 = tpu.transpose %54, [0, 2, 1, 3] : vector<2x8x8x4xf32> -> vector<2x8x8x4xf32>
    %56 = vector.shape_cast %55 : vector<2x8x8x4xf32> to vector<16x32xf32>
    %57 = arith.truncf %56 : vector<16x32xf32> to vector<16x32xbf16>
    %c0_17 = arith.constant 0 : index
    %c0_18 = arith.constant 0 : index
    %c0_19 = arith.constant 0 : index
    %58 = vector.load %arg5[%c0_17, %c0_18, %c0_19] : memref<1x32x32xbf16, #tpu.memory_space<vmem>>, vector<1x32x32xbf16>
    %59 = vector.shape_cast %58 : vector<1x32x32xbf16> to vector<32x32xbf16>
    %cst_20 = arith.constant dense<0.000000e+00> : vector<16x32xf32>
    %60 = tpu.matmul %57, %59, %cst_20 {dimension_numbers = #tpu.dot_dimension_numbers<[1], [0], [0], [1], [0, 0, 1, 1], [], []>} : vector<16x32xbf16>, vector<32x32xbf16>, vector<16x32xf32> -> vector<16x32xf32>
    %c0_21 = arith.constant 0 : index
    %c0_22 = arith.constant 0 : index
    %c0_23 = arith.constant 0 : index
    %61 = vector.load %arg6[%c0_21, %c0_22, %c0_23] : memref<1x1x32xf32, #tpu.memory_space<vmem>>, vector<1x1x32xf32>
    %62 = vector.shape_cast %61 : vector<1x1x32xf32> to vector<1x32xf32>
    %63 = vector.broadcast %62 : vector<1x32xf32> to vector<16x32xf32>
    %64 = arith.addf %60, %63 : vector<16x32xf32>
    %65 = arith.addf %4, %64 : vector<16x32xf32>
    %cst_24 = arith.constant dense<0.000000e+00> : vector<16xf32>
    %66 = vector.multi_reduction <add>, %65, %cst_24 [1] : vector<16x32xf32> to vector<16xf32>
    %67 = vector.shape_cast %66 : vector<16xf32> to vector<16x1xf32>
    %cst_25 = arith.constant 3.200000e+01 : f32
    %68 = vector.broadcast %cst_25 : f32 to vector<16x1xf32>
    %69 = arith.divf %67, %68 : vector<16x1xf32>
    %70 = vector.broadcast %69 : vector<16x1xf32> to vector<16x32xf32>
    %71 = arith.subf %65, %70 : vector<16x32xf32>
    %72 = arith.mulf %71, %71 : vector<16x32xf32>
    %cst_26 = arith.constant dense<0.000000e+00> : vector<16xf32>
    %73 = vector.multi_reduction <add>, %72, %cst_26 [1] : vector<16x32xf32> to vector<16xf32>
    %74 = vector.shape_cast %73 : vector<16xf32> to vector<16x1xf32>
    %cst_27 = arith.constant 3.200000e+01 : f32
    %75 = vector.broadcast %cst_27 : f32 to vector<16x1xf32>
    %76 = arith.divf %74, %75 : vector<16x1xf32>
    %77 = vector.broadcast %69 : vector<16x1xf32> to vector<16x32xf32>
    %78 = arith.subf %65, %77 : vector<16x32xf32>
    %cst_28 = arith.constant 9.99999974E-6 : f32
    %79 = vector.broadcast %cst_28 : f32 to vector<16x1xf32>
    %80 = arith.addf %76, %79 : vector<16x1xf32>
    %81 = math.rsqrt %80 : vector<16x1xf32>
    %82 = vector.broadcast %81 : vector<16x1xf32> to vector<16x32xf32>
    %83 = arith.mulf %78, %82 : vector<16x32xf32>
    %c0_29 = arith.constant 0 : index
    %c0_30 = arith.constant 0 : index
    %c0_31 = arith.constant 0 : index
    %84 = vector.load %arg11[%c0_29, %c0_30, %c0_31] : memref<1x1x32xf32, #tpu.memory_space<vmem>>, vector<1x1x32xf32>
    %85 = vector.shape_cast %84 : vector<1x1x32xf32> to vector<1x32xf32>
    %86 = vector.broadcast %85 : vector<1x32xf32> to vector<16x32xf32>
    %87 = arith.mulf %83, %86 : vector<16x32xf32>
    %c0_32 = arith.constant 0 : index
    %c0_33 = arith.constant 0 : index
    %c0_34 = arith.constant 0 : index
    %88 = vector.load %arg12[%c0_32, %c0_33, %c0_34] : memref<1x1x32xf32, #tpu.memory_space<vmem>>, vector<1x1x32xf32>
    %89 = vector.shape_cast %88 : vector<1x1x32xf32> to vector<1x32xf32>
    %90 = vector.broadcast %89 : vector<1x32xf32> to vector<16x32xf32>
    %91 = arith.addf %87, %90 : vector<16x32xf32>
    %92 = arith.truncf %91 : vector<16x32xf32> to vector<16x32xbf16>
    %c0_35 = arith.constant 0 : index
    %c0_36 = arith.constant 0 : index
    %c0_37 = arith.constant 0 : index
    %93 = vector.load %arg7[%c0_35, %c0_36, %c0_37] : memref<1x32x128xbf16, #tpu.memory_space<vmem>>, vector<1x32x128xbf16>
    %94 = vector.shape_cast %93 : vector<1x32x128xbf16> to vector<32x128xbf16>
    %cst_38 = arith.constant dense<0.000000e+00> : vector<16x128xf32>
    %95 = tpu.matmul %92, %94, %cst_38 {dimension_numbers = #tpu.dot_dimension_numbers<[1], [0], [0], [1], [0, 0, 1, 1], [], []>} : vector<16x32xbf16>, vector<32x128xbf16>, vector<16x128xf32> -> vector<16x128xf32>
    %c0_39 = arith.constant 0 : index
    %c0_40 = arith.constant 0 : index
    %c0_41 = arith.constant 0 : index
    %96 = vector.load %arg8[%c0_39, %c0_40, %c0_41] : memref<1x1x128xf32, #tpu.memory_space<vmem>>, vector<1x1x128xf32>
    %97 = vector.shape_cast %96 : vector<1x1x128xf32> to vector<1x128xf32>
    %98 = vector.broadcast %97 : vector<1x128xf32> to vector<16x128xf32>
    %99 = arith.addf %95, %98 : vector<16x128xf32>
    %cst_42 = arith.constant 0.000000e+00 : f32
    %100 = vector.broadcast %cst_42 : f32 to vector<16x128xf32>
    %101 = arith.maximumf %99, %100 : vector<16x128xf32>
    %102 = arith.truncf %101 : vector<16x128xf32> to vector<16x128xbf16>
    %c0_43 = arith.constant 0 : index
    %c0_44 = arith.constant 0 : index
    %c0_45 = arith.constant 0 : index
    %103 = vector.load %arg9[%c0_43, %c0_44, %c0_45] : memref<1x128x32xbf16, #tpu.memory_space<vmem>>, vector<1x128x32xbf16>
    %104 = vector.shape_cast %103 : vector<1x128x32xbf16> to vector<128x32xbf16>
    %cst_46 = arith.constant dense<0.000000e+00> : vector<16x32xf32>
    %105 = tpu.matmul %102, %104, %cst_46 {dimension_numbers = #tpu.dot_dimension_numbers<[1], [0], [0], [1], [0, 0, 1, 1], [], []>} : vector<16x128xbf16>, vector<128x32xbf16>, vector<16x32xf32> -> vector<16x32xf32>
    %106 = arith.addf %91, %105 : vector<16x32xf32>
    %c0_47 = arith.constant 0 : index
    %c0_48 = arith.constant 0 : index
    %c0_49 = arith.constant 0 : index
    %107 = vector.load %arg10[%c0_47, %c0_48, %c0_49] : memref<1x1x32xf32, #tpu.memory_space<vmem>>, vector<1x1x32xf32>
    %108 = vector.shape_cast %107 : vector<1x1x32xf32> to vector<1x32xf32>
    %109 = vector.broadcast %108 : vector<1x32xf32> to vector<16x32xf32>
    %110 = arith.addf %106, %109 : vector<16x32xf32>
    %cst_50 = arith.constant dense<0.000000e+00> : vector<16xf32>
    %111 = vector.multi_reduction <add>, %110, %cst_50 [1] : vector<16x32xf32> to vector<16xf32>
    %112 = vector.shape_cast %111 : vector<16xf32> to vector<16x1xf32>
    %cst_51 = arith.constant 3.200000e+01 : f32
    %113 = vector.broadcast %cst_51 : f32 to vector<16x1xf32>
    %114 = arith.divf %112, %113 : vector<16x1xf32>
    %115 = vector.broadcast %114 : vector<16x1xf32> to vector<16x32xf32>
    %116 = arith.subf %110, %115 : vector<16x32xf32>
    %117 = arith.mulf %116, %116 : vector<16x32xf32>
    %cst_52 = arith.constant dense<0.000000e+00> : vector<16xf32>
    %118 = vector.multi_reduction <add>, %117, %cst_52 [1] : vector<16x32xf32> to vector<16xf32>
    %119 = vector.shape_cast %118 : vector<16xf32> to vector<16x1xf32>
    %cst_53 = arith.constant 3.200000e+01 : f32
    %120 = vector.broadcast %cst_53 : f32 to vector<16x1xf32>
    %121 = arith.divf %119, %120 : vector<16x1xf32>
    %122 = vector.broadcast %114 : vector<16x1xf32> to vector<16x32xf32>
    %123 = arith.subf %110, %122 : vector<16x32xf32>
    %cst_54 = arith.constant 9.99999974E-6 : f32
    %124 = vector.broadcast %cst_54 : f32 to vector<16x1xf32>
    %125 = arith.addf %121, %124 : vector<16x1xf32>
    %126 = math.rsqrt %125 : vector<16x1xf32>
    %127 = vector.broadcast %126 : vector<16x1xf32> to vector<16x32xf32>
    %128 = arith.mulf %123, %127 : vector<16x32xf32>
    %c0_55 = arith.constant 0 : index
    %c0_56 = arith.constant 0 : index
    %c0_57 = arith.constant 0 : index
    %129 = vector.load %arg13[%c0_55, %c0_56, %c0_57] : memref<1x1x32xf32, #tpu.memory_space<vmem>>, vector<1x1x32xf32>
    %130 = vector.shape_cast %129 : vector<1x1x32xf32> to vector<1x32xf32>
    %131 = vector.broadcast %130 : vector<1x32xf32> to vector<16x32xf32>
    %132 = arith.mulf %128, %131 : vector<16x32xf32>
    %c0_58 = arith.constant 0 : index
    %c0_59 = arith.constant 0 : index
    %c0_60 = arith.constant 0 : index
    %133 = vector.load %arg14[%c0_58, %c0_59, %c0_60] : memref<1x1x32xf32, #tpu.memory_space<vmem>>, vector<1x1x32xf32>
    %134 = vector.shape_cast %133 : vector<1x1x32xf32> to vector<1x32xf32>
    %135 = vector.broadcast %134 : vector<1x32xf32> to vector<16x32xf32>
    %136 = arith.addf %132, %135 : vector<16x32xf32>
    %137 = vector.shape_cast %136 : vector<16x32xf32> to vector<2x8x32xf32>
    %c1_i32 = arith.constant 1 : i32
    %138 = arith.cmpi slt, %arg1, %c1_i32 : i32
    %139 = arith.extui %138 : i1 to i32
    %c0_i32_61 = arith.constant 0 : i32
    %140 = arith.cmpi ne, %139, %c0_i32_61 : i32
    scf.if %140 {
      %c0_64 = arith.constant 0 : index
      %c0_65 = arith.constant 0 : index
      %c0_66 = arith.constant 0 : index
      %144 = vector.load %arg16[%c0_64, %c0_65, %c0_66] : memref<2x8x32xf32, #tpu.memory_space<vmem>>, vector<2x8x32xf32>
      tpu.vector_store %arg16[%c0_64, %c0_65, %c0_66], %137 {strides = array<i32>} : memref<2x8x32xf32, #tpu.memory_space<vmem>>, vector<2x8x32xf32>,
    } else {
    }
    %c1_i32_62 = arith.constant 1 : i32
    %141 = arith.cmpi eq, %arg1, %c1_i32_62 : i32
    %142 = arith.extui %141 : i1 to i32
    %c0_i32_63 = arith.constant 0 : i32
    %143 = arith.cmpi ne, %142, %c0_i32_63 : i32
    scf.if %143 {
      %144 = arith.truncf %137 : vector<2x8x32xf32> to vector<2x8x32xbf16>
      %c0_64 = arith.constant 0 : index
      %c0_65 = arith.constant 0 : index
      %c0_66 = arith.constant 0 : index
      %145 = vector.load %arg15[%c0_64, %c0_65, %c0_66] : memref<2x8x32xbf16, #tpu.memory_space<vmem>>, vector<2x8x32xbf16>
      tpu.vector_store %arg15[%c0_64, %c0_65, %c0_66], %144 {strides = array<i32>} : memref<2x8x32xbf16, #tpu.memory_space<vmem>>, vector<2x8x32xbf16>,
    } else {
    }
    return
  }
  func.func @transform_0(%arg0: i32, %arg1: i32) -> (i32, i32, i32) {
    %c0_i32 = arith.constant 0 : i32
    %c0_i32_0 = arith.constant 0 : i32
    %c0_i32_1 = arith.constant 0 : i32
    return %arg0, %c0_i32, %c0_i32_0 : i32, i32, i32
  }
  func.func @transform_1(%arg0: i32, %arg1: i32) -> (i32, i32, i32) {
    %c0_i32 = arith.constant 0 : i32
    %c0_i32_0 = arith.constant 0 : i32
    %c0_i32_1 = arith.constant 0 : i32
    return %arg1, %c0_i32, %c0_i32_0 : i32, i32, i32
  }
  func.func @transform_2(%arg0: i32, %arg1: i32) -> (i32, i32, i32) {
    %c0_i32 = arith.constant 0 : i32
    %c0_i32_0 = arith.constant 0 : i32
    %c0_i32_1 = arith.constant 0 : i32
    return %arg1, %c0_i32, %c0_i32_0 : i32, i32, i32
  }
  func.func @transform_3(%arg0: i32, %arg1: i32) -> (i32, i32, i32) {
    %c0_i32 = arith.constant 0 : i32
    %c0_i32_0 = arith.constant 0 : i32
    %c0_i32_1 = arith.constant 0 : i32
    return %arg1, %c0_i32, %c0_i32_0 : i32, i32, i32
  }
  func.func @transform_4(%arg0: i32, %arg1: i32) -> (i32, i32, i32) {
    %c0_i32 = arith.constant 0 : i32
    %c0_i32_0 = arith.constant 0 : i32
    %c0_i32_1 = arith.constant 0 : i32
    return %arg1, %c0_i32, %c0_i32_0 : i32, i32, i32
  }
  func.func @transform_5(%arg0: i32, %arg1: i32) -> (i32, i32, i32) {
    %c0_i32 = arith.constant 0 : i32
    %c0_i32_0 = arith.constant 0 : i32
    %c0_i32_1 = arith.constant 0 : i32
    return %arg1, %c0_i32, %c0_i32_0 : i32, i32, i32
  }
  func.func @transform_6(%arg0: i32, %arg1: i32) -> (i32, i32, i32) {
    %c0_i32 = arith.constant 0 : i32
    %c0_i32_0 = arith.constant 0 : i32
    %c0_i32_1 = arith.constant 0 : i32
    return %arg1, %c0_i32, %c0_i32_0 : i32, i32, i32
  }
  func.func @transform_7(%arg0: i32, %arg1: i32) -> (i32, i32, i32) {
    %c0_i32 = arith.constant 0 : i32
    %c0_i32_0 = arith.constant 0 : i32
    %c0_i32_1 = arith.constant 0 : i32
    return %arg1, %c0_i32, %c0_i32_0 : i32, i32, i32
  }
  func.func @transform_8(%arg0: i32, %arg1: i32) -> (i32, i32, i32) {
    %c0_i32 = arith.constant 0 : i32
    %c0_i32_0 = arith.constant 0 : i32
    %c0_i32_1 = arith.constant 0 : i32
    return %arg1, %c0_i32, %c0_i32_0 : i32, i32, i32
  }
  func.func @transform_9(%arg0: i32, %arg1: i32) -> (i32, i32, i32) {
    %c0_i32 = arith.constant 0 : i32
    %c0_i32_0 = arith.constant 0 : i32
    %c0_i32_1 = arith.constant 0 : i32
    return %arg1, %c0_i32, %c0_i32_0 : i32, i32, i32
  }
  func.func @transform_10(%arg0: i32, %arg1: i32) -> (i32, i32, i32) {
    %c0_i32 = arith.constant 0 : i32
    %c0_i32_0 = arith.constant 0 : i32
    %c0_i32_1 = arith.constant 0 : i32
    return %arg1, %c0_i32, %c0_i32_0 : i32, i32, i32
  }
  func.func @transform_11(%arg0: i32, %arg1: i32) -> (i32, i32, i32) {
    %c0_i32 = arith.constant 0 : i32
    %c0_i32_0 = arith.constant 0 : i32
    %c0_i32_1 = arith.constant 0 : i32
    return %arg1, %c0_i32, %c0_i32_0 : i32, i32, i32
  }
  func.func @transform_12(%arg0: i32, %arg1: i32) -> (i32, i32, i32) {
    %c0_i32 = arith.constant 0 : i32
    %c0_i32_0 = arith.constant 0 : i32
    %c0_i32_1 = arith.constant 0 : i32
    return %arg1, %c0_i32, %c0_i32_0 : i32, i32, i32
  }
  func.func @transform_13(%arg0: i32, %arg1: i32) -> (i32, i32, i32) {
    %c0_i32 = arith.constant 0 : i32
    %c0_i32_0 = arith.constant 0 : i32
    %c0_i32_1 = arith.constant 0 : i32
    return %arg0, %c0_i32, %c0_i32_0 : i32, i32, i32
  }
}

</mosaic_0001>

<llo_original>
// kernel: tpu_custom_call.1
$region0: #{tpu_custom_call.1}
  #allocation0 [shape = 'u32[]', space=smem, size = 0x4, offset = 0x4, fixed_abs, tag = 'smem constant byte address 0x4 - core index']
  #allocation1 [shape = 'u32[144,128]{1,0:T(1,128)}', space=vmem, size = 0x12000, scoped, tag = 'internal scratch']
  #allocation2 [shape = 'f32[2,8,32]{2,1,0:T(8,128)}', space=vmem, size = 0x2000, scoped, tag = 'scratch operand']
  %s0 = inlined_call_operand.vmem [shape: bf16[2,8,32], index: 0, kind: input, shape index: {}]
  %s1 = inlined_call_operand.vmem [shape: bf16[2,32,96], index: 1, kind: input, shape index: {}]
  %s2 = inlined_call_operand.vmem [shape: f32[2,1,96], index: 2, kind: input, shape index: {}]
  %s3 = inlined_call_operand.vmem [shape: bf16[2,32,32], index: 3, kind: input, shape index: {}]
  %s4 = inlined_call_operand.vmem [shape: f32[2,1,32], index: 4, kind: input, shape index: {}]
  %s5 = inlined_call_operand.vmem [shape: bf16[2,32,128], index: 5, kind: input, shape index: {}]
  %s6 = inlined_call_operand.vmem [shape: f32[2,1,128], index: 6, kind: input, shape index: {}]
  %s7 = inlined_call_operand.vmem [shape: bf16[2,128,32], index: 7, kind: input, shape index: {}]
  %s8 = inlined_call_operand.vmem [shape: f32[2,1,32], index: 8, kind: input, shape index: {}]
  %s9 = inlined_call_operand.vmem [shape: f32[2,1,32], index: 9, kind: input, shape index: {}]
  %s10 = inlined_call_operand.vmem [shape: f32[2,1,32], index: 10, kind: input, shape index: {}]
  %s11 = inlined_call_operand.vmem [shape: f32[2,1,32], index: 11, kind: input, shape index: {}]
  %s12 = inlined_call_operand.vmem [shape: f32[2,1,32], index: 12, kind: input, shape index: {}]
  %s13 = inlined_call_operand.hbm [shape: bf16[2,8,32], index: 13, kind: output, shape index: {}]
  %s14 = sld [smem:[#allocation0]]
  $region97: #{tpu_custom_call.1} parent=0
    _
  %s16 = ssub.s32 1, %s14
  %s17 = scalar_select 0, %s16, %s14
  $region1: #{tpu_custom_call.1} parent=0
    #allocation3 [shape = 'u8[4096]{0}', space=vmem, size = 0x1000, scoped, tag = 'output window, operand 0, single buffered']
    #allocation4 [shape = 's32[2]{0}', space=sflag, size = 0x8, scoped, tag = 'scoped memory for tpu_custom_call.1']
    %18 = vsyncpa [#allocation4], 0
    loop: start=0, step=1, limit=4
    $region2: #{tpu_custom_call.1} parent=1 // loop_pre_header
      _
    $region3: #{tpu_custom_call.1} parent=1 // loop_header
      %s20 = sphi 0, %s24
      %p21 = scmp.ge.s32.totalorder %s20, 4
      %s27 = sphi 0, %s39
      %s28 = sphi 0, %s35
      %s29 = sphi 0, %s27
      %s30 = sphi 0, %s28
      %s31 = sphi 0, %s29
      %s32 = sphi 0, %s30
      %s42 = sphi 0, %s44
      %s45 = sphi 0, %s42
      %s46 = sphi 0, %s45
      %s62 = sphi 0, %s46
      %s68 = sphi 0, %s70
      %s71 = sphi 0, %s68
      %s72 = sphi 0, %s71
      %s88 = sphi 0, %s72
      %s94 = sphi 0, %s96
      %s97 = sphi 0, %s94
      %s98 = sphi 0, %s97
      %s114 = sphi 0, %s98
      %s120 = sphi 0, %s122
      %s123 = sphi 0, %s120
      %s124 = sphi 0, %s123
      %s140 = sphi 0, %s124
      %s146 = sphi 0, %s148
      %s149 = sphi 0, %s146
      %s150 = sphi 0, %s149
      %s166 = sphi 0, %s150
      %s172 = sphi 0, %s174
      %s175 = sphi 0, %s172
      %s176 = sphi 0, %s175
      %s192 = sphi 0, %s176
      %s198 = sphi 0, %s200
      %s201 = sphi 0, %s198
      %s202 = sphi 0, %s201
      %s218 = sphi 0, %s202
      %s224 = sphi 0, %s226
      %s227 = sphi 0, %s224
      %s228 = sphi 0, %s227
      %s244 = sphi 0, %s228
      %s250 = sphi 0, %s252
      %s253 = sphi 0, %s250
      %s254 = sphi 0, %s253
      %s270 = sphi 0, %s254
      %s276 = sphi 0, %s278
      %s279 = sphi 0, %s276
      %s280 = sphi 0, %s279
      %s296 = sphi 0, %s280
      %s302 = sphi 0, %s304
      %s305 = sphi 0, %s302
      %s306 = sphi 0, %s305
      %s322 = sphi 0, %s306
      %s328 = sphi 0, %s330
      %s331 = sphi 0, %s328
      %s332 = sphi 0, %s331
      %s348 = sphi 0, %s332
      %s354 = sphi 0, %s356
      %s357 = sphi 0, %s354
      %s358 = sphi 0, %s357
      %s374 = sphi 0, %s358
      %s380 = sphi 0, %s382
      %s383 = sphi 0, %s380
      %s384 = sphi 0, %s383
      %s400 = sphi 0, %s384
    $region4: #{tpu_custom_call.1} parent=1 // loop_header_branch
      %23 = sbr.rel (%p21) target = $region8
    $region5: #{tpu_custom_call.1} parent=1 // loop_body
      %s25 = ssub.s32 %s20, 1
      %s26 = ssub.s32 %s20, 2
      %s33 = sadd.s32 1, %s28
      %p34 = scmp.ge.s32.totalorder %s33, 2
      %s35 = scalar_select %p34, 0, %s33
      %s36 = sadd.s32 1, %s27
      %s37 = scalar_select %p34, %s36, %s27
      %p38 = scmp.ge.s32.totalorder %s37, 1
      %s39 = scalar_select %p38, 0, %s37
      %s40 = ssub.s32 %s27, %s39
      %p41 = scmp.eq.s32.totalorder %s40, 0
      %s43 = sadd.s32 %s42, 1
      %s44 = scalar_select %p41, %s42, %s43
      %p47 = pneg %p41
      %p48 = scmp.eq.s32.totalorder %s20, 1
      %p49 = por %p47, %p48
      %p50 = scmp.ne.s32.totalorder %s42, %s45
      %p51 = scmp.eq.s32.totalorder %s20, 0
      %p52 = por %p50, %p51
      %p53 = scmp.ne.s32.totalorder %s42, %s45
      %p54 = scmp.eq.s32.totalorder %s25, 1
      %p55 = por %p53, %p54
      %p56 = scmp.ne.s32.totalorder %s45, %s46
      %p57 = scmp.eq.s32.totalorder %s25, 0
      %p58 = por %p56, %p57
      %p59 = scmp.ne.s32.totalorder %s45, %s46
      %p60 = scmp.eq.s32.totalorder %s26, 1
      %p61 = por %p59, %p60
      %p63 = scmp.ne.s32.totalorder %s46, %s62
      %p64 = scmp.eq.s32.totalorder %s26, 0
      %p65 = por %p63, %p64
      %s66 = ssub.s32 %s28, %s35
      %p67 = scmp.eq.s32.totalorder %s66, 0
      %s69 = sadd.s32 %s68, 1
      %s70 = scalar_select %p67, %s68, %s69
      %p73 = pneg %p67
      %p74 = scmp.eq.s32.totalorder %s20, 1
      %p75 = por %p73, %p74
      %p76 = scmp.ne.s32.totalorder %s68, %s71
      %p77 = scmp.eq.s32.totalorder %s20, 0
      %p78 = por %p76, %p77
      %p79 = scmp.ne.s32.totalorder %s68, %s71
      %p80 = scmp.eq.s32.totalorder %s25, 1
      %p81 = por %p79, %p80
      %p82 = scmp.ne.s32.totalorder %s71, %s72
      %p83 = scmp.eq.s32.totalorder %s25, 0
      %p84 = por %p82, %p83
      %p85 = scmp.ne.s32.totalorder %s71, %s72
      %p86 = scmp.eq.s32.totalorder %s26, 1
      %p87 = por %p85, %p86
      %p89 = scmp.ne.s32.totalorder %s72, %s88
      %p90 = scmp.eq.s32.totalorder %s26, 0
      %p91 = por %p89, %p90
      %s92 = ssub.s32 %s28, %s35
      %p93 = scmp.eq.s32.totalorder %s92, 0
      %s95 = sadd.s32 %s94, 1
      %s96 = scalar_select %p93, %s94, %s95
      %p99 = pneg %p93
      %p100 = scmp.eq.s32.totalorder %s20, 1
      %p101 = por %p99, %p100
      %p102 = scmp.ne.s32.totalorder %s94, %s97
      %p103 = scmp.eq.s32.totalorder %s20, 0
      %p104 = por %p102, %p103
      %p105 = scmp.ne.s32.totalorder %s94, %s97
      %p106 = scmp.eq.s32.totalorder %s25, 1
      %p107 = por %p105, %p106
      %p108 = scmp.ne.s32.totalorder %s97, %s98
      %p109 = scmp.eq.s32.totalorder %s25, 0
      %p110 = por %p108, %p109
      %p111 = scmp.ne.s32.totalorder %s97, %s98
      %p112 = scmp.eq.s32.totalorder %s26, 1
      %p113 = por %p111, %p112
      %p115 = scmp.ne.s32.totalorder %s98, %s114
      %p116 = scmp.eq.s32.totalorder %s26, 0
      %p117 = por %p115, %p116
      %s118 = ssub.s32 %s28, %s35
      %p119 = scmp.eq.s32.totalorder %s118, 0
      %s121 = sadd.s32 %s120, 1
      %s122 = scalar_select %p119, %s120, %s121
      %p125 = pneg %p119
      %p126 = scmp.eq.s32.totalorder %s20, 1
      %p127 = por %p125, %p126
      %p128 = scmp.ne.s32.totalorder %s120, %s123
      %p129 = scmp.eq.s32.totalorder %s20, 0
      %p130 = por %p128, %p129
      %p131 = scmp.ne.s32.totalorder %s120, %s123
      %p132 = scmp.eq.s32.totalorder %s25, 1
      %p133 = por %p131, %p132
      %p134 = scmp.ne.s32.totalorder %s123, %s124
      %p135 = scmp.eq.s32.totalorder %s25, 0
      %p136 = por %p134, %p135
      %p137 = scmp.ne.s32.totalorder %s123, %s124
      %p138 = scmp.eq.s32.totalorder %s26, 1
      %p139 = por %p137, %p138
      %p141 = scmp.ne.s32.totalorder %s124, %s140
      %p142 = scmp.eq.s32.totalorder %s26, 0
      %p143 = por %p141, %p142
      %s144 = ssub.s32 %s28, %s35
      %p145 = scmp.eq.s32.totalorder %s144, 0
      %s147 = sadd.s32 %s146, 1
      %s148 = scalar_select %p145, %s146, %s147
      %p151 = pneg %p145
      %p152 = scmp.eq.s32.totalorder %s20, 1
      %p153 = por %p151, %p152
      %p154 = scmp.ne.s32.totalorder %s146, %s149
      %p155 = scmp.eq.s32.totalorder %s20, 0
      %p156 = por %p154, %p155
      %p157 = scmp.ne.s32.totalorder %s146, %s149
      %p158 = scmp.eq.s32.totalorder %s25, 1
      %p159 = por %p157, %p158
      %p160 = scmp.ne.s32.totalorder %s149, %s150
      %p161 = scmp.eq.s32.totalorder %s25, 0
      %p162 = por %p160, %p161
      %p163 = scmp.ne.s32.totalorder %s149, %s150
      %p164 = scmp.eq.s32.totalorder %s26, 1
      %p165 = por %p163, %p164
      %p167 = scmp.ne.s32.totalorder %s150, %s166
      %p168 = scmp.eq.s32.totalorder %s26, 0
      %p169 = por %p167, %p168
      %s170 = ssub.s32 %s28, %s35
      %p171 = scmp.eq.s32.totalorder %s170, 0
      %s173 = sadd.s32 %s172, 1
      %s174 = scalar_select %p171, %s172, %s173
      %p177 = pneg %p171
      %p178 = scmp.eq.s32.totalorder %s20, 1
      %p179 = por %p177, %p178
      %p180 = scmp.ne.s32.totalorder %s172, %s175
      %p181 = scmp.eq.s32.totalorder %s20, 0
      %p182 = por %p180, %p181
      %p183 = scmp.ne.s32.totalorder %s172, %s175
      %p184 = scmp.eq.s32.totalorder %s25, 1
      %p185 = por %p183, %p184
      %p186 = scmp.ne.s32.totalorder %s175, %s176
      %p187 = scmp.eq.s32.totalorder %s25, 0
      %p188 = por %p186, %p187
      %p189 = scmp.ne.s32.totalorder %s175, %s176
      %p190 = scmp.eq.s32.totalorder %s26, 1
      %p191 = por %p189, %p190
      %p193 = scmp.ne.s32.totalorder %s176, %s192
      %p194 = scmp.eq.s32.totalorder %s26, 0
      %p195 = por %p193, %p194
      %s196 = ssub.s32 %s28, %s35
      %p197 = scmp.eq.s32.totalorder %s196, 0
      %s199 = sadd.s32 %s198, 1
      %s200 = scalar_select %p197, %s198, %s199
      %p203 = pneg %p197
      %p204 = scmp.eq.s32.totalorder %s20, 1
      %p205 = por %p203, %p204
      %p206 = scmp.ne.s32.totalorder %s198, %s201
      %p207 = scmp.eq.s32.totalorder %s20, 0
      %p208 = por %p206, %p207
      %p209 = scmp.ne.s32.totalorder %s198, %s201
      %p210 = scmp.eq.s32.totalorder %s25, 1
      %p211 = por %p209, %p210
      %p212 = scmp.ne.s32.totalorder %s201, %s202
      %p213 = scmp.eq.s32.totalorder %s25, 0
      %p214 = por %p212, %p213
      %p215 = scmp.ne.s32.totalorder %s201, %s202
      %p216 = scmp.eq.s32.totalorder %s26, 1
      %p217 = por %p215, %p216
      %p219 = scmp.ne.s32.totalorder %s202, %s218
      %p220 = scmp.eq.s32.totalorder %s26, 0
      %p221 = por %p219, %p220
      %s222 = ssub.s32 %s28, %s35
      %p223 = scmp.eq.s32.totalorder %s222, 0
      %s225 = sadd.s32 %s224, 1
      %s226 = scalar_select %p223, %s224, %s225
      %p229 = pneg %p223
      %p230 = scmp.eq.s32.totalorder %s20, 1
      %p231 = por %p229, %p230
      %p232 = scmp.ne.s32.totalorder %s224, %s227
      %p233 = scmp.eq.s32.totalorder %s20, 0
      %p234 = por %p232, %p233
      %p235 = scmp.ne.s32.totalorder %s224, %s227
      %p236 = scmp.eq.s32.totalorder %s25, 1
      %p237 = por %p235, %p236
      %p238 = scmp.ne.s32.totalorder %s227, %s228
      %p239 = scmp.eq.s32.totalorder %s25, 0
      %p240 = por %p238, %p239
      %p241 = scmp.ne.s32.totalorder %s227, %s228
      %p242 = scmp.eq.s32.totalorder %s26, 1
      %p243 = por %p241, %p242
      %p245 = scmp.ne.s32.totalorder %s228, %s244
      %p246 = scmp.eq.s32.totalorder %s26, 0
      %p247 = por %p245, %p246
      %s248 = ssub.s32 %s28, %s35
      %p249 = scmp.eq.s32.totalorder %s248, 0
      %s251 = sadd.s32 %s250, 1
      %s252 = scalar_select %p249, %s250, %s251
      %p255 = pneg %p249
      %p256 = scmp.eq.s32.totalorder %s20, 1
      %p257 = por %p255, %p256
      %p258 = scmp.ne.s32.totalorder %s250, %s253
      %p259 = scmp.eq.s32.totalorder %s20, 0
      %p260 = por %p258, %p259
      %p261 = scmp.ne.s32.totalorder %s250, %s253
      %p262 = scmp.eq.s32.totalorder %s25, 1
      %p263 = por %p261, %p262
      %p264 = scmp.ne.s32.totalorder %s253, %s254
      %p265 = scmp.eq.s32.totalorder %s25, 0
      %p266 = por %p264, %p265
      %p267 = scmp.ne.s32.totalorder %s253, %s254
      %p268 = scmp.eq.s32.totalorder %s26, 1
      %p269 = por %p267, %p268
      %p271 = scmp.ne.s32.totalorder %s254, %s270
      %p272 = scmp.eq.s32.totalorder %s26, 0
      %p273 = por %p271, %p272
      %s274 = ssub.s32 %s28, %s35
      %p275 = scmp.eq.s32.totalorder %s274, 0
      %s277 = sadd.s32 %s276, 1
      %s278 = scalar_select %p275, %s276, %s277
      %p281 = pneg %p275
      %p282 = scmp.eq.s32.totalorder %s20, 1
      %p283 = por %p281, %p282
      %p284 = scmp.ne.s32.totalorder %s276, %s279
      %p285 = scmp.eq.s32.totalorder %s20, 0
      %p286 = por %p284, %p285
      %p287 = scmp.ne.s32.totalorder %s276, %s279
      %p288 = scmp.eq.s32.totalorder %s25, 1
      %p289 = por %p287, %p288
      %p290 = scmp.ne.s32.totalorder %s279, %s280
      %p291 = scmp.eq.s32.totalorder %s25, 0
      %p292 = por %p290, %p291
      %p293 = scmp.ne.s32.totalorder %s279, %s280
      %p294 = scmp.eq.s32.totalorder %s26, 1
      %p295 = por %p293, %p294
      %p297 = scmp.ne.s32.totalorder %s280, %s296
      %p298 = scmp.eq.s32.totalorder %s26, 0
      %p299 = por %p297, %p298
      %s300 = ssub.s32 %s28, %s35
      %p301 = scmp.eq.s32.totalorder %s300, 0
      %s303 = sadd.s32 %s302, 1
      %s304 = scalar_select %p301, %s302, %s303
      %p307 = pneg %p301
      %p308 = scmp.eq.s32.totalorder %s20, 1
      %p309 = por %p307, %p308
      %p310 = scmp.ne.s32.totalorder %s302, %s305
      %p311 = scmp.eq.s32.totalorder %s20, 0
      %p312 = por %p310, %p311
      %p313 = scmp.ne.s32.totalorder %s302, %s305
      %p314 = scmp.eq.s32.totalorder %s25, 1
      %p315 = por %p313, %p314
      %p316 = scmp.ne.s32.totalorder %s305, %s306
      %p317 = scmp.eq.s32.totalorder %s25, 0
      %p318 = por %p316, %p317
      %p319 = scmp.ne.s32.totalorder %s305, %s306
      %p320 = scmp.eq.s32.totalorder %s26, 1
      %p321 = por %p319, %p320
      %p323 = scmp.ne.s32.totalorder %s306, %s322
      %p324 = scmp.eq.s32.totalorder %s26, 0
      %p325 = por %p323, %p324
      %s326 = ssub.s32 %s28, %s35
      %p327 = scmp.eq.s32.totalorder %s326, 0
      %s329 = sadd.s32 %s328, 1
      %s330 = scalar_select %p327, %s328, %s329
      %p333 = pneg %p327
      %p334 = scmp.eq.s32.totalorder %s20, 1
      %p335 = por %p333, %p334
      %p336 = scmp.ne.s32.totalorder %s328, %s331
      %p337 = scmp.eq.s32.totalorder %s20, 0
      %p338 = por %p336, %p337
      %p339 = scmp.ne.s32.totalorder %s328, %s331
      %p340 = scmp.eq.s32.totalorder %s25, 1
      %p341 = por %p339, %p340
      %p342 = scmp.ne.s32.totalorder %s331, %s332
      %p343 = scmp.eq.s32.totalorder %s25, 0
      %p344 = por %p342, %p343
      %p345 = scmp.ne.s32.totalorder %s331, %s332
      %p346 = scmp.eq.s32.totalorder %s26, 1
      %p347 = por %p345, %p346
      %p349 = scmp.ne.s32.totalorder %s332, %s348
      %p350 = scmp.eq.s32.totalorder %s26, 0
      %p351 = por %p349, %p350
      %s352 = ssub.s32 %s28, %s35
      %p353 = scmp.eq.s32.totalorder %s352, 0
      %s355 = sadd.s32 %s354, 1
      %s356 = scalar_select %p353, %s354, %s355
      %p359 = pneg %p353
      %p360 = scmp.eq.s32.totalorder %s20, 1
      %p361 = por %p359, %p360
      %p362 = scmp.ne.s32.totalorder %s354, %s357
      %p363 = scmp.eq.s32.totalorder %s20, 0
      %p364 = por %p362, %p363
      %p365 = scmp.ne.s32.totalorder %s354, %s357
      %p366 = scmp.eq.s32.totalorder %s25, 1
      %p367 = por %p365, %p366
      %p368 = scmp.ne.s32.totalorder %s357, %s358
      %p369 = scmp.eq.s32.totalorder %s25, 0
      %p370 = por %p368, %p369
      %p371 = scmp.ne.s32.totalorder %s357, %s358
      %p372 = scmp.eq.s32.totalorder %s26, 1
      %p373 = por %p371, %p372
      %p375 = scmp.ne.s32.totalorder %s358, %s374
      %p376 = scmp.eq.s32.totalorder %s26, 0
      %p377 = por %p375, %p376
      %s378 = ssub.s32 %s27, %s39
      %p379 = scmp.eq.s32.totalorder %s378, 0
      %s381 = sadd.s32 %s380, 1
      %s382 = scalar_select %p379, %s380, %s381
      %p385 = pneg %p379
      %p386 = scmp.eq.s32.totalorder %s20, 1
      %p387 = por %p385, %p386
      %p388 = scmp.ne.s32.totalorder %s380, %s383
      %p389 = scmp.eq.s32.totalorder %s20, 0
      %p390 = por %p388, %p389
      %p391 = scmp.ne.s32.totalorder %s380, %s383
      %p392 = scmp.eq.s32.totalorder %s25, 1
      %p393 = por %p391, %p392
      %p394 = scmp.ne.s32.totalorder %s383, %s384
      %p395 = scmp.eq.s32.totalorder %s25, 0
      %p396 = por %p394, %p395
      %p397 = scmp.ne.s32.totalorder %s383, %s384
      %p398 = scmp.eq.s32.totalorder %s26, 1
      %p399 = por %p397, %p398
      %p401 = scmp.ne.s32.totalorder %s384, %s400
      %p402 = scmp.eq.s32.totalorder %s26, 0
      %p403 = por %p401, %p402
      %p404 = scmp.le.s32.totalorder 1, %s20
      %p405 = scmp.lt.s32.totalorder %s20, 3
      %p406 = pnand %p404, %p405
      %p407 = pneg %p406
      // Predicated region
      $region9: #{tpu_custom_call.1} parent=5 // pred_check
        _
      $region10: #{tpu_custom_call.1} parent=5 // pred_check_branch
        %409 = sbr.rel (%p406) target = $region12
      $region11: #{tpu_custom_call.1} parent=5 // pred_region
        %s410 = ssub.s32 %s20, 1
        // Predicated region
        $region13: #{tpu_custom_call.1} parent=11 // pred_check
          %p411 = pneg %p58
        $region14: #{tpu_custom_call.1} parent=11 // pred_check_branch
          %413 = sbr.rel (%p411) target = $region16
        $region15: #{tpu_custom_call.1} parent=11 // pred_region
          %s414 = smul.u32 2, %s29
          %p415 = scmp.lt.s32.totalorder %s414, 1
          %s416 = scalar_select %p415, %s414, 1
          %s417 = smul.addr %s416, 4
          %s418 = scalar_lea.vmem %s0, %s417
          %s419 = smul.u32 2, %s29
        $region16: #{tpu_custom_call.1} parent=11 // pred_fallthru
          _
      $region12: #{tpu_custom_call.1} parent=5 // pred_fallthru
        _
      %p420 = scmp.lt.s32.totalorder %s20, 2
      // Predicated region
      $region17: #{tpu_custom_call.1} parent=5 // pred_check
        %p421 = pneg %p420
      $region18: #{tpu_custom_call.1} parent=5 // pred_check_branch
        %423 = sbr.rel (%p421) target = $region20
      $region19: #{tpu_custom_call.1} parent=5 // pred_region
        // Predicated region
        $region21: #{tpu_custom_call.1} parent=19 // pred_check
          %p424 = pneg %p78
        $region22: #{tpu_custom_call.1} parent=19 // pred_check_branch
          %426 = sbr.rel (%p424) target = $region24
        $region23: #{tpu_custom_call.1} parent=19 // pred_region
          %p427 = scmp.lt.s32.totalorder %s28, 1
          %s428 = scalar_select %p427, %s28, 1
          %s429 = smul.addr %s428, 4
          %s430 = smul.addr %s429, 4
          %s431 = scalar_lea.vmem %s1, %s430
        $region24: #{tpu_custom_call.1} parent=19 // pred_fallthru
          _
        // Predicated region
        $region25: #{tpu_custom_call.1} parent=19 // pred_check
          %p432 = pneg %p104
        $region26: #{tpu_custom_call.1} parent=19 // pred_check_branch
          %434 = sbr.rel (%p432) target = $region28
        $region27: #{tpu_custom_call.1} parent=19 // pred_region
          %p435 = scmp.lt.s32.totalorder %s28, 1
          %s436 = scalar_select %p435, %s28, 1
          %s437 = scalar_lea.vmem %s2, %s436
        $region28: #{tpu_custom_call.1} parent=19 // pred_fallthru
          _
        // Predicated region
        $region29: #{tpu_custom_call.1} parent=19 // pred_check
          %p438 = pneg %p130
        $region30: #{tpu_custom_call.1} parent=19 // pred_check_branch
          %440 = sbr.rel (%p438) target = $region32
        $region31: #{tpu_custom_call.1} parent=19 // pred_region
          %p441 = scmp.lt.s32.totalorder %s28, 1
          %s442 = scalar_select %p441, %s28, 1
          %s443 = smul.addr %s442, 4
          %s444 = smul.addr %s443, 4
          %s445 = scalar_lea.vmem %s3, %s444
        $region32: #{tpu_custom_call.1} parent=19 // pred_fallthru
          _
        // Predicated region
        $region33: #{tpu_custom_call.1} parent=19 // pred_check
          %p446 = pneg %p156
        $region34: #{tpu_custom_call.1} parent=19 // pred_check_branch
          %448 = sbr.rel (%p446) target = $region36
        $region35: #{tpu_custom_call.1} parent=19 // pred_region
          %p449 = scmp.lt.s32.totalorder %s28, 1
          %s450 = scalar_select %p449, %s28, 1
          %s451 = scalar_lea.vmem %s4, %s450
        $region36: #{tpu_custom_call.1} parent=19 // pred_fallthru
          _
        // Predicated region
        $region37: #{tpu_custom_call.1} parent=19 // pred_check
          %p452 = pneg %p182
        $region38: #{tpu_custom_call.1} parent=19 // pred_check_branch
          %454 = sbr.rel (%p452) target = $region40
        $region39: #{tpu_custom_call.1} parent=19 // pred_region
          %p455 = scmp.lt.s32.totalorder %s28, 1
          %s456 = scalar_select %p455, %s28, 1
          %s457 = smul.addr %s456, 4
          %s458 = smul.addr %s457, 4
          %s459 = scalar_lea.vmem %s5, %s458
        $region40: #{tpu_custom_call.1} parent=19 // pred_fallthru
          _
        // Predicated region
        $region41: #{tpu_custom_call.1} parent=19 // pred_check
          %p460 = pneg %p208
        $region42: #{tpu_custom_call.1} parent=19 // pred_check_branch
          %462 = sbr.rel (%p460) target = $region44
        $region43: #{tpu_custom_call.1} parent=19 // pred_region
          %p463 = scmp.lt.s32.totalorder %s28, 1
          %s464 = scalar_select %p463, %s28, 1
          %s465 = scalar_lea.vmem %s6, %s464
        $region44: #{tpu_custom_call.1} parent=19 // pred_fallthru
          _
        // Predicated region
        $region45: #{tpu_custom_call.1} parent=19 // pred_check
          %p466 = pneg %p234
        $region46: #{tpu_custom_call.1} parent=19 // pred_check_branch
          %468 = sbr.rel (%p466) target = $region48
        $region47: #{tpu_custom_call.1} parent=19 // pred_region
          %p469 = scmp.lt.s32.totalorder %s28, 1
          %s470 = scalar_select %p469, %s28, 1
          %s471 = smul.addr %s470, 16
          %s472 = smul.addr %s471, 4
          %s473 = scalar_lea.vmem %s7, %s472
        $region48: #{tpu_custom_call.1} parent=19 // pred_fallthru
          _
        // Predicated region
        $region49: #{tpu_custom_call.1} parent=19 // pred_check
          %p474 = pneg %p260
        $region50: #{tpu_custom_call.1} parent=19 // pred_check_branch
          %476 = sbr.rel (%p474) target = $region52
        $region51: #{tpu_custom_call.1} parent=19 // pred_region
          %p477 = scmp.lt.s32.totalorder %s28, 1
          %s478 = scalar_select %p477, %s28, 1
          %s479 = scalar_lea.vmem %s8, %s478
        $region52: #{tpu_custom_call.1} parent=19 // pred_fallthru
          _
        // Predicated region
        $region53: #{tpu_custom_call.1} parent=19 // pred_check
          %p480 = pneg %p286
        $region54: #{tpu_custom_call.1} parent=19 // pred_check_branch
          %482 = sbr.rel (%p480) target = $region56
        $region55: #{tpu_custom_call.1} parent=19 // pred_region
          %p483 = scmp.lt.s32.totalorder %s28, 1
          %s484 = scalar_select %p483, %s28, 1
          %s485 = scalar_lea.vmem %s9, %s484
        $region56: #{tpu_custom_call.1} parent=19 // pred_fallthru
          _
        // Predicated region
        $region57: #{tpu_custom_call.1} parent=19 // pred_check
          %p486 = pneg %p312
        $region58: #{tpu_custom_call.1} parent=19 // pred_check_branch
          %488 = sbr.rel (%p486) target = $region60
        $region59: #{tpu_custom_call.1} parent=19 // pred_region
          %p489 = scmp.lt.s32.totalorder %s28, 1
          %s490 = scalar_select %p489, %s28, 1
          %s491 = scalar_lea.vmem %s10, %s490
        $region60: #{tpu_custom_call.1} parent=19 // pred_fallthru
          _
        // Predicated region
        $region61: #{tpu_custom_call.1} parent=19 // pred_check
          %p492 = pneg %p338
        $region62: #{tpu_custom_call.1} parent=19 // pred_check_branch
          %494 = sbr.rel (%p492) target = $region64
        $region63: #{tpu_custom_call.1} parent=19 // pred_region
          %p495 = scmp.lt.s32.totalorder %s28, 1
          %s496 = scalar_select %p495, %s28, 1
          %s497 = scalar_lea.vmem %s11, %s496
        $region64: #{tpu_custom_call.1} parent=19 // pred_fallthru
          _
        // Predicated region
        $region65: #{tpu_custom_call.1} parent=19 // pred_check
          %p498 = pneg %p364
        $region66: #{tpu_custom_call.1} parent=19 // pred_check_branch
          %500 = sbr.rel (%p498) target = $region68
        $region67: #{tpu_custom_call.1} parent=19 // pred_region
          %p501 = scmp.lt.s32.totalorder %s28, 1
          %s502 = scalar_select %p501, %s28, 1
          %s503 = scalar_lea.vmem %s12, %s502
        $region68: #{tpu_custom_call.1} parent=19 // pred_fallthru
          _
      $region20: #{tpu_custom_call.1} parent=5 // pred_fallthru
        _
      %p504 = scmp.le.s32.totalorder 1, %s20
      %p505 = scmp.lt.s32.totalorder %s20, 3
      %p506 = pnand %p504, %p505
      %p507 = pneg %p506
      // Predicated region
      $region69: #{tpu_custom_call.1} parent=5 // pred_check
        _
      $region70: #{tpu_custom_call.1} parent=5 // pred_check_branch
        %509 = sbr.rel (%p506) target = $region72
      $region71: #{tpu_custom_call.1} parent=5 // pred_region
        %s510 = ssub.s32 %s20, 1
        %s511 = smul.u32 2, %s29
        %p512 = scmp.lt.s32.totalorder %s511, 1
        %s513 = scalar_select %p512, %s511, 1
        %s514 = smul.addr %s513, 4
        %s515 = scalar_lea.vmem %s0, %s514
        %p516 = pneg %p58
        %p517 = pneg %p55
        %p518 = scmp.lt.s32.totalorder %s30, 1
        %s519 = scalar_select %p518, %s30, 1
        %s520 = smul.addr %s519, 4
        %s521 = smul.addr %s520, 4
        %s522 = scalar_lea.vmem %s1, %s521
        %p523 = pneg %p84
        %p524 = pneg %p81
        %p525 = scmp.lt.s32.totalorder %s30, 1
        %s526 = scalar_select %p525, %s30, 1
        %s527 = scalar_lea.vmem %s2, %s526
        %p528 = pneg %p110
        %p529 = pneg %p107
        %p530 = scmp.lt.s32.totalorder %s30, 1
        %s531 = scalar_select %p530, %s30, 1
        %s532 = smul.addr %s531, 4
        %s533 = smul.addr %s532, 4
        %s534 = scalar_lea.vmem %s3, %s533
        %p535 = pneg %p136
        %p536 = pneg %p133
        %p537 = scmp.lt.s32.totalorder %s30, 1
        %s538 = scalar_select %p537, %s30, 1
        %s539 = scalar_lea.vmem %s4, %s538
        %p540 = pneg %p162
        %p541 = pneg %p159
        %p542 = scmp.lt.s32.totalorder %s30, 1
        %s543 = scalar_select %p542, %s30, 1
        %s544 = smul.addr %s543, 4
        %s545 = smul.addr %s544, 4
        %s546 = scalar_lea.vmem %s5, %s545
        %p547 = pneg %p188
        %p548 = pneg %p185
        %p549 = scmp.lt.s32.totalorder %s30, 1
        %s550 = scalar_select %p549, %s30, 1
        %s551 = scalar_lea.vmem %s6, %s550
        %p552 = pneg %p214
        %p553 = pneg %p211
        %p554 = scmp.lt.s32.totalorder %s30, 1
        %s555 = scalar_select %p554, %s30, 1
        %s556 = smul.addr %s555, 16
        %s557 = smul.addr %s556, 4
        %s558 = scalar_lea.vmem %s7, %s557
        %p559 = pneg %p240
        %p560 = pneg %p237
        %p561 = scmp.lt.s32.totalorder %s30, 1
        %s562 = scalar_select %p561, %s30, 1
        %s563 = scalar_lea.vmem %s8, %s562
        %p564 = pneg %p266
        %p565 = pneg %p263
        %p566 = scmp.lt.s32.totalorder %s30, 1
        %s567 = scalar_select %p566, %s30, 1
        %s568 = scalar_lea.vmem %s9, %s567
        %p569 = pneg %p292
        %p570 = pneg %p289
        %p571 = scmp.lt.s32.totalorder %s30, 1
        %s572 = scalar_select %p571, %s30, 1
        %s573 = scalar_lea.vmem %s10, %s572
        %p574 = pneg %p318
        %p575 = pneg %p315
        %p576 = scmp.lt.s32.totalorder %s30, 1
        %s577 = scalar_select %p576, %s30, 1
        %s578 = scalar_lea.vmem %s11, %s577
        %p579 = pneg %p344
        %p580 = pneg %p341
        %p581 = scmp.lt.s32.totalorder %s30, 1
        %s582 = scalar_select %p581, %s30, 1
        %s583 = scalar_lea.vmem %s12, %s582
        %p584 = pneg %p370
        %p585 = pneg %p367
        %p586 = pneg %p396
        %p587 = pneg %p393
        %s588 = smul.u32 2, %s29
        %p589 = scmp.lt.s32.totalorder %s588, 1
        %s590 = scalar_select %p589, %s588, 1
        %s591 = smul.addr %s590, 4
        %s592 = scalar_lea.vmem %s0, %s591
        %s593 = smul.u32 2, %s29
        %p594 = scmp.lt.s32.totalorder %s30, 1
        %s595 = scalar_select %p594, %s30, 1
        %s596 = smul.addr %s595, 4
        %s597 = smul.addr %s596, 4
        %s598 = scalar_lea.vmem %s1, %s597
        %p599 = scmp.lt.s32.totalorder %s30, 1
        %s600 = scalar_select %p599, %s30, 1
        %s601 = scalar_lea.vmem %s2, %s600
        %p602 = scmp.lt.s32.totalorder %s30, 1
        %s603 = scalar_select %p602, %s30, 1
        %s604 = smul.addr %s603, 4
        %s605 = smul.addr %s604, 4
        %s606 = scalar_lea.vmem %s3, %s605
        %p607 = scmp.lt.s32.totalorder %s30, 1
        %s608 = scalar_select %p607, %s30, 1
        %s609 = scalar_lea.vmem %s4, %s608
        %p610 = scmp.lt.s32.totalorder %s30, 1
        %s611 = scalar_select %p610, %s30, 1
        %s612 = smul.addr %s611, 4
        %s613 = smul.addr %s612, 4
        %s614 = scalar_lea.vmem %s5, %s613
        %p615 = scmp.lt.s32.totalorder %s30, 1
        %s616 = scalar_select %p615, %s30, 1
        %s617 = scalar_lea.vmem %s6, %s616
        %p618 = scmp.lt.s32.totalorder %s30, 1
        %s619 = scalar_select %p618, %s30, 1
        %s620 = smul.addr %s619, 16
        %s621 = smul.addr %s620, 4
        %s622 = scalar_lea.vmem %s7, %s621
        %p623 = scmp.lt.s32.totalorder %s30, 1
        %s624 = scalar_select %p623, %s30, 1
        %s625 = scalar_lea.vmem %s8, %s624
        %p626 = scmp.lt.s32.totalorder %s30, 1
        %s627 = scalar_select %p626, %s30, 1
        %s628 = scalar_lea.vmem %s9, %s627
        %p629 = scmp.lt.s32.totalorder %s30, 1
        %s630 = scalar_select %p629, %s30, 1
        %s631 = scalar_lea.vmem %s10, %s630
        %p632 = scmp.lt.s32.totalorder %s30, 1
        %s633 = scalar_select %p632, %s30, 1
        %s634 = scalar_lea.vmem %s11, %s633
        %p635 = scmp.lt.s32.totalorder %s30, 1
        %s636 = scalar_select %p635, %s30, 1
        %s637 = scalar_lea.vmem %s12, %s636
        %s638 = smul.u32 2, %s29
        %p640 = scmp.eq.s32.totalorder %s30, 0
        // Predicated region
        $region73: #{tpu_custom_call.1} parent=71 // pred_check
          %p641 = pneg %p640
        $region74: #{tpu_custom_call.1} parent=71 // pred_check_branch
          %643 = sbr.rel (%p641) target = $region76
        $region75: #{tpu_custom_call.1} parent=71 // pred_region
          %v644 = vld [vmem:[%s592] sm:$0xf]
          %v645 = vld [vmem:[%s592 + $0x4] sm:$0xf]
          %v646 = vunpack.c.l.bf16 %v644
          %v647 = vunpack.c.l.bf16 %v645
          %vm648 = vcmask 261120
          %649 = vst.msk [vmem:[#allocation2] sm:$0xff] %vm648, %v646
          %650 = vst.msk [vmem:[#allocation2 + $0x8] sm:$0xff] %vm648, %v647
        $region76: #{tpu_custom_call.1} parent=71 // pred_fallthru
          _
        %v651 = vld [vmem:[#allocation2] sm:$0xff]
        %v652 = vld [vmem:[#allocation2 + $0x8] sm:$0xff]
        %v653 = vpack.c.bf16 %v652, %v651
        %v654 = vld [vmem:[%s598] sm:$0xf]
        %v655 = vld [vmem:[%s598 + $0x4] sm:$0xf]
        %v656 = vld [vmem:[%s598 + $0x8] sm:$0xf]
        %v657 = vld [vmem:[%s598 + $0xc] sm:$0xf]
        %v658 = vld [vmem:[%s601] sm:$0x1]
        %v660 = vlaneseq
        %v661 = vshrl.u32 %v660, 7
        %v662 = vsub.s32 0, %v661
        %v663 = vrot.slane %v658, %v662
        %v669 = vunpack.c.l.b16 %v654
        %v670 = vunpack.c.l.b16 %v655
        %v671 = vunpack.c.l.b16 %v656
        %v672 = vunpack.c.l.b16 %v657
        %v673 = vpack.c.b16 %v670, %v669
        %v674 = vpack.c.b16 %v672, %v671
        %vm677 = vcmask 261120
        %v679 = vsel %vm677, %v653, 0
        %681 = vmatprep.subr.bf16.mxu0 0
        %682 = vmatpush1.bf16.msra.mxu0 %v673
        %683 = vmatprep.subr.bf16.mxu0 0
        %684 = vmatpush1.bf16.msra.mxu0 %v674
        %685 = vmatprep.subr.bf16.mxu0 0
        %686 = vmatpush1.bf16.msra.mxu0 0
        %687 = vmatprep.subr.bf16.mxu0 0
        %688 = vmatpush1.bf16.msra.mxu0 0
        %689 = vmatprep.subr.bf16.mxu0 0
        %690 = vmatpush1.bf16.msra.mxu0 0
        %691 = vmatprep.subr.bf16.mxu0 0
        %692 = vmatpush1.bf16.msra.mxu0 0
        %693 = vmatprep.subr.bf16.mxu0 0
        %694 = vmatpush1.bf16.msra.mxu0 0
        %695 = vmatprep.subr.bf16.mxu0 0
        %696 = vmatpush1.bf16.msra.mxu0 0
        %697 = vmatprep.subr.bf16.mxu0 0
        %698 = vmatpush1.bf16.msra.mxu0 0
        %699 = vmatprep.subr.bf16.mxu0 0
        %700 = vmatpush1.bf16.msra.mxu0 0
        %701 = vmatprep.subr.bf16.mxu0 0
        %702 = vmatpush1.bf16.msra.mxu0 0
        %703 = vmatprep.subr.bf16.mxu0 0
        %704 = vmatpush1.bf16.msra.mxu0 0
        %705 = vmatprep.subr.bf16.mxu0 0
        %706 = vmatpush1.bf16.msra.mxu0 0
        %707 = vmatprep.subr.bf16.mxu0 0
        %708 = vmatpush1.bf16.msra.mxu0 0
        %709 = vmatprep.subr.bf16.mxu0 0
        %710 = vmatpush1.bf16.msra.mxu0 0
        %711 = vmatprep.subr.bf16.mxu0 0
        %712 = vmatpush1.bf16.msra.mxu0 0
        %713 = vmatprep.mubr.bf16.mxu0 0
        %714 = vmatmul.mubr.bf16.gmra.mrb[0].mxu0 %v679
        %v715 = vpop.f32.mrb[0].mxu0
        %v716 = vadd.f32 %v663, %v715
        %v717 = vpop.f32.mrb[0].mxu0
        %v718 = vpop.f32.mrb[0].mxu0
        %v719 = vadd.f32 %v663, %v718
        %v720 = vpop.f32.mrb[0].mxu0
        %721 = vdwg.mxu0
        %v722 = vmul.f32 %v716, 0.5
        %v723 = vmul.f32 %v719, 0.5
        %v724 = vpack.c.bf16 %v723, %v722
        %v725 = vpack.c.bf16 %v719, %v716
        %727 = vrot.lane.b32.xlu0 %v724, 124
        %v728 = vpop.permute.xlu0 %727
        %729 = vrot.lane.b32.xlu0 %v724, 120
        %v730 = vpop.permute.xlu0 %729
        %731 = vrot.lane.b32.xlu0 %v724, 116
        %v732 = vpop.permute.xlu0 %731
        %733 = vrot.lane.b32.xlu0 %v724, 112
        %v734 = vpop.permute.xlu0 %733
        %735 = vrot.lane.b32.xlu0 %v724, 108
        %v736 = vpop.permute.xlu0 %735
        %737 = vrot.lane.b32.xlu0 %v724, 104
        %v738 = vpop.permute.xlu0 %737
        %739 = vrot.lane.b32.xlu0 %v724, 100
        %v740 = vpop.permute.xlu0 %739
        %v743 = vpack.i.b16 %v728, %v724
        %v745 = vshrl.u32 %v724, 16
        %v746 = vshrl.u32 %v728, 16
        %v747 = vpack.i.b16 %v746, %v745
        %v751 = vpack.i.b16 %v732, %v730
        %v753 = vshrl.u32 %v730, 16
        %v754 = vshrl.u32 %v732, 16
        %v755 = vpack.i.b16 %v754, %v753
        %v759 = vpack.i.b16 %v736, %v734
        %v761 = vshrl.u32 %v734, 16
        %v762 = vshrl.u32 %v736, 16
        %v763 = vpack.i.b16 %v762, %v761
        %v767 = vpack.i.b16 %v740, %v738
        %v769 = vshrl.u32 %v738, 16
        %v770 = vshrl.u32 %v740, 16
        %v771 = vpack.i.b16 %v770, %v769
        %v773 = vcombine.low %v743, %v759
        %v774 = vcombine.high %v743, %v759
        %v776 = vunpack.c.l.s4 1983009808
        %v777 = vunpack.c.0.s8 %v776
        %v778 = vlaneseq
        %v779 = vshrl.u32 %v778, 7
        %v780 = vsub.s32 %v777, %v779
        %v781 = vrot.slane %v773, %v780
        %v783 = vunpack.c.l.s4 1983009808
        %v784 = vunpack.c.0.s8 %v783
        %v785 = vlaneseq
        %v786 = vshrl.u32 %v785, 7
        %v787 = vsub.s32 %v784, %v786
        %v788 = vrot.slane %v774, %v787
        %v789 = vcombine.low %v751, %v767
        %v790 = vcombine.high %v751, %v767
        %v792 = vunpack.c.l.s4 1983009808
        %v793 = vunpack.c.0.s8 %v792
        %v794 = vlaneseq
        %v795 = vshrl.u32 %v794, 7
        %v796 = vsub.s32 %v793, %v795
        %v797 = vrot.slane %v789, %v796
        %v799 = vunpack.c.l.s4 1983009808
        %v800 = vunpack.c.0.s8 %v799
        %v801 = vlaneseq
        %v802 = vshrl.u32 %v801, 7
        %v803 = vsub.s32 %v800, %v802
        %v804 = vrot.slane %v790, %v803
        %v805 = vcombine.low %v781, %v797
        %v806 = vcombine.high %v781, %v797
        %v808 = vunpack.c.l.s4 1934713408
        %v809 = vunpack.c.0.s8 %v808
        %v810 = vlaneseq
        %v811 = vshrl.u32 %v810, 7
        %v812 = vsub.s32 %v809, %v811
        %v813 = vrot.slane %v805, %v812
        %v815 = vunpack.c.l.s4 1934713408
        %v816 = vunpack.c.0.s8 %v815
        %v817 = vlaneseq
        %v818 = vshrl.u32 %v817, 7
        %v819 = vsub.s32 %v816, %v818
        %v820 = vrot.slane %v806, %v819
        %v821 = vcombine.low %v788, %v804
        %v822 = vcombine.high %v788, %v804
        %v824 = vunpack.c.l.s4 1934713408
        %v825 = vunpack.c.0.s8 %v824
        %v826 = vlaneseq
        %v827 = vshrl.u32 %v826, 7
        %v828 = vsub.s32 %v825, %v827
        %v829 = vrot.slane %v821, %v828
        %v831 = vunpack.c.l.s4 1934713408
        %v832 = vunpack.c.0.s8 %v831
        %v833 = vlaneseq
        %v834 = vshrl.u32 %v833, 7
        %v835 = vsub.s32 %v832, %v834
        %v836 = vrot.slane %v822, %v835
        %v837 = vcombine.high %v813, 0
        %v838 = vcombine.high %v820, 0
        %v839 = vcombine.high %v829, 0
        %v840 = vcombine.high %v836, 0
        %v841 = vcombine.low %v747, %v763
        %v842 = vcombine.high %v747, %v763
        %v844 = vunpack.c.l.s4 1983009808
        %v845 = vunpack.c.0.s8 %v844
        %v846 = vlaneseq
        %v847 = vshrl.u32 %v846, 7
        %v848 = vsub.s32 %v845, %v847
        %v849 = vrot.slane %v841, %v848
        %v851 = vunpack.c.l.s4 1983009808
        %v852 = vunpack.c.0.s8 %v851
        %v853 = vlaneseq
        %v854 = vshrl.u32 %v853, 7
        %v855 = vsub.s32 %v852, %v854
        %v856 = vrot.slane %v842, %v855
        %v857 = vcombine.low %v755, %v771
        %v858 = vcombine.high %v755, %v771
        %v860 = vunpack.c.l.s4 1983009808
        %v861 = vunpack.c.0.s8 %v860
        %v862 = vlaneseq
        %v863 = vshrl.u32 %v862, 7
        %v864 = vsub.s32 %v861, %v863
        %v865 = vrot.slane %v857, %v864
        %v867 = vunpack.c.l.s4 1983009808
        %v868 = vunpack.c.0.s8 %v867
        %v869 = vlaneseq
        %v870 = vshrl.u32 %v869, 7
        %v871 = vsub.s32 %v868, %v870
        %v872 = vrot.slane %v858, %v871
        %v873 = vcombine.low %v849, %v865
        %v874 = vcombine.high %v849, %v865
        %v876 = vunpack.c.l.s4 1934713408
        %v877 = vunpack.c.0.s8 %v876
        %v878 = vlaneseq
        %v879 = vshrl.u32 %v878, 7
        %v880 = vsub.s32 %v877, %v879
        %v881 = vrot.slane %v873, %v880
        %v883 = vunpack.c.l.s4 1934713408
        %v884 = vunpack.c.0.s8 %v883
        %v885 = vlaneseq
        %v886 = vshrl.u32 %v885, 7
        %v887 = vsub.s32 %v884, %v886
        %v888 = vrot.slane %v874, %v887
        %v889 = vcombine.low %v856, %v872
        %v890 = vcombine.high %v856, %v872
        %v892 = vunpack.c.l.s4 1934713408
        %v893 = vunpack.c.0.s8 %v892
        %v894 = vlaneseq
        %v895 = vshrl.u32 %v894, 7
        %v896 = vsub.s32 %v893, %v895
        %v897 = vrot.slane %v889, %v896
        %v899 = vunpack.c.l.s4 1934713408
        %v900 = vunpack.c.0.s8 %v899
        %v901 = vlaneseq
        %v902 = vshrl.u32 %v901, 7
        %v903 = vsub.s32 %v900, %v902
        %v904 = vrot.slane %v890, %v903
        %v905 = vcombine.high %v881, 0
        %v906 = vcombine.high %v888, 0
        %v907 = vcombine.high %v897, 0
        %v908 = vcombine.high %v904, 0
        %v909 = vcombine.low %v813, %v820
        %v911 = vunpack.c.l.s4 1983009808
        %v912 = vunpack.c.0.s8 %v911
        %v913 = vlaneseq
        %v914 = vshrl.u32 %v913, 7
        %v915 = vsub.s32 %v912, %v914
        %v916 = vrot.slane %v909, %v915
        %v917 = vcombine.low %v837, %v838
        %v919 = vunpack.c.l.s4 1983009808
        %v920 = vunpack.c.0.s8 %v919
        %v921 = vlaneseq
        %v922 = vshrl.u32 %v921, 7
        %v923 = vsub.s32 %v920, %v922
        %v924 = vrot.slane %v917, %v923
        %v925 = vcombine.low %v916, %v924
        %v926 = vcombine.high %v916, %v924
        %v928 = vunpack.c.l.s4 1934713408
        %v929 = vunpack.c.0.s8 %v928
        %v930 = vlaneseq
        %v931 = vshrl.u32 %v930, 7
        %v932 = vsub.s32 %v929, %v931
        %v933 = vrot.slane %v925, %v932
        %v935 = vunpack.c.l.s4 1934713408
        %v936 = vunpack.c.0.s8 %v935
        %v937 = vlaneseq
        %v938 = vshrl.u32 %v937, 7
        %v939 = vsub.s32 %v936, %v938
        %v940 = vrot.slane %v926, %v939
        %v941 = vcombine.high %v933, 0
        %v942 = vcombine.high %v940, 0
        %v943 = vcombine.low %v881, %v888
        %v945 = vunpack.c.l.s4 1983009808
        %v946 = vunpack.c.0.s8 %v945
        %v947 = vlaneseq
        %v948 = vshrl.u32 %v947, 7
        %v949 = vsub.s32 %v946, %v948
        %v950 = vrot.slane %v943, %v949
        %v951 = vcombine.low %v905, %v906
        %v953 = vunpack.c.l.s4 1983009808
        %v954 = vunpack.c.0.s8 %v953
        %v955 = vlaneseq
        %v956 = vshrl.u32 %v955, 7
        %v957 = vsub.s32 %v954, %v956
        %v958 = vrot.slane %v951, %v957
        %v959 = vcombine.low %v950, %v958
        %v960 = vcombine.high %v950, %v958
        %v962 = vunpack.c.l.s4 1934713408
        %v963 = vunpack.c.0.s8 %v962
        %v964 = vlaneseq
        %v965 = vshrl.u32 %v964, 7
        %v966 = vsub.s32 %v963, %v965
        %v967 = vrot.slane %v959, %v966
        %v969 = vunpack.c.l.s4 1934713408
        %v970 = vunpack.c.0.s8 %v969
        %v971 = vlaneseq
        %v972 = vshrl.u32 %v971, 7
        %v973 = vsub.s32 %v970, %v972
        %v974 = vrot.slane %v960, %v973
        %v975 = vcombine.high %v967, 0
        %v976 = vcombine.high %v974, 0
        %v977 = vcombine.low %v829, %v836
        %v979 = vunpack.c.l.s4 1983009808
        %v980 = vunpack.c.0.s8 %v979
        %v981 = vlaneseq
        %v982 = vshrl.u32 %v981, 7
        %v983 = vsub.s32 %v980, %v982
        %v984 = vrot.slane %v977, %v983
        %v985 = vcombine.low %v839, %v840
        %v987 = vunpack.c.l.s4 1983009808
        %v988 = vunpack.c.0.s8 %v987
        %v989 = vlaneseq
        %v990 = vshrl.u32 %v989, 7
        %v991 = vsub.s32 %v988, %v990
        %v992 = vrot.slane %v985, %v991
        %v993 = vcombine.low %v984, %v992
        %v994 = vcombine.high %v984, %v992
        %v996 = vunpack.c.l.s4 1934713408
        %v997 = vunpack.c.0.s8 %v996
        %v998 = vlaneseq
        %v999 = vshrl.u32 %v998, 7
        %v1000 = vsub.s32 %v997, %v999
        %v1001 = vrot.slane %v993, %v1000
        %v1003 = vunpack.c.l.s4 1934713408
        %v1004 = vunpack.c.0.s8 %v1003
        %v1005 = vlaneseq
        %v1006 = vshrl.u32 %v1005, 7
        %v1007 = vsub.s32 %v1004, %v1006
        %v1008 = vrot.slane %v994, %v1007
        %v1009 = vcombine.high %v1001, 0
        %v1010 = vcombine.high %v1008, 0
        %v1011 = vcombine.low %v897, %v904
        %v1013 = vunpack.c.l.s4 1983009808
        %v1014 = vunpack.c.0.s8 %v1013
        %v1015 = vlaneseq
        %v1016 = vshrl.u32 %v1015, 7
        %v1017 = vsub.s32 %v1014, %v1016
        %v1018 = vrot.slane %v1011, %v1017
        %v1019 = vcombine.low %v907, %v908
        %v1021 = vunpack.c.l.s4 1983009808
        %v1022 = vunpack.c.0.s8 %v1021
        %v1023 = vlaneseq
        %v1024 = vshrl.u32 %v1023, 7
        %v1025 = vsub.s32 %v1022, %v1024
        %v1026 = vrot.slane %v1019, %v1025
        %v1027 = vcombine.low %v1018, %v1026
        %v1028 = vcombine.high %v1018, %v1026
        %v1030 = vunpack.c.l.s4 1934713408
        %v1031 = vunpack.c.0.s8 %v1030
        %v1032 = vlaneseq
        %v1033 = vshrl.u32 %v1032, 7
        %v1034 = vsub.s32 %v1031, %v1033
        %v1035 = vrot.slane %v1027, %v1034
        %v1037 = vunpack.c.l.s4 1934713408
        %v1038 = vunpack.c.0.s8 %v1037
        %v1039 = vlaneseq
        %v1040 = vshrl.u32 %v1039, 7
        %v1041 = vsub.s32 %v1038, %v1040
        %v1042 = vrot.slane %v1028, %v1041
        %v1043 = vcombine.high %v1035, 0
        %v1044 = vcombine.high %v1042, 0
        %v1047 = vpack.i.b16 %v967, %v933
        %v1048 = vshrl.u32 %v933, 16
        %v1049 = vshrl.u32 %v967, 16
        %v1050 = vpack.i.b16 %v1049, %v1048
        %v1053 = vpack.i.b16 %v975, %v941
        %v1054 = vshrl.u32 %v941, 16
        %v1055 = vshrl.u32 %v975, 16
        %v1056 = vpack.i.b16 %v1055, %v1054
        %v1059 = vpack.i.b16 %v974, %v940
        %v1060 = vshrl.u32 %v940, 16
        %v1061 = vshrl.u32 %v974, 16
        %v1062 = vpack.i.b16 %v1061, %v1060
        %v1065 = vpack.i.b16 %v976, %v942
        %v1066 = vshrl.u32 %v942, 16
        %v1067 = vshrl.u32 %v976, 16
        %v1068 = vpack.i.b16 %v1067, %v1066
        %v1071 = vpack.i.b16 %v1035, %v1001
        %v1072 = vshrl.u32 %v1001, 16
        %v1073 = vshrl.u32 %v1035, 16
        %v1074 = vpack.i.b16 %v1073, %v1072
        %v1077 = vpack.i.b16 %v1043, %v1009
        %v1078 = vshrl.u32 %v1009, 16
        %v1079 = vshrl.u32 %v1043, 16
        %v1080 = vpack.i.b16 %v1079, %v1078
        %v1083 = vpack.i.b16 %v1042, %v1008
        %v1084 = vshrl.u32 %v1008, 16
        %v1085 = vshrl.u32 %v1042, 16
        %v1086 = vpack.i.b16 %v1085, %v1084
        %v1089 = vpack.i.b16 %v1044, %v1010
        %v1090 = vshrl.u32 %v1010, 16
        %v1091 = vshrl.u32 %v1044, 16
        %v1092 = vpack.i.b16 %v1091, %v1090
        %1094 = vrot.lane.b32.xlu0 %v725, 124
        %v1095 = vpop.permute.xlu0 %1094
        %1096 = vrot.lane.b32.xlu0 %v725, 120
        %v1097 = vpop.permute.xlu0 %1096
        %1098 = vrot.lane.b32.xlu0 %v725, 116
        %v1099 = vpop.permute.xlu0 %1098
        %1100 = vrot.lane.b32.xlu0 %v725, 112
        %v1101 = vpop.permute.xlu0 %1100
        %1102 = vrot.lane.b32.xlu0 %v725, 108
        %v1103 = vpop.permute.xlu0 %1102
        %1104 = vrot.lane.b32.xlu0 %v725, 104
        %v1105 = vpop.permute.xlu0 %1104
        %1106 = vrot.lane.b32.xlu0 %v725, 100
        %v1107 = vpop.permute.xlu0 %1106
        %1108 = vrot.lane.b32.xlu0 %v725, 96
        %v1109 = vpop.permute.xlu0 %1108
        %1110 = vrot.lane.b32.xlu0 %v1095, 96
        %v1111 = vpop.permute.xlu0 %1110
        %1112 = vrot.lane.b32.xlu0 %v1097, 96
        %v1113 = vpop.permute.xlu0 %1112
        %1114 = vrot.lane.b32.xlu0 %v1099, 96
        %v1115 = vpop.permute.xlu0 %1114
        %1116 = vrot.lane.b32.xlu0 %v1101, 96
        %v1117 = vpop.permute.xlu0 %1116
        %1118 = vrot.lane.b32.xlu0 %v1103, 96
        %v1119 = vpop.permute.xlu0 %1118
        %1120 = vrot.lane.b32.xlu0 %v1105, 96
        %v1121 = vpop.permute.xlu0 %1120
        %1122 = vrot.lane.b32.xlu0 %v1107, 96
        %v1123 = vpop.permute.xlu0 %1122
        %v1126 = vpack.i.b16 %v1111, %v1109
        %v1128 = vshrl.u32 %v1109, 16
        %v1129 = vshrl.u32 %v1111, 16
        %v1130 = vpack.i.b16 %v1129, %v1128
        %v1134 = vpack.i.b16 %v1115, %v1113
        %v1136 = vshrl.u32 %v1113, 16
        %v1137 = vshrl.u32 %v1115, 16
        %v1138 = vpack.i.b16 %v1137, %v1136
        %v1142 = vpack.i.b16 %v1119, %v1117
        %v1144 = vshrl.u32 %v1117, 16
        %v1145 = vshrl.u32 %v1119, 16
        %v1146 = vpack.i.b16 %v1145, %v1144
        %v1150 = vpack.i.b16 %v1123, %v1121
        %v1152 = vshrl.u32 %v1121, 16
        %v1153 = vshrl.u32 %v1123, 16
        %v1154 = vpack.i.b16 %v1153, %v1152
        %v1156 = vcombine.low %v1126, %v1142
        %v1157 = vcombine.high %v1126, %v1142
        %v1159 = vunpack.c.l.s4 1983009808
        %v1160 = vunpack.c.0.s8 %v1159
        %v1161 = vlaneseq
        %v1162 = vshrl.u32 %v1161, 7
        %v1163 = vsub.s32 %v1160, %v1162
        %v1164 = vrot.slane %v1156, %v1163
        %v1166 = vunpack.c.l.s4 1983009808
        %v1167 = vunpack.c.0.s8 %v1166
        %v1168 = vlaneseq
        %v1169 = vshrl.u32 %v1168, 7
        %v1170 = vsub.s32 %v1167, %v1169
        %v1171 = vrot.slane %v1157, %v1170
        %v1172 = vcombine.low %v1134, %v1150
        %v1173 = vcombine.high %v1134, %v1150
        %v1175 = vunpack.c.l.s4 1983009808
        %v1176 = vunpack.c.0.s8 %v1175
        %v1177 = vlaneseq
        %v1178 = vshrl.u32 %v1177, 7
        %v1179 = vsub.s32 %v1176, %v1178
        %v1180 = vrot.slane %v1172, %v1179
        %v1182 = vunpack.c.l.s4 1983009808
        %v1183 = vunpack.c.0.s8 %v1182
        %v1184 = vlaneseq
        %v1185 = vshrl.u32 %v1184, 7
        %v1186 = vsub.s32 %v1183, %v1185
        %v1187 = vrot.slane %v1173, %v1186
        %v1188 = vcombine.low %v1164, %v1180
        %v1189 = vcombine.high %v1164, %v1180
        %v1191 = vunpack.c.l.s4 1934713408
        %v1192 = vunpack.c.0.s8 %v1191
        %v1193 = vlaneseq
        %v1194 = vshrl.u32 %v1193, 7
        %v1195 = vsub.s32 %v1192, %v1194
        %v1196 = vrot.slane %v1188, %v1195
        %v1198 = vunpack.c.l.s4 1934713408
        %v1199 = vunpack.c.0.s8 %v1198
        %v1200 = vlaneseq
        %v1201 = vshrl.u32 %v1200, 7
        %v1202 = vsub.s32 %v1199, %v1201
        %v1203 = vrot.slane %v1189, %v1202
        %v1204 = vcombine.low %v1171, %v1187
        %v1205 = vcombine.high %v1171, %v1187
        %v1207 = vunpack.c.l.s4 1934713408
        %v1208 = vunpack.c.0.s8 %v1207
        %v1209 = vlaneseq
        %v1210 = vshrl.u32 %v1209, 7
        %v1211 = vsub.s32 %v1208, %v1210
        %v1212 = vrot.slane %v1204, %v1211
        %v1214 = vunpack.c.l.s4 1934713408
        %v1215 = vunpack.c.0.s8 %v1214
        %v1216 = vlaneseq
        %v1217 = vshrl.u32 %v1216, 7
        %v1218 = vsub.s32 %v1215, %v1217
        %v1219 = vrot.slane %v1205, %v1218
        %v1220 = vcombine.high %v1196, 0
        %v1221 = vcombine.high %v1203, 0
        %v1222 = vcombine.high %v1212, 0
        %v1223 = vcombine.high %v1219, 0
        %v1224 = vcombine.low %v1130, %v1146
        %v1225 = vcombine.high %v1130, %v1146
        %v1227 = vunpack.c.l.s4 1983009808
        %v1228 = vunpack.c.0.s8 %v1227
        %v1229 = vlaneseq
        %v1230 = vshrl.u32 %v1229, 7
        %v1231 = vsub.s32 %v1228, %v1230
        %v1232 = vrot.slane %v1224, %v1231
        %v1234 = vunpack.c.l.s4 1983009808
        %v1235 = vunpack.c.0.s8 %v1234
        %v1236 = vlaneseq
        %v1237 = vshrl.u32 %v1236, 7
        %v1238 = vsub.s32 %v1235, %v1237
        %v1239 = vrot.slane %v1225, %v1238
        %v1240 = vcombine.low %v1138, %v1154
        %v1241 = vcombine.high %v1138, %v1154
        %v1243 = vunpack.c.l.s4 1983009808
        %v1244 = vunpack.c.0.s8 %v1243
        %v1245 = vlaneseq
        %v1246 = vshrl.u32 %v1245, 7
        %v1247 = vsub.s32 %v1244, %v1246
        %v1248 = vrot.slane %v1240, %v1247
        %v1250 = vunpack.c.l.s4 1983009808
        %v1251 = vunpack.c.0.s8 %v1250
        %v1252 = vlaneseq
        %v1253 = vshrl.u32 %v1252, 7
        %v1254 = vsub.s32 %v1251, %v1253
        %v1255 = vrot.slane %v1241, %v1254
        %v1256 = vcombine.low %v1232, %v1248
        %v1257 = vcombine.high %v1232, %v1248
        %v1259 = vunpack.c.l.s4 1934713408
        %v1260 = vunpack.c.0.s8 %v1259
        %v1261 = vlaneseq
        %v1262 = vshrl.u32 %v1261, 7
        %v1263 = vsub.s32 %v1260, %v1262
        %v1264 = vrot.slane %v1256, %v1263
        %v1266 = vunpack.c.l.s4 1934713408
        %v1267 = vunpack.c.0.s8 %v1266
        %v1268 = vlaneseq
        %v1269 = vshrl.u32 %v1268, 7
        %v1270 = vsub.s32 %v1267, %v1269
        %v1271 = vrot.slane %v1257, %v1270
        %v1272 = vcombine.low %v1239, %v1255
        %v1273 = vcombine.high %v1239, %v1255
        %v1275 = vunpack.c.l.s4 1934713408
        %v1276 = vunpack.c.0.s8 %v1275
        %v1277 = vlaneseq
        %v1278 = vshrl.u32 %v1277, 7
        %v1279 = vsub.s32 %v1276, %v1278
        %v1280 = vrot.slane %v1272, %v1279
        %v1282 = vunpack.c.l.s4 1934713408
        %v1283 = vunpack.c.0.s8 %v1282
        %v1284 = vlaneseq
        %v1285 = vshrl.u32 %v1284, 7
        %v1286 = vsub.s32 %v1283, %v1285
        %v1287 = vrot.slane %v1273, %v1286
        %v1288 = vcombine.high %v1264, 0
        %v1289 = vcombine.high %v1271, 0
        %v1290 = vcombine.high %v1280, 0
        %v1291 = vcombine.high %v1287, 0
        %v1292 = vcombine.low %v1196, %v1203
        %v1294 = vunpack.c.l.s4 1983009808
        %v1295 = vunpack.c.0.s8 %v1294
        %v1296 = vlaneseq
        %v1297 = vshrl.u32 %v1296, 7
        %v1298 = vsub.s32 %v1295, %v1297
        %v1299 = vrot.slane %v1292, %v1298
        %v1300 = vcombine.low %v1220, %v1221
        %v1302 = vunpack.c.l.s4 1983009808
        %v1303 = vunpack.c.0.s8 %v1302
        %v1304 = vlaneseq
        %v1305 = vshrl.u32 %v1304, 7
        %v1306 = vsub.s32 %v1303, %v1305
        %v1307 = vrot.slane %v1300, %v1306
        %v1308 = vcombine.low %v1299, %v1307
        %v1309 = vcombine.high %v1299, %v1307
        %v1311 = vunpack.c.l.s4 1934713408
        %v1312 = vunpack.c.0.s8 %v1311
        %v1313 = vlaneseq
        %v1314 = vshrl.u32 %v1313, 7
        %v1315 = vsub.s32 %v1312, %v1314
        %v1316 = vrot.slane %v1308, %v1315
        %v1318 = vunpack.c.l.s4 1934713408
        %v1319 = vunpack.c.0.s8 %v1318
        %v1320 = vlaneseq
        %v1321 = vshrl.u32 %v1320, 7
        %v1322 = vsub.s32 %v1319, %v1321
        %v1323 = vrot.slane %v1309, %v1322
        %v1324 = vcombine.high %v1316, 0
        %v1325 = vcombine.high %v1323, 0
        %v1326 = vcombine.low %v1264, %v1271
        %v1328 = vunpack.c.l.s4 1983009808
        %v1329 = vunpack.c.0.s8 %v1328
        %v1330 = vlaneseq
        %v1331 = vshrl.u32 %v1330, 7
        %v1332 = vsub.s32 %v1329, %v1331
        %v1333 = vrot.slane %v1326, %v1332
        %v1334 = vcombine.low %v1288, %v1289
        %v1336 = vunpack.c.l.s4 1983009808
        %v1337 = vunpack.c.0.s8 %v1336
        %v1338 = vlaneseq
        %v1339 = vshrl.u32 %v1338, 7
        %v1340 = vsub.s32 %v1337, %v1339
        %v1341 = vrot.slane %v1334, %v1340
        %v1342 = vcombine.low %v1333, %v1341
        %v1343 = vcombine.high %v1333, %v1341
        %v1345 = vunpack.c.l.s4 1934713408
        %v1346 = vunpack.c.0.s8 %v1345
        %v1347 = vlaneseq
        %v1348 = vshrl.u32 %v1347, 7
        %v1349 = vsub.s32 %v1346, %v1348
        %v1350 = vrot.slane %v1342, %v1349
        %v1352 = vunpack.c.l.s4 1934713408
        %v1353 = vunpack.c.0.s8 %v1352
        %v1354 = vlaneseq
        %v1355 = vshrl.u32 %v1354, 7
        %v1356 = vsub.s32 %v1353, %v1355
        %v1357 = vrot.slane %v1343, %v1356
        %v1358 = vcombine.high %v1350, 0
        %v1359 = vcombine.high %v1357, 0
        %v1360 = vcombine.low %v1212, %v1219
        %v1362 = vunpack.c.l.s4 1983009808
        %v1363 = vunpack.c.0.s8 %v1362
        %v1364 = vlaneseq
        %v1365 = vshrl.u32 %v1364, 7
        %v1366 = vsub.s32 %v1363, %v1365
        %v1367 = vrot.slane %v1360, %v1366
        %v1368 = vcombine.low %v1222, %v1223
        %v1370 = vunpack.c.l.s4 1983009808
        %v1371 = vunpack.c.0.s8 %v1370
        %v1372 = vlaneseq
        %v1373 = vshrl.u32 %v1372, 7
        %v1374 = vsub.s32 %v1371, %v1373
        %v1375 = vrot.slane %v1368, %v1374
        %v1376 = vcombine.low %v1367, %v1375
        %v1377 = vcombine.high %v1367, %v1375
        %v1379 = vunpack.c.l.s4 1934713408
        %v1380 = vunpack.c.0.s8 %v1379
        %v1381 = vlaneseq
        %v1382 = vshrl.u32 %v1381, 7
        %v1383 = vsub.s32 %v1380, %v1382
        %v1384 = vrot.slane %v1376, %v1383
        %v1386 = vunpack.c.l.s4 1934713408
        %v1387 = vunpack.c.0.s8 %v1386
        %v1388 = vlaneseq
        %v1389 = vshrl.u32 %v1388, 7
        %v1390 = vsub.s32 %v1387, %v1389
        %v1391 = vrot.slane %v1377, %v1390
        %v1392 = vcombine.high %v1384, 0
        %v1393 = vcombine.high %v1391, 0
        %v1394 = vcombine.low %v1280, %v1287
        %v1396 = vunpack.c.l.s4 1983009808
        %v1397 = vunpack.c.0.s8 %v1396
        %v1398 = vlaneseq
        %v1399 = vshrl.u32 %v1398, 7
        %v1400 = vsub.s32 %v1397, %v1399
        %v1401 = vrot.slane %v1394, %v1400
        %v1402 = vcombine.low %v1290, %v1291
        %v1404 = vunpack.c.l.s4 1983009808
        %v1405 = vunpack.c.0.s8 %v1404
        %v1406 = vlaneseq
        %v1407 = vshrl.u32 %v1406, 7
        %v1408 = vsub.s32 %v1405, %v1407
        %v1409 = vrot.slane %v1402, %v1408
        %v1410 = vcombine.low %v1401, %v1409
        %v1411 = vcombine.high %v1401, %v1409
        %v1413 = vunpack.c.l.s4 1934713408
        %v1414 = vunpack.c.0.s8 %v1413
        %v1415 = vlaneseq
        %v1416 = vshrl.u32 %v1415, 7
        %v1417 = vsub.s32 %v1414, %v1416
        %v1418 = vrot.slane %v1410, %v1417
        %v1420 = vunpack.c.l.s4 1934713408
        %v1421 = vunpack.c.0.s8 %v1420
        %v1422 = vlaneseq
        %v1423 = vshrl.u32 %v1422, 7
        %v1424 = vsub.s32 %v1421, %v1423
        %v1425 = vrot.slane %v1411, %v1424
        %v1426 = vcombine.high %v1418, 0
        %v1427 = vcombine.high %v1425, 0
        %v1430 = vpack.i.b16 %v1350, %v1316
        %v1431 = vshrl.u32 %v1316, 16
        %v1432 = vshrl.u32 %v1350, 16
        %v1433 = vpack.i.b16 %v1432, %v1431
        %v1436 = vpack.i.b16 %v1358, %v1324
        %v1437 = vshrl.u32 %v1324, 16
        %v1438 = vshrl.u32 %v1358, 16
        %v1439 = vpack.i.b16 %v1438, %v1437
        %v1442 = vpack.i.b16 %v1357, %v1323
        %v1443 = vshrl.u32 %v1323, 16
        %v1444 = vshrl.u32 %v1357, 16
        %v1445 = vpack.i.b16 %v1444, %v1443
        %v1448 = vpack.i.b16 %v1359, %v1325
        %v1449 = vshrl.u32 %v1325, 16
        %v1450 = vshrl.u32 %v1359, 16
        %v1451 = vpack.i.b16 %v1450, %v1449
        %v1454 = vpack.i.b16 %v1418, %v1384
        %v1455 = vshrl.u32 %v1384, 16
        %v1456 = vshrl.u32 %v1418, 16
        %v1457 = vpack.i.b16 %v1456, %v1455
        %v1460 = vpack.i.b16 %v1426, %v1392
        %v1461 = vshrl.u32 %v1392, 16
        %v1462 = vshrl.u32 %v1426, 16
        %v1463 = vpack.i.b16 %v1462, %v1461
        %v1466 = vpack.i.b16 %v1425, %v1391
        %v1467 = vshrl.u32 %v1391, 16
        %v1468 = vshrl.u32 %v1425, 16
        %v1469 = vpack.i.b16 %v1468, %v1467
        %v1472 = vpack.i.b16 %v1427, %v1393
        %v1473 = vshrl.u32 %v1393, 16
        %v1474 = vshrl.u32 %v1427, 16
        %v1475 = vpack.i.b16 %v1474, %v1473
        %1476 = vrot.lane.b32.xlu0 %v725, 64
        %v1477 = vpop.permute.xlu0 %1476
        %1478 = vrot.lane.b32.xlu0 %v1095, 64
        %v1479 = vpop.permute.xlu0 %1478
        %1480 = vrot.lane.b32.xlu0 %v1097, 64
        %v1481 = vpop.permute.xlu0 %1480
        %1482 = vrot.lane.b32.xlu0 %v1099, 64
        %v1483 = vpop.permute.xlu0 %1482
        %1484 = vrot.lane.b32.xlu0 %v1101, 64
        %v1485 = vpop.permute.xlu0 %1484
        %1486 = vrot.lane.b32.xlu0 %v1103, 64
        %v1487 = vpop.permute.xlu0 %1486
        %1488 = vrot.lane.b32.xlu0 %v1105, 64
        %v1489 = vpop.permute.xlu0 %1488
        %1490 = vrot.lane.b32.xlu0 %v1107, 64
        %v1491 = vpop.permute.xlu0 %1490
        %v1494 = vpack.i.b16 %v1479, %v1477
        %v1496 = vshrl.u32 %v1477, 16
        %v1497 = vshrl.u32 %v1479, 16
        %v1498 = vpack.i.b16 %v1497, %v1496
        %v1502 = vpack.i.b16 %v1483, %v1481
        %v1504 = vshrl.u32 %v1481, 16
        %v1505 = vshrl.u32 %v1483, 16
        %v1506 = vpack.i.b16 %v1505, %v1504
        %v1510 = vpack.i.b16 %v1487, %v1485
        %v1512 = vshrl.u32 %v1485, 16
        %v1513 = vshrl.u32 %v1487, 16
        %v1514 = vpack.i.b16 %v1513, %v1512
        %v1518 = vpack.i.b16 %v1491, %v1489
        %v1520 = vshrl.u32 %v1489, 16
        %v1521 = vshrl.u32 %v1491, 16
        %v1522 = vpack.i.b16 %v1521, %v1520
        %v1524 = vcombine.low %v1494, %v1510
        %v1525 = vcombine.high %v1494, %v1510
        %v1527 = vunpack.c.l.s4 1983009808
        %v1528 = vunpack.c.0.s8 %v1527
        %v1529 = vlaneseq
        %v1530 = vshrl.u32 %v1529, 7
        %v1531 = vsub.s32 %v1528, %v1530
        %v1532 = vrot.slane %v1524, %v1531
        %v1534 = vunpack.c.l.s4 1983009808
        %v1535 = vunpack.c.0.s8 %v1534
        %v1536 = vlaneseq
        %v1537 = vshrl.u32 %v1536, 7
        %v1538 = vsub.s32 %v1535, %v1537
        %v1539 = vrot.slane %v1525, %v1538
        %v1540 = vcombine.low %v1502, %v1518
        %v1541 = vcombine.high %v1502, %v1518
        %v1543 = vunpack.c.l.s4 1983009808
        %v1544 = vunpack.c.0.s8 %v1543
        %v1545 = vlaneseq
        %v1546 = vshrl.u32 %v1545, 7
        %v1547 = vsub.s32 %v1544, %v1546
        %v1548 = vrot.slane %v1540, %v1547
        %v1550 = vunpack.c.l.s4 1983009808
        %v1551 = vunpack.c.0.s8 %v1550
        %v1552 = vlaneseq
        %v1553 = vshrl.u32 %v1552, 7
        %v1554 = vsub.s32 %v1551, %v1553
        %v1555 = vrot.slane %v1541, %v1554
        %v1556 = vcombine.low %v1532, %v1548
        %v1557 = vcombine.high %v1532, %v1548
        %v1559 = vunpack.c.l.s4 1934713408
        %v1560 = vunpack.c.0.s8 %v1559
        %v1561 = vlaneseq
        %v1562 = vshrl.u32 %v1561, 7
        %v1563 = vsub.s32 %v1560, %v1562
        %v1564 = vrot.slane %v1556, %v1563
        %v1566 = vunpack.c.l.s4 1934713408
        %v1567 = vunpack.c.0.s8 %v1566
        %v1568 = vlaneseq
        %v1569 = vshrl.u32 %v1568, 7
        %v1570 = vsub.s32 %v1567, %v1569
        %v1571 = vrot.slane %v1557, %v1570
        %v1572 = vcombine.low %v1539, %v1555
        %v1573 = vcombine.high %v1539, %v1555
        %v1575 = vunpack.c.l.s4 1934713408
        %v1576 = vunpack.c.0.s8 %v1575
        %v1577 = vlaneseq
        %v1578 = vshrl.u32 %v1577, 7
        %v1579 = vsub.s32 %v1576, %v1578
        %v1580 = vrot.slane %v1572, %v1579
        %v1582 = vunpack.c.l.s4 1934713408
        %v1583 = vunpack.c.0.s8 %v1582
        %v1584 = vlaneseq
        %v1585 = vshrl.u32 %v1584, 7
        %v1586 = vsub.s32 %v1583, %v1585
        %v1587 = vrot.slane %v1573, %v1586
        %v1588 = vcombine.high %v1564, 0
        %v1589 = vcombine.high %v1571, 0
        %v1590 = vcombine.high %v1580, 0
        %v1591 = vcombine.high %v1587, 0
        %v1592 = vcombine.low %v1498, %v1514
        %v1593 = vcombine.high %v1498, %v1514
        %v1595 = vunpack.c.l.s4 1983009808
        %v1596 = vunpack.c.0.s8 %v1595
        %v1597 = vlaneseq
        %v1598 = vshrl.u32 %v1597, 7
        %v1599 = vsub.s32 %v1596, %v1598
        %v1600 = vrot.slane %v1592, %v1599
        %v1602 = vunpack.c.l.s4 1983009808
        %v1603 = vunpack.c.0.s8 %v1602
        %v1604 = vlaneseq
        %v1605 = vshrl.u32 %v1604, 7
        %v1606 = vsub.s32 %v1603, %v1605
        %v1607 = vrot.slane %v1593, %v1606
        %v1608 = vcombine.low %v1506, %v1522
        %v1609 = vcombine.high %v1506, %v1522
        %v1611 = vunpack.c.l.s4 1983009808
        %v1612 = vunpack.c.0.s8 %v1611
        %v1613 = vlaneseq
        %v1614 = vshrl.u32 %v1613, 7
        %v1615 = vsub.s32 %v1612, %v1614
        %v1616 = vrot.slane %v1608, %v1615
        %v1618 = vunpack.c.l.s4 1983009808
        %v1619 = vunpack.c.0.s8 %v1618
        %v1620 = vlaneseq
        %v1621 = vshrl.u32 %v1620, 7
        %v1622 = vsub.s32 %v1619, %v1621
        %v1623 = vrot.slane %v1609, %v1622
        %v1624 = vcombine.low %v1600, %v1616
        %v1625 = vcombine.high %v1600, %v1616
        %v1627 = vunpack.c.l.s4 1934713408
        %v1628 = vunpack.c.0.s8 %v1627
        %v1629 = vlaneseq
        %v1630 = vshrl.u32 %v1629, 7
        %v1631 = vsub.s32 %v1628, %v1630
        %v1632 = vrot.slane %v1624, %v1631
        %v1634 = vunpack.c.l.s4 1934713408
        %v1635 = vunpack.c.0.s8 %v1634
        %v1636 = vlaneseq
        %v1637 = vshrl.u32 %v1636, 7
        %v1638 = vsub.s32 %v1635, %v1637
        %v1639 = vrot.slane %v1625, %v1638
        %v1640 = vcombine.low %v1607, %v1623
        %v1641 = vcombine.high %v1607, %v1623
        %v1643 = vunpack.c.l.s4 1934713408
        %v1644 = vunpack.c.0.s8 %v1643
        %v1645 = vlaneseq
        %v1646 = vshrl.u32 %v1645, 7
        %v1647 = vsub.s32 %v1644, %v1646
        %v1648 = vrot.slane %v1640, %v1647
        %v1650 = vunpack.c.l.s4 1934713408
        %v1651 = vunpack.c.0.s8 %v1650
        %v1652 = vlaneseq
        %v1653 = vshrl.u32 %v1652, 7
        %v1654 = vsub.s32 %v1651, %v1653
        %v1655 = vrot.slane %v1641, %v1654
        %v1656 = vcombine.high %v1632, 0
        %v1657 = vcombine.high %v1639, 0
        %v1658 = vcombine.high %v1648, 0
        %v1659 = vcombine.high %v1655, 0
        %v1660 = vcombine.low %v1564, %v1571
        %v1662 = vunpack.c.l.s4 1983009808
        %v1663 = vunpack.c.0.s8 %v1662
        %v1664 = vlaneseq
        %v1665 = vshrl.u32 %v1664, 7
        %v1666 = vsub.s32 %v1663, %v1665
        %v1667 = vrot.slane %v1660, %v1666
        %v1668 = vcombine.low %v1588, %v1589
        %v1670 = vunpack.c.l.s4 1983009808
        %v1671 = vunpack.c.0.s8 %v1670
        %v1672 = vlaneseq
        %v1673 = vshrl.u32 %v1672, 7
        %v1674 = vsub.s32 %v1671, %v1673
        %v1675 = vrot.slane %v1668, %v1674
        %v1676 = vcombine.low %v1667, %v1675
        %v1677 = vcombine.high %v1667, %v1675
        %v1679 = vunpack.c.l.s4 1934713408
        %v1680 = vunpack.c.0.s8 %v1679
        %v1681 = vlaneseq
        %v1682 = vshrl.u32 %v1681, 7
        %v1683 = vsub.s32 %v1680, %v1682
        %v1684 = vrot.slane %v1676, %v1683
        %v1686 = vunpack.c.l.s4 1934713408
        %v1687 = vunpack.c.0.s8 %v1686
        %v1688 = vlaneseq
        %v1689 = vshrl.u32 %v1688, 7
        %v1690 = vsub.s32 %v1687, %v1689
        %v1691 = vrot.slane %v1677, %v1690
        %v1692 = vcombine.high %v1684, 0
        %v1693 = vcombine.high %v1691, 0
        %v1694 = vcombine.low %v1632, %v1639
        %v1696 = vunpack.c.l.s4 1983009808
        %v1697 = vunpack.c.0.s8 %v1696
        %v1698 = vlaneseq
        %v1699 = vshrl.u32 %v1698, 7
        %v1700 = vsub.s32 %v1697, %v1699
        %v1701 = vrot.slane %v1694, %v1700
        %v1702 = vcombine.low %v1656, %v1657
        %v1704 = vunpack.c.l.s4 1983009808
        %v1705 = vunpack.c.0.s8 %v1704
        %v1706 = vlaneseq
        %v1707 = vshrl.u32 %v1706, 7
        %v1708 = vsub.s32 %v1705, %v1707
        %v1709 = vrot.slane %v1702, %v1708
        %v1710 = vcombine.low %v1701, %v1709
        %v1711 = vcombine.high %v1701, %v1709
        %v1713 = vunpack.c.l.s4 1934713408
        %v1714 = vunpack.c.0.s8 %v1713
        %v1715 = vlaneseq
        %v1716 = vshrl.u32 %v1715, 7
        %v1717 = vsub.s32 %v1714, %v1716
        %v1718 = vrot.slane %v1710, %v1717
        %v1720 = vunpack.c.l.s4 1934713408
        %v1721 = vunpack.c.0.s8 %v1720
        %v1722 = vlaneseq
        %v1723 = vshrl.u32 %v1722, 7
        %v1724 = vsub.s32 %v1721, %v1723
        %v1725 = vrot.slane %v1711, %v1724
        %v1726 = vcombine.high %v1718, 0
        %v1727 = vcombine.high %v1725, 0
        %v1728 = vcombine.low %v1580, %v1587
        %v1730 = vunpack.c.l.s4 1983009808
        %v1731 = vunpack.c.0.s8 %v1730
        %v1732 = vlaneseq
        %v1733 = vshrl.u32 %v1732, 7
        %v1734 = vsub.s32 %v1731, %v1733
        %v1735 = vrot.slane %v1728, %v1734
        %v1736 = vcombine.low %v1590, %v1591
        %v1738 = vunpack.c.l.s4 1983009808
        %v1739 = vunpack.c.0.s8 %v1738
        %v1740 = vlaneseq
        %v1741 = vshrl.u32 %v1740, 7
        %v1742 = vsub.s32 %v1739, %v1741
        %v1743 = vrot.slane %v1736, %v1742
        %v1744 = vcombine.low %v1735, %v1743
        %v1745 = vcombine.high %v1735, %v1743
        %v1747 = vunpack.c.l.s4 1934713408
        %v1748 = vunpack.c.0.s8 %v1747
        %v1749 = vlaneseq
        %v1750 = vshrl.u32 %v1749, 7
        %v1751 = vsub.s32 %v1748, %v1750
        %v1752 = vrot.slane %v1744, %v1751
        %v1754 = vunpack.c.l.s4 1934713408
        %v1755 = vunpack.c.0.s8 %v1754
        %v1756 = vlaneseq
        %v1757 = vshrl.u32 %v1756, 7
        %v1758 = vsub.s32 %v1755, %v1757
        %v1759 = vrot.slane %v1745, %v1758
        %v1760 = vcombine.high %v1752, 0
        %v1761 = vcombine.high %v1759, 0
        %v1762 = vcombine.low %v1648, %v1655
        %v1764 = vunpack.c.l.s4 1983009808
        %v1765 = vunpack.c.0.s8 %v1764
        %v1766 = vlaneseq
        %v1767 = vshrl.u32 %v1766, 7
        %v1768 = vsub.s32 %v1765, %v1767
        %v1769 = vrot.slane %v1762, %v1768
        %v1770 = vcombine.low %v1658, %v1659
        %v1772 = vunpack.c.l.s4 1983009808
        %v1773 = vunpack.c.0.s8 %v1772
        %v1774 = vlaneseq
        %v1775 = vshrl.u32 %v1774, 7
        %v1776 = vsub.s32 %v1773, %v1775
        %v1777 = vrot.slane %v1770, %v1776
        %v1778 = vcombine.low %v1769, %v1777
        %v1779 = vcombine.high %v1769, %v1777
        %v1781 = vunpack.c.l.s4 1934713408
        %v1782 = vunpack.c.0.s8 %v1781
        %v1783 = vlaneseq
        %v1784 = vshrl.u32 %v1783, 7
        %v1785 = vsub.s32 %v1782, %v1784
        %v1786 = vrot.slane %v1778, %v1785
        %v1788 = vunpack.c.l.s4 1934713408
        %v1789 = vunpack.c.0.s8 %v1788
        %v1790 = vlaneseq
        %v1791 = vshrl.u32 %v1790, 7
        %v1792 = vsub.s32 %v1789, %v1791
        %v1793 = vrot.slane %v1779, %v1792
        %v1794 = vcombine.high %v1786, 0
        %v1795 = vcombine.high %v1793, 0
        %v1798 = vpack.i.b16 %v1718, %v1684
        %v1799 = vshrl.u32 %v1684, 16
        %v1800 = vshrl.u32 %v1718, 16
        %v1801 = vpack.i.b16 %v1800, %v1799
        %v1804 = vpack.i.b16 %v1726, %v1692
        %v1805 = vshrl.u32 %v1692, 16
        %v1806 = vshrl.u32 %v1726, 16
        %v1807 = vpack.i.b16 %v1806, %v1805
        %v1810 = vpack.i.b16 %v1725, %v1691
        %v1811 = vshrl.u32 %v1691, 16
        %v1812 = vshrl.u32 %v1725, 16
        %v1813 = vpack.i.b16 %v1812, %v1811
        %v1816 = vpack.i.b16 %v1727, %v1693
        %v1817 = vshrl.u32 %v1693, 16
        %v1818 = vshrl.u32 %v1727, 16
        %v1819 = vpack.i.b16 %v1818, %v1817
        %v1822 = vpack.i.b16 %v1786, %v1752
        %v1823 = vshrl.u32 %v1752, 16
        %v1824 = vshrl.u32 %v1786, 16
        %v1825 = vpack.i.b16 %v1824, %v1823
        %v1828 = vpack.i.b16 %v1794, %v1760
        %v1829 = vshrl.u32 %v1760, 16
        %v1830 = vshrl.u32 %v1794, 16
        %v1831 = vpack.i.b16 %v1830, %v1829
        %v1834 = vpack.i.b16 %v1793, %v1759
        %v1835 = vshrl.u32 %v1759, 16
        %v1836 = vshrl.u32 %v1793, 16
        %v1837 = vpack.i.b16 %v1836, %v1835
        %v1840 = vpack.i.b16 %v1795, %v1761
        %v1841 = vshrl.u32 %v1761, 16
        %v1842 = vshrl.u32 %v1795, 16
        %v1843 = vpack.i.b16 %v1842, %v1841
        %vm1844 = vcmask 31744
        %v1846 = vsel %vm1844, %v1047, 0
        %v1849 = vsel %vm1844, %v1430, 0
        %1851 = vmatprep.subr.bf16.mxu0 0
        %1852 = vmatpush1.bf16.xpose.msra.mxu0 %v1849
        %1853 = vmatprep.subr.bf16.mxu0 0
        %1854 = vmatpush1.bf16.xpose.msra.mxu0 0
        %1855 = vmatprep.subr.bf16.mxu0 0
        %1856 = vmatpush1.bf16.xpose.msra.mxu0 0
        %1857 = vmatprep.subr.bf16.mxu0 0
        %1858 = vmatpush1.bf16.xpose.msra.mxu0 0
        %1859 = vmatprep.subr.bf16.mxu0 0
        %1860 = vmatpush1.bf16.xpose.msra.mxu0 0
        %1861 = vmatprep.subr.bf16.mxu0 0
        %1862 = vmatpush1.bf16.xpose.msra.mxu0 0
        %1863 = vmatprep.subr.bf16.mxu0 0
        %1864 = vmatpush1.bf16.xpose.msra.mxu0 0
        %1865 = vmatprep.subr.bf16.mxu0 0
        %1866 = vmatpush1.bf16.xpose.msra.mxu0 0
        %1867 = vmatprep.subr.bf16.mxu0 0
        %1868 = vmatpush1.bf16.xpose.msra.mxu0 0
        %1869 = vmatprep.subr.bf16.mxu0 0
        %1870 = vmatpush1.bf16.xpose.msra.mxu0 0
        %1871 = vmatprep.subr.bf16.mxu0 0
        %1872 = vmatpush1.bf16.xpose.msra.mxu0 0
        %1873 = vmatprep.subr.bf16.mxu0 0
        %1874 = vmatpush1.bf16.xpose.msra.mxu0 0
        %1875 = vmatprep.subr.bf16.mxu0 0
        %1876 = vmatpush1.bf16.xpose.msra.mxu0 0
        %1877 = vmatprep.subr.bf16.mxu0 0
        %1878 = vmatpush1.bf16.xpose.msra.mxu0 0
        %1879 = vmatprep.subr.bf16.mxu0 0
        %1880 = vmatpush1.bf16.xpose.msra.mxu0 0
        %1881 = vmatprep.subr.bf16.mxu0 0
        %1882 = vmatpush1.bf16.xpose.msra.mxu0 0
        %1883 = vmatprep.mubr.bf16.mxu0 0
        %1884 = vmatmul.mubr.bf16.gmra.mrb[0].mxu0 %v1846
        %v1885 = vpop.f32.mrb[0].mxu0
        %v1886 = vadd.f32 0.0, %v1885
        %v1887 = vpop.f32.mrb[0].mxu0
        %v1888 = vpop.f32.mrb[0].mxu0
        %v1889 = vpop.f32.mrb[0].mxu0
        %1890 = vdwg.mxu0
        %v1892 = vsel %vm1844, %v1050, 0
        %v1895 = vsel %vm1844, %v1433, 0
        %1897 = vmatprep.subr.bf16.mxu0 0
        %1898 = vmatpush1.bf16.xpose.msra.mxu0 %v1895
        %1899 = vmatprep.subr.bf16.mxu0 0
        %1900 = vmatpush1.bf16.xpose.msra.mxu0 0
        %1901 = vmatprep.subr.bf16.mxu0 0
        %1902 = vmatpush1.bf16.xpose.msra.mxu0 0
        %1903 = vmatprep.subr.bf16.mxu0 0
        %1904 = vmatpush1.bf16.xpose.msra.mxu0 0
        %1905 = vmatprep.subr.bf16.mxu0 0
        %1906 = vmatpush1.bf16.xpose.msra.mxu0 0
        %1907 = vmatprep.subr.bf16.mxu0 0
        %1908 = vmatpush1.bf16.xpose.msra.mxu0 0
        %1909 = vmatprep.subr.bf16.mxu0 0
        %1910 = vmatpush1.bf16.xpose.msra.mxu0 0
        %1911 = vmatprep.subr.bf16.mxu0 0
        %1912 = vmatpush1.bf16.xpose.msra.mxu0 0
        %1913 = vmatprep.subr.bf16.mxu0 0
        %1914 = vmatpush1.bf16.xpose.msra.mxu0 0
        %1915 = vmatprep.subr.bf16.mxu0 0
        %1916 = vmatpush1.bf16.xpose.msra.mxu0 0
        %1917 = vmatprep.subr.bf16.mxu0 0
        %1918 = vmatpush1.bf16.xpose.msra.mxu0 0
        %1919 = vmatprep.subr.bf16.mxu0 0
        %1920 = vmatpush1.bf16.xpose.msra.mxu0 0
        %1921 = vmatprep.subr.bf16.mxu0 0
        %1922 = vmatpush1.bf16.xpose.msra.mxu0 0
        %1923 = vmatprep.subr.bf16.mxu0 0
        %1924 = vmatpush1.bf16.xpose.msra.mxu0 0
        %1925 = vmatprep.subr.bf16.mxu0 0
        %1926 = vmatpush1.bf16.xpose.msra.mxu0 0
        %1927 = vmatprep.subr.bf16.mxu0 0
        %1928 = vmatpush1.bf16.xpose.msra.mxu0 0
        %1929 = vmatprep.mubr.bf16.mxu0 0
        %1930 = vmatmul.mubr.bf16.gmra.mrb[0].mxu0 %v1892
        %v1931 = vpop.f32.mrb[0].mxu0
        %v1932 = vadd.f32 0.0, %v1931
        %v1933 = vpop.f32.mrb[0].mxu0
        %v1934 = vpop.f32.mrb[0].mxu0
        %v1935 = vpop.f32.mrb[0].mxu0
        %1936 = vdwg.mxu0
        %v1938 = vsel %vm1844, %v1053, 0
        %v1941 = vsel %vm1844, %v1436, 0
        %1943 = vmatprep.subr.bf16.mxu0 0
        %1944 = vmatpush1.bf16.xpose.msra.mxu0 %v1941
        %1945 = vmatprep.subr.bf16.mxu0 0
        %1946 = vmatpush1.bf16.xpose.msra.mxu0 0
        %1947 = vmatprep.subr.bf16.mxu0 0
        %1948 = vmatpush1.bf16.xpose.msra.mxu0 0
        %1949 = vmatprep.subr.bf16.mxu0 0
        %1950 = vmatpush1.bf16.xpose.msra.mxu0 0
        %1951 = vmatprep.subr.bf16.mxu0 0
        %1952 = vmatpush1.bf16.xpose.msra.mxu0 0
        %1953 = vmatprep.subr.bf16.mxu0 0
        %1954 = vmatpush1.bf16.xpose.msra.mxu0 0
        %1955 = vmatprep.subr.bf16.mxu0 0
        %1956 = vmatpush1.bf16.xpose.msra.mxu0 0
        %1957 = vmatprep.subr.bf16.mxu0 0
        %1958 = vmatpush1.bf16.xpose.msra.mxu0 0
        %1959 = vmatprep.subr.bf16.mxu0 0
        %1960 = vmatpush1.bf16.xpose.msra.mxu0 0
        %1961 = vmatprep.subr.bf16.mxu0 0
        %1962 = vmatpush1.bf16.xpose.msra.mxu0 0
        %1963 = vmatprep.subr.bf16.mxu0 0
        %1964 = vmatpush1.bf16.xpose.msra.mxu0 0
        %1965 = vmatprep.subr.bf16.mxu0 0
        %1966 = vmatpush1.bf16.xpose.msra.mxu0 0
        %1967 = vmatprep.subr.bf16.mxu0 0
        %1968 = vmatpush1.bf16.xpose.msra.mxu0 0
        %1969 = vmatprep.subr.bf16.mxu0 0
        %1970 = vmatpush1.bf16.xpose.msra.mxu0 0
        %1971 = vmatprep.subr.bf16.mxu0 0
        %1972 = vmatpush1.bf16.xpose.msra.mxu0 0
        %1973 = vmatprep.subr.bf16.mxu0 0
        %1974 = vmatpush1.bf16.xpose.msra.mxu0 0
        %1975 = vmatprep.mubr.bf16.mxu0 0
        %1976 = vmatmul.mubr.bf16.gmra.mrb[0].mxu0 %v1938
        %v1977 = vpop.f32.mrb[0].mxu0
        %v1978 = vadd.f32 0.0, %v1977
        %v1979 = vpop.f32.mrb[0].mxu0
        %v1980 = vpop.f32.mrb[0].mxu0
        %v1981 = vpop.f32.mrb[0].mxu0
        %1982 = vdwg.mxu0
        %v1984 = vsel %vm1844, %v1056, 0
        %v1987 = vsel %vm1844, %v1439, 0
        %1989 = vmatprep.subr.bf16.mxu0 0
        %1990 = vmatpush1.bf16.xpose.msra.mxu0 %v1987
        %1991 = vmatprep.subr.bf16.mxu0 0
        %1992 = vmatpush1.bf16.xpose.msra.mxu0 0
        %1993 = vmatprep.subr.bf16.mxu0 0
        %1994 = vmatpush1.bf16.xpose.msra.mxu0 0
        %1995 = vmatprep.subr.bf16.mxu0 0
        %1996 = vmatpush1.bf16.xpose.msra.mxu0 0
        %1997 = vmatprep.subr.bf16.mxu0 0
        %1998 = vmatpush1.bf16.xpose.msra.mxu0 0
        %1999 = vmatprep.subr.bf16.mxu0 0
        %2000 = vmatpush1.bf16.xpose.msra.mxu0 0
        %2001 = vmatprep.subr.bf16.mxu0 0
        %2002 = vmatpush1.bf16.xpose.msra.mxu0 0
        %2003 = vmatprep.subr.bf16.mxu0 0
        %2004 = vmatpush1.bf16.xpose.msra.mxu0 0
        %2005 = vmatprep.subr.bf16.mxu0 0
        %2006 = vmatpush1.bf16.xpose.msra.mxu0 0
        %2007 = vmatprep.subr.bf16.mxu0 0
        %2008 = vmatpush1.bf16.xpose.msra.mxu0 0
        %2009 = vmatprep.subr.bf16.mxu0 0
        %2010 = vmatpush1.bf16.xpose.msra.mxu0 0
        %2011 = vmatprep.subr.bf16.mxu0 0
        %2012 = vmatpush1.bf16.xpose.msra.mxu0 0
        %2013 = vmatprep.subr.bf16.mxu0 0
        %2014 = vmatpush1.bf16.xpose.msra.mxu0 0
        %2015 = vmatprep.subr.bf16.mxu0 0
        %2016 = vmatpush1.bf16.xpose.msra.mxu0 0
        %2017 = vmatprep.subr.bf16.mxu0 0
        %2018 = vmatpush1.bf16.xpose.msra.mxu0 0
        %2019 = vmatprep.subr.bf16.mxu0 0
        %2020 = vmatpush1.bf16.xpose.msra.mxu0 0
        %2021 = vmatprep.mubr.bf16.mxu0 0
        %2022 = vmatmul.mubr.bf16.gmra.mrb[0].mxu0 %v1984
        %v2023 = vpop.f32.mrb[0].mxu0
        %v2024 = vadd.f32 0.0, %v2023
        %v2025 = vpop.f32.mrb[0].mxu0
        %v2026 = vpop.f32.mrb[0].mxu0
        %v2027 = vpop.f32.mrb[0].mxu0
        %2028 = vdwg.mxu0
        %v2030 = vsel %vm1844, %v1059, 0
        %v2033 = vsel %vm1844, %v1442, 0
        %2035 = vmatprep.subr.bf16.mxu0 0
        %2036 = vmatpush1.bf16.xpose.msra.mxu0 %v2033
        %2037 = vmatprep.subr.bf16.mxu0 0
        %2038 = vmatpush1.bf16.xpose.msra.mxu0 0
        %2039 = vmatprep.subr.bf16.mxu0 0
        %2040 = vmatpush1.bf16.xpose.msra.mxu0 0
        %2041 = vmatprep.subr.bf16.mxu0 0
        %2042 = vmatpush1.bf16.xpose.msra.mxu0 0
        %2043 = vmatprep.subr.bf16.mxu0 0
        %2044 = vmatpush1.bf16.xpose.msra.mxu0 0
        %2045 = vmatprep.subr.bf16.mxu0 0
        %2046 = vmatpush1.bf16.xpose.msra.mxu0 0
        %2047 = vmatprep.subr.bf16.mxu0 0
        %2048 = vmatpush1.bf16.xpose.msra.mxu0 0
        %2049 = vmatprep.subr.bf16.mxu0 0
        %2050 = vmatpush1.bf16.xpose.msra.mxu0 0
        %2051 = vmatprep.subr.bf16.mxu0 0
        %2052 = vmatpush1.bf16.xpose.msra.mxu0 0
        %2053 = vmatprep.subr.bf16.mxu0 0
        %2054 = vmatpush1.bf16.xpose.msra.mxu0 0
        %2055 = vmatprep.subr.bf16.mxu0 0
        %2056 = vmatpush1.bf16.xpose.msra.mxu0 0
        %2057 = vmatprep.subr.bf16.mxu0 0
        %2058 = vmatpush1.bf16.xpose.msra.mxu0 0
        %2059 = vmatprep.subr.bf16.mxu0 0
        %2060 = vmatpush1.bf16.xpose.msra.mxu0 0
        %2061 = vmatprep.subr.bf16.mxu0 0
        %2062 = vmatpush1.bf16.xpose.msra.mxu0 0
        %2063 = vmatprep.subr.bf16.mxu0 0
        %2064 = vmatpush1.bf16.xpose.msra.mxu0 0
        %2065 = vmatprep.subr.bf16.mxu0 0
        %2066 = vmatpush1.bf16.xpose.msra.mxu0 0
        %2067 = vmatprep.mubr.bf16.mxu0 0
        %2068 = vmatmul.mubr.bf16.gmra.mrb[0].mxu0 %v2030
        %v2069 = vpop.f32.mrb[0].mxu0
        %v2070 = vadd.f32 0.0, %v2069
        %v2071 = vpop.f32.mrb[0].mxu0
        %v2072 = vpop.f32.mrb[0].mxu0
        %v2073 = vpop.f32.mrb[0].mxu0
        %2074 = vdwg.mxu0
        %v2076 = vsel %vm1844, %v1062, 0
        %v2079 = vsel %vm1844, %v1445, 0
        %2081 = vmatprep.subr.bf16.mxu0 0
        %2082 = vmatpush1.bf16.xpose.msra.mxu0 %v2079
        %2083 = vmatprep.subr.bf16.mxu0 0
        %2084 = vmatpush1.bf16.xpose.msra.mxu0 0
        %2085 = vmatprep.subr.bf16.mxu0 0
        %2086 = vmatpush1.bf16.xpose.msra.mxu0 0
        %2087 = vmatprep.subr.bf16.mxu0 0
        %2088 = vmatpush1.bf16.xpose.msra.mxu0 0
        %2089 = vmatprep.subr.bf16.mxu0 0
        %2090 = vmatpush1.bf16.xpose.msra.mxu0 0
        %2091 = vmatprep.subr.bf16.mxu0 0
        %2092 = vmatpush1.bf16.xpose.msra.mxu0 0
        %2093 = vmatprep.subr.bf16.mxu0 0
        %2094 = vmatpush1.bf16.xpose.msra.mxu0 0
        %2095 = vmatprep.subr.bf16.mxu0 0
        %2096 = vmatpush1.bf16.xpose.msra.mxu0 0
        %2097 = vmatprep.subr.bf16.mxu0 0
        %2098 = vmatpush1.bf16.xpose.msra.mxu0 0
        %2099 = vmatprep.subr.bf16.mxu0 0
        %2100 = vmatpush1.bf16.xpose.msra.mxu0 0
        %2101 = vmatprep.subr.bf16.mxu0 0
        %2102 = vmatpush1.bf16.xpose.msra.mxu0 0
        %2103 = vmatprep.subr.bf16.mxu0 0
        %2104 = vmatpush1.bf16.xpose.msra.mxu0 0
        %2105 = vmatprep.subr.bf16.mxu0 0
        %2106 = vmatpush1.bf16.xpose.msra.mxu0 0
        %2107 = vmatprep.subr.bf16.mxu0 0
        %2108 = vmatpush1.bf16.xpose.msra.mxu0 0
        %2109 = vmatprep.subr.bf16.mxu0 0
        %2110 = vmatpush1.bf16.xpose.msra.mxu0 0
        %2111 = vmatprep.subr.bf16.mxu0 0
        %2112 = vmatpush1.bf16.xpose.msra.mxu0 0
        %2113 = vmatprep.mubr.bf16.mxu0 0
        %2114 = vmatmul.mubr.bf16.gmra.mrb[0].mxu0 %v2076
        %v2115 = vpop.f32.mrb[0].mxu0
        %v2116 = vadd.f32 0.0, %v2115
        %v2117 = vpop.f32.mrb[0].mxu0
        %v2118 = vpop.f32.mrb[0].mxu0
        %v2119 = vpop.f32.mrb[0].mxu0
        %2120 = vdwg.mxu0
        %v2122 = vsel %vm1844, %v1065, 0
        %v2125 = vsel %vm1844, %v1448, 0
        %2127 = vmatprep.subr.bf16.mxu0 0
        %2128 = vmatpush1.bf16.xpose.msra.mxu0 %v2125
        %2129 = vmatprep.subr.bf16.mxu0 0
        %2130 = vmatpush1.bf16.xpose.msra.mxu0 0
        %2131 = vmatprep.subr.bf16.mxu0 0
        %2132 = vmatpush1.bf16.xpose.msra.mxu0 0
        %2133 = vmatprep.subr.bf16.mxu0 0
        %2134 = vmatpush1.bf16.xpose.msra.mxu0 0
        %2135 = vmatprep.subr.bf16.mxu0 0
        %2136 = vmatpush1.bf16.xpose.msra.mxu0 0
        %2137 = vmatprep.subr.bf16.mxu0 0
        %2138 = vmatpush1.bf16.xpose.msra.mxu0 0
        %2139 = vmatprep.subr.bf16.mxu0 0
        %2140 = vmatpush1.bf16.xpose.msra.mxu0 0
        %2141 = vmatprep.subr.bf16.mxu0 0
        %2142 = vmatpush1.bf16.xpose.msra.mxu0 0
        %2143 = vmatprep.subr.bf16.mxu0 0
        %2144 = vmatpush1.bf16.xpose.msra.mxu0 0
        %2145 = vmatprep.subr.bf16.mxu0 0
        %2146 = vmatpush1.bf16.xpose.msra.mxu0 0
        %2147 = vmatprep.subr.bf16.mxu0 0
        %2148 = vmatpush1.bf16.xpose.msra.mxu0 0
        %2149 = vmatprep.subr.bf16.mxu0 0
        %2150 = vmatpush1.bf16.xpose.msra.mxu0 0
        %2151 = vmatprep.subr.bf16.mxu0 0
        %2152 = vmatpush1.bf16.xpose.msra.mxu0 0
        %2153 = vmatprep.subr.bf16.mxu0 0
        %2154 = vmatpush1.bf16.xpose.msra.mxu0 0
        %2155 = vmatprep.subr.bf16.mxu0 0
        %2156 = vmatpush1.bf16.xpose.msra.mxu0 0
        %2157 = vmatprep.subr.bf16.mxu0 0
        %2158 = vmatpush1.bf16.xpose.msra.mxu0 0
        %2159 = vmatprep.mubr.bf16.mxu0 0
        %2160 = vmatmul.mubr.bf16.gmra.mrb[0].mxu0 %v2122
        %v2161 = vpop.f32.mrb[0].mxu0
        %v2162 = vadd.f32 0.0, %v2161
        %v2163 = vpop.f32.mrb[0].mxu0
        %v2164 = vpop.f32.mrb[0].mxu0
        %v2165 = vpop.f32.mrb[0].mxu0
        %2166 = vdwg.mxu0
        %v2168 = vsel %vm1844, %v1068, 0
        %v2171 = vsel %vm1844, %v1451, 0
        %2173 = vmatprep.subr.bf16.mxu0 0
        %2174 = vmatpush1.bf16.xpose.msra.mxu0 %v2171
        %2175 = vmatprep.subr.bf16.mxu0 0
        %2176 = vmatpush1.bf16.xpose.msra.mxu0 0
        %2177 = vmatprep.subr.bf16.mxu0 0
        %2178 = vmatpush1.bf16.xpose.msra.mxu0 0
        %2179 = vmatprep.subr.bf16.mxu0 0
        %2180 = vmatpush1.bf16.xpose.msra.mxu0 0
        %2181 = vmatprep.subr.bf16.mxu0 0
        %2182 = vmatpush1.bf16.xpose.msra.mxu0 0
        %2183 = vmatprep.subr.bf16.mxu0 0
        %2184 = vmatpush1.bf16.xpose.msra.mxu0 0
        %2185 = vmatprep.subr.bf16.mxu0 0
        %2186 = vmatpush1.bf16.xpose.msra.mxu0 0
        %2187 = vmatprep.subr.bf16.mxu0 0
        %2188 = vmatpush1.bf16.xpose.msra.mxu0 0
        %2189 = vmatprep.subr.bf16.mxu0 0
        %2190 = vmatpush1.bf16.xpose.msra.mxu0 0
        %2191 = vmatprep.subr.bf16.mxu0 0
        %2192 = vmatpush1.bf16.xpose.msra.mxu0 0
        %2193 = vmatprep.subr.bf16.mxu0 0
        %2194 = vmatpush1.bf16.xpose.msra.mxu0 0
        %2195 = vmatprep.subr.bf16.mxu0 0
        %2196 = vmatpush1.bf16.xpose.msra.mxu0 0
        %2197 = vmatprep.subr.bf16.mxu0 0
        %2198 = vmatpush1.bf16.xpose.msra.mxu0 0
        %2199 = vmatprep.subr.bf16.mxu0 0
        %2200 = vmatpush1.bf16.xpose.msra.mxu0 0
        %2201 = vmatprep.subr.bf16.mxu0 0
        %2202 = vmatpush1.bf16.xpose.msra.mxu0 0
        %2203 = vmatprep.subr.bf16.mxu0 0
        %2204 = vmatpush1.bf16.xpose.msra.mxu0 0
        %2205 = vmatprep.mubr.bf16.mxu0 0
        %2206 = vmatmul.mubr.bf16.gmra.mrb[0].mxu0 %v2168
        %v2207 = vpop.f32.mrb[0].mxu0
        %v2208 = vadd.f32 0.0, %v2207
        %v2209 = vpop.f32.mrb[0].mxu0
        %v2210 = vpop.f32.mrb[0].mxu0
        %v2211 = vpop.f32.mrb[0].mxu0
        %2212 = vdwg.mxu0
        %v2214 = vsel %vm1844, %v1071, 0
        %v2217 = vsel %vm1844, %v1454, 0
        %2219 = vmatprep.subr.bf16.mxu0 0
        %2220 = vmatpush1.bf16.xpose.msra.mxu0 %v2217
        %2221 = vmatprep.subr.bf16.mxu0 0
        %2222 = vmatpush1.bf16.xpose.msra.mxu0 0
        %2223 = vmatprep.subr.bf16.mxu0 0
        %2224 = vmatpush1.bf16.xpose.msra.mxu0 0
        %2225 = vmatprep.subr.bf16.mxu0 0
        %2226 = vmatpush1.bf16.xpose.msra.mxu0 0
        %2227 = vmatprep.subr.bf16.mxu0 0
        %2228 = vmatpush1.bf16.xpose.msra.mxu0 0
        %2229 = vmatprep.subr.bf16.mxu0 0
        %2230 = vmatpush1.bf16.xpose.msra.mxu0 0
        %2231 = vmatprep.subr.bf16.mxu0 0
        %2232 = vmatpush1.bf16.xpose.msra.mxu0 0
        %2233 = vmatprep.subr.bf16.mxu0 0
        %2234 = vmatpush1.bf16.xpose.msra.mxu0 0
        %2235 = vmatprep.subr.bf16.mxu0 0
        %2236 = vmatpush1.bf16.xpose.msra.mxu0 0
        %2237 = vmatprep.subr.bf16.mxu0 0
        %2238 = vmatpush1.bf16.xpose.msra.mxu0 0
        %2239 = vmatprep.subr.bf16.mxu0 0
        %2240 = vmatpush1.bf16.xpose.msra.mxu0 0
        %2241 = vmatprep.subr.bf16.mxu0 0
        %2242 = vmatpush1.bf16.xpose.msra.mxu0 0
        %2243 = vmatprep.subr.bf16.mxu0 0
        %2244 = vmatpush1.bf16.xpose.msra.mxu0 0
        %2245 = vmatprep.subr.bf16.mxu0 0
        %2246 = vmatpush1.bf16.xpose.msra.mxu0 0
        %2247 = vmatprep.subr.bf16.mxu0 0
        %2248 = vmatpush1.bf16.xpose.msra.mxu0 0
        %2249 = vmatprep.subr.bf16.mxu0 0
        %2250 = vmatpush1.bf16.xpose.msra.mxu0 0
        %2251 = vmatprep.mubr.bf16.mxu0 0
        %2252 = vmatmul.mubr.bf16.gmra.mrb[0].mxu0 %v2214
        %v2253 = vpop.f32.mrb[0].mxu0
        %v2254 = vadd.f32 0.0, %v2253
        %v2255 = vpop.f32.mrb[0].mxu0
        %v2256 = vpop.f32.mrb[0].mxu0
        %v2257 = vpop.f32.mrb[0].mxu0
        %2258 = vdwg.mxu0
        %v2260 = vsel %vm1844, %v1074, 0
        %v2263 = vsel %vm1844, %v1457, 0
        %2265 = vmatprep.subr.bf16.mxu0 0
        %2266 = vmatpush1.bf16.xpose.msra.mxu0 %v2263
        %2267 = vmatprep.subr.bf16.mxu0 0
        %2268 = vmatpush1.bf16.xpose.msra.mxu0 0
        %2269 = vmatprep.subr.bf16.mxu0 0
        %2270 = vmatpush1.bf16.xpose.msra.mxu0 0
        %2271 = vmatprep.subr.bf16.mxu0 0
        %2272 = vmatpush1.bf16.xpose.msra.mxu0 0
        %2273 = vmatprep.subr.bf16.mxu0 0
        %2274 = vmatpush1.bf16.xpose.msra.mxu0 0
        %2275 = vmatprep.subr.bf16.mxu0 0
        %2276 = vmatpush1.bf16.xpose.msra.mxu0 0
        %2277 = vmatprep.subr.bf16.mxu0 0
        %2278 = vmatpush1.bf16.xpose.msra.mxu0 0
        %2279 = vmatprep.subr.bf16.mxu0 0
        %2280 = vmatpush1.bf16.xpose.msra.mxu0 0
        %2281 = vmatprep.subr.bf16.mxu0 0
        %2282 = vmatpush1.bf16.xpose.msra.mxu0 0
        %2283 = vmatprep.subr.bf16.mxu0 0
        %2284 = vmatpush1.bf16.xpose.msra.mxu0 0
        %2285 = vmatprep.subr.bf16.mxu0 0
        %2286 = vmatpush1.bf16.xpose.msra.mxu0 0
        %2287 = vmatprep.subr.bf16.mxu0 0
        %2288 = vmatpush1.bf16.xpose.msra.mxu0 0
        %2289 = vmatprep.subr.bf16.mxu0 0
        %2290 = vmatpush1.bf16.xpose.msra.mxu0 0
        %2291 = vmatprep.subr.bf16.mxu0 0
        %2292 = vmatpush1.bf16.xpose.msra.mxu0 0
        %2293 = vmatprep.subr.bf16.mxu0 0
        %2294 = vmatpush1.bf16.xpose.msra.mxu0 0
        %2295 = vmatprep.subr.bf16.mxu0 0
        %2296 = vmatpush1.bf16.xpose.msra.mxu0 0
        %2297 = vmatprep.mubr.bf16.mxu0 0
        %2298 = vmatmul.mubr.bf16.gmra.mrb[0].mxu0 %v2260
        %v2299 = vpop.f32.mrb[0].mxu0
        %v2300 = vadd.f32 0.0, %v2299
        %v2301 = vpop.f32.mrb[0].mxu0
        %v2302 = vpop.f32.mrb[0].mxu0
        %v2303 = vpop.f32.mrb[0].mxu0
        %2304 = vdwg.mxu0
        %v2306 = vsel %vm1844, %v1077, 0
        %v2309 = vsel %vm1844, %v1460, 0
        %2311 = vmatprep.subr.bf16.mxu0 0
        %2312 = vmatpush1.bf16.xpose.msra.mxu0 %v2309
        %2313 = vmatprep.subr.bf16.mxu0 0
        %2314 = vmatpush1.bf16.xpose.msra.mxu0 0
        %2315 = vmatprep.subr.bf16.mxu0 0
        %2316 = vmatpush1.bf16.xpose.msra.mxu0 0
        %2317 = vmatprep.subr.bf16.mxu0 0
        %2318 = vmatpush1.bf16.xpose.msra.mxu0 0
        %2319 = vmatprep.subr.bf16.mxu0 0
        %2320 = vmatpush1.bf16.xpose.msra.mxu0 0
        %2321 = vmatprep.subr.bf16.mxu0 0
        %2322 = vmatpush1.bf16.xpose.msra.mxu0 0
        %2323 = vmatprep.subr.bf16.mxu0 0
        %2324 = vmatpush1.bf16.xpose.msra.mxu0 0
        %2325 = vmatprep.subr.bf16.mxu0 0
        %2326 = vmatpush1.bf16.xpose.msra.mxu0 0
        %2327 = vmatprep.subr.bf16.mxu0 0
        %2328 = vmatpush1.bf16.xpose.msra.mxu0 0
        %2329 = vmatprep.subr.bf16.mxu0 0
        %2330 = vmatpush1.bf16.xpose.msra.mxu0 0
        %2331 = vmatprep.subr.bf16.mxu0 0
        %2332 = vmatpush1.bf16.xpose.msra.mxu0 0
        %2333 = vmatprep.subr.bf16.mxu0 0
        %2334 = vmatpush1.bf16.xpose.msra.mxu0 0
        %2335 = vmatprep.subr.bf16.mxu0 0
        %2336 = vmatpush1.bf16.xpose.msra.mxu0 0
        %2337 = vmatprep.subr.bf16.mxu0 0
        %2338 = vmatpush1.bf16.xpose.msra.mxu0 0
        %2339 = vmatprep.subr.bf16.mxu0 0
        %2340 = vmatpush1.bf16.xpose.msra.mxu0 0
        %2341 = vmatprep.subr.bf16.mxu0 0
        %2342 = vmatpush1.bf16.xpose.msra.mxu0 0
        %2343 = vmatprep.mubr.bf16.mxu0 0
        %2344 = vmatmul.mubr.bf16.gmra.mrb[0].mxu0 %v2306
        %v2345 = vpop.f32.mrb[0].mxu0
        %v2346 = vadd.f32 0.0, %v2345
        %v2347 = vpop.f32.mrb[0].mxu0
        %v2348 = vpop.f32.mrb[0].mxu0
        %v2349 = vpop.f32.mrb[0].mxu0
        %2350 = vdwg.mxu0
        %v2352 = vsel %vm1844, %v1080, 0
        %v2355 = vsel %vm1844, %v1463, 0
        %2357 = vmatprep.subr.bf16.mxu0 0
        %2358 = vmatpush1.bf16.xpose.msra.mxu0 %v2355
        %2359 = vmatprep.subr.bf16.mxu0 0
        %2360 = vmatpush1.bf16.xpose.msra.mxu0 0
        %2361 = vmatprep.subr.bf16.mxu0 0
        %2362 = vmatpush1.bf16.xpose.msra.mxu0 0
        %2363 = vmatprep.subr.bf16.mxu0 0
        %2364 = vmatpush1.bf16.xpose.msra.mxu0 0
        %2365 = vmatprep.subr.bf16.mxu0 0
        %2366 = vmatpush1.bf16.xpose.msra.mxu0 0
        %2367 = vmatprep.subr.bf16.mxu0 0
        %2368 = vmatpush1.bf16.xpose.msra.mxu0 0
        %2369 = vmatprep.subr.bf16.mxu0 0
        %2370 = vmatpush1.bf16.xpose.msra.mxu0 0
        %2371 = vmatprep.subr.bf16.mxu0 0
        %2372 = vmatpush1.bf16.xpose.msra.mxu0 0
        %2373 = vmatprep.subr.bf16.mxu0 0
        %2374 = vmatpush1.bf16.xpose.msra.mxu0 0
        %2375 = vmatprep.subr.bf16.mxu0 0
        %2376 = vmatpush1.bf16.xpose.msra.mxu0 0
        %2377 = vmatprep.subr.bf16.mxu0 0
        %2378 = vmatpush1.bf16.xpose.msra.mxu0 0
        %2379 = vmatprep.subr.bf16.mxu0 0
        %2380 = vmatpush1.bf16.xpose.msra.mxu0 0
        %2381 = vmatprep.subr.bf16.mxu0 0
        %2382 = vmatpush1.bf16.xpose.msra.mxu0 0
        %2383 = vmatprep.subr.bf16.mxu0 0
        %2384 = vmatpush1.bf16.xpose.msra.mxu0 0
        %2385 = vmatprep.subr.bf16.mxu0 0
        %2386 = vmatpush1.bf16.xpose.msra.mxu0 0
        %2387 = vmatprep.subr.bf16.mxu0 0
        %2388 = vmatpush1.bf16.xpose.msra.mxu0 0
        %2389 = vmatprep.mubr.bf16.mxu0 0
        %2390 = vmatmul.mubr.bf16.gmra.mrb[0].mxu0 %v2352
        %v2391 = vpop.f32.mrb[0].mxu0
        %v2392 = vadd.f32 0.0, %v2391
        %v2393 = vpop.f32.mrb[0].mxu0
        %v2394 = vpop.f32.mrb[0].mxu0
        %v2395 = vpop.f32.mrb[0].mxu0
        %2396 = vdwg.mxu0
        %v2398 = vsel %vm1844, %v1083, 0
        %v2401 = vsel %vm1844, %v1466, 0
        %2403 = vmatprep.subr.bf16.mxu0 0
        %2404 = vmatpush1.bf16.xpose.msra.mxu0 %v2401
        %2405 = vmatprep.subr.bf16.mxu0 0
        %2406 = vmatpush1.bf16.xpose.msra.mxu0 0
        %2407 = vmatprep.subr.bf16.mxu0 0
        %2408 = vmatpush1.bf16.xpose.msra.mxu0 0
        %2409 = vmatprep.subr.bf16.mxu0 0
        %2410 = vmatpush1.bf16.xpose.msra.mxu0 0
        %2411 = vmatprep.subr.bf16.mxu0 0
        %2412 = vmatpush1.bf16.xpose.msra.mxu0 0
        %2413 = vmatprep.subr.bf16.mxu0 0
        %2414 = vmatpush1.bf16.xpose.msra.mxu0 0
        %2415 = vmatprep.subr.bf16.mxu0 0
        %2416 = vmatpush1.bf16.xpose.msra.mxu0 0
        %2417 = vmatprep.subr.bf16.mxu0 0
        %2418 = vmatpush1.bf16.xpose.msra.mxu0 0
        %2419 = vmatprep.subr.bf16.mxu0 0
        %2420 = vmatpush1.bf16.xpose.msra.mxu0 0
        %2421 = vmatprep.subr.bf16.mxu0 0
        %2422 = vmatpush1.bf16.xpose.msra.mxu0 0
        %2423 = vmatprep.subr.bf16.mxu0 0
        %2424 = vmatpush1.bf16.xpose.msra.mxu0 0
        %2425 = vmatprep.subr.bf16.mxu0 0
        %2426 = vmatpush1.bf16.xpose.msra.mxu0 0
        %2427 = vmatprep.subr.bf16.mxu0 0
        %2428 = vmatpush1.bf16.xpose.msra.mxu0 0
        %2429 = vmatprep.subr.bf16.mxu0 0
        %2430 = vmatpush1.bf16.xpose.msra.mxu0 0
        %2431 = vmatprep.subr.bf16.mxu0 0
        %2432 = vmatpush1.bf16.xpose.msra.mxu0 0
        %2433 = vmatprep.subr.bf16.mxu0 0
        %2434 = vmatpush1.bf16.xpose.msra.mxu0 0
        %2435 = vmatprep.mubr.bf16.mxu0 0
        %2436 = vmatmul.mubr.bf16.gmra.mrb[0].mxu0 %v2398
        %v2437 = vpop.f32.mrb[0].mxu0
        %v2438 = vadd.f32 0.0, %v2437
        %v2439 = vpop.f32.mrb[0].mxu0
        %v2440 = vpop.f32.mrb[0].mxu0
        %v2441 = vpop.f32.mrb[0].mxu0
        %2442 = vdwg.mxu0
        %v2444 = vsel %vm1844, %v1086, 0
        %v2447 = vsel %vm1844, %v1469, 0
        %2449 = vmatprep.subr.bf16.mxu0 0
        %2450 = vmatpush1.bf16.xpose.msra.mxu0 %v2447
        %2451 = vmatprep.subr.bf16.mxu0 0
        %2452 = vmatpush1.bf16.xpose.msra.mxu0 0
        %2453 = vmatprep.subr.bf16.mxu0 0
        %2454 = vmatpush1.bf16.xpose.msra.mxu0 0
        %2455 = vmatprep.subr.bf16.mxu0 0
        %2456 = vmatpush1.bf16.xpose.msra.mxu0 0
        %2457 = vmatprep.subr.bf16.mxu0 0
        %2458 = vmatpush1.bf16.xpose.msra.mxu0 0
        %2459 = vmatprep.subr.bf16.mxu0 0
        %2460 = vmatpush1.bf16.xpose.msra.mxu0 0
        %2461 = vmatprep.subr.bf16.mxu0 0
        %2462 = vmatpush1.bf16.xpose.msra.mxu0 0
        %2463 = vmatprep.subr.bf16.mxu0 0
        %2464 = vmatpush1.bf16.xpose.msra.mxu0 0
        %2465 = vmatprep.subr.bf16.mxu0 0
        %2466 = vmatpush1.bf16.xpose.msra.mxu0 0
        %2467 = vmatprep.subr.bf16.mxu0 0
        %2468 = vmatpush1.bf16.xpose.msra.mxu0 0
        %2469 = vmatprep.subr.bf16.mxu0 0
        %2470 = vmatpush1.bf16.xpose.msra.mxu0 0
        %2471 = vmatprep.subr.bf16.mxu0 0
        %2472 = vmatpush1.bf16.xpose.msra.mxu0 0
        %2473 = vmatprep.subr.bf16.mxu0 0
        %2474 = vmatpush1.bf16.xpose.msra.mxu0 0
        %2475 = vmatprep.subr.bf16.mxu0 0
        %2476 = vmatpush1.bf16.xpose.msra.mxu0 0
        %2477 = vmatprep.subr.bf16.mxu0 0
        %2478 = vmatpush1.bf16.xpose.msra.mxu0 0
        %2479 = vmatprep.subr.bf16.mxu0 0
        %2480 = vmatpush1.bf16.xpose.msra.mxu0 0
        %2481 = vmatprep.mubr.bf16.mxu0 0
        %2482 = vmatmul.mubr.bf16.gmra.mrb[0].mxu0 %v2444
        %v2483 = vpop.f32.mrb[0].mxu0
        %v2484 = vadd.f32 0.0, %v2483
        %v2485 = vpop.f32.mrb[0].mxu0
        %v2486 = vpop.f32.mrb[0].mxu0
        %v2487 = vpop.f32.mrb[0].mxu0
        %2488 = vdwg.mxu0
        %v2490 = vsel %vm1844, %v1089, 0
        %v2493 = vsel %vm1844, %v1472, 0
        %2495 = vmatprep.subr.bf16.mxu0 0
        %2496 = vmatpush1.bf16.xpose.msra.mxu0 %v2493
        %2497 = vmatprep.subr.bf16.mxu0 0
        %2498 = vmatpush1.bf16.xpose.msra.mxu0 0
        %2499 = vmatprep.subr.bf16.mxu0 0
        %2500 = vmatpush1.bf16.xpose.msra.mxu0 0
        %2501 = vmatprep.subr.bf16.mxu0 0
        %2502 = vmatpush1.bf16.xpose.msra.mxu0 0
        %2503 = vmatprep.subr.bf16.mxu0 0
        %2504 = vmatpush1.bf16.xpose.msra.mxu0 0
        %2505 = vmatprep.subr.bf16.mxu0 0
        %2506 = vmatpush1.bf16.xpose.msra.mxu0 0
        %2507 = vmatprep.subr.bf16.mxu0 0
        %2508 = vmatpush1.bf16.xpose.msra.mxu0 0
        %2509 = vmatprep.subr.bf16.mxu0 0
        %2510 = vmatpush1.bf16.xpose.msra.mxu0 0
        %2511 = vmatprep.subr.bf16.mxu0 0
        %2512 = vmatpush1.bf16.xpose.msra.mxu0 0
        %2513 = vmatprep.subr.bf16.mxu0 0
        %2514 = vmatpush1.bf16.xpose.msra.mxu0 0
        %2515 = vmatprep.subr.bf16.mxu0 0
        %2516 = vmatpush1.bf16.xpose.msra.mxu0 0
        %2517 = vmatprep.subr.bf16.mxu0 0
        %2518 = vmatpush1.bf16.xpose.msra.mxu0 0
        %2519 = vmatprep.subr.bf16.mxu0 0
        %2520 = vmatpush1.bf16.xpose.msra.mxu0 0
        %2521 = vmatprep.subr.bf16.mxu0 0
        %2522 = vmatpush1.bf16.xpose.msra.mxu0 0
        %2523 = vmatprep.subr.bf16.mxu0 0
        %2524 = vmatpush1.bf16.xpose.msra.mxu0 0
        %2525 = vmatprep.subr.bf16.mxu0 0
        %2526 = vmatpush1.bf16.xpose.msra.mxu0 0
        %2527 = vmatprep.mubr.bf16.mxu0 0
        %2528 = vmatmul.mubr.bf16.gmra.mrb[0].mxu0 %v2490
        %v2529 = vpop.f32.mrb[0].mxu0
        %v2530 = vadd.f32 0.0, %v2529
        %v2531 = vpop.f32.mrb[0].mxu0
        %v2532 = vpop.f32.mrb[0].mxu0
        %v2533 = vpop.f32.mrb[0].mxu0
        %2534 = vdwg.mxu0
        %v2536 = vsel %vm1844, %v1092, 0
        %v2539 = vsel %vm1844, %v1475, 0
        %2541 = vmatprep.subr.bf16.mxu0 0
        %2542 = vmatpush1.bf16.xpose.msra.mxu0 %v2539
        %2543 = vmatprep.subr.bf16.mxu0 0
        %2544 = vmatpush1.bf16.xpose.msra.mxu0 0
        %2545 = vmatprep.subr.bf16.mxu0 0
        %2546 = vmatpush1.bf16.xpose.msra.mxu0 0
        %2547 = vmatprep.subr.bf16.mxu0 0
        %2548 = vmatpush1.bf16.xpose.msra.mxu0 0
        %2549 = vmatprep.subr.bf16.mxu0 0
        %2550 = vmatpush1.bf16.xpose.msra.mxu0 0
        %2551 = vmatprep.subr.bf16.mxu0 0
        %2552 = vmatpush1.bf16.xpose.msra.mxu0 0
        %2553 = vmatprep.subr.bf16.mxu0 0
        %2554 = vmatpush1.bf16.xpose.msra.mxu0 0
        %2555 = vmatprep.subr.bf16.mxu0 0
        %2556 = vmatpush1.bf16.xpose.msra.mxu0 0
        %2557 = vmatprep.subr.bf16.mxu0 0
        %2558 = vmatpush1.bf16.xpose.msra.mxu0 0
        %2559 = vmatprep.subr.bf16.mxu0 0
        %2560 = vmatpush1.bf16.xpose.msra.mxu0 0
        %2561 = vmatprep.subr.bf16.mxu0 0
        %2562 = vmatpush1.bf16.xpose.msra.mxu0 0
        %2563 = vmatprep.subr.bf16.mxu0 0
        %2564 = vmatpush1.bf16.xpose.msra.mxu0 0
        %2565 = vmatprep.subr.bf16.mxu0 0
        %2566 = vmatpush1.bf16.xpose.msra.mxu0 0
        %2567 = vmatprep.subr.bf16.mxu0 0
        %2568 = vmatpush1.bf16.xpose.msra.mxu0 0
        %2569 = vmatprep.subr.bf16.mxu0 0
        %2570 = vmatpush1.bf16.xpose.msra.mxu0 0
        %2571 = vmatprep.subr.bf16.mxu0 0
        %2572 = vmatpush1.bf16.xpose.msra.mxu0 0
        %2573 = vmatprep.mubr.bf16.mxu0 0
        %2574 = vmatmul.mubr.bf16.gmra.mrb[0].mxu0 %v2536
        %v2575 = vpop.f32.mrb[0].mxu0
        %v2576 = vadd.f32 0.0, %v2575
        %v2577 = vpop.f32.mrb[0].mxu0
        %v2578 = vpop.f32.mrb[0].mxu0
        %v2579 = vpop.f32.mrb[0].mxu0
        %2580 = vdwg.mxu0
        %vm2581 = vcmask 64512
        %v2582 = vsel %vm2581, %v1886, -inf
        %2583 = vmax.xlane.f32.xlu0 %v2582
        %v2584 = vpop.xlane.xlu0 %2583
        %v2585 = vsel %vm2581, %v1932, -inf
        %2586 = vmax.xlane.f32.xlu0 %v2585
        %v2587 = vpop.xlane.xlu0 %2586
        %v2588 = vsel %vm2581, %v1978, -inf
        %2589 = vmax.xlane.f32.xlu0 %v2588
        %v2590 = vpop.xlane.xlu0 %2589
        %v2591 = vsel %vm2581, %v2024, -inf
        %2592 = vmax.xlane.f32.xlu0 %v2591
        %v2593 = vpop.xlane.xlu0 %2592
        %v2594 = vsel %vm2581, %v2070, -inf
        %2595 = vmax.xlane.f32.xlu0 %v2594
        %v2596 = vpop.xlane.xlu0 %2595
        %v2597 = vsel %vm2581, %v2116, -inf
        %2598 = vmax.xlane.f32.xlu0 %v2597
        %v2599 = vpop.xlane.xlu0 %2598
        %v2600 = vsel %vm2581, %v2162, -inf
        %2601 = vmax.xlane.f32.xlu0 %v2600
        %v2602 = vpop.xlane.xlu0 %2601
        %v2603 = vsel %vm2581, %v2208, -inf
        %2604 = vmax.xlane.f32.xlu0 %v2603
        %v2605 = vpop.xlane.xlu0 %2604
        %v2606 = vsel %vm2581, %v2254, -inf
        %2607 = vmax.xlane.f32.xlu0 %v2606
        %v2608 = vpop.xlane.xlu0 %2607
        %v2609 = vsel %vm2581, %v2300, -inf
        %2610 = vmax.xlane.f32.xlu0 %v2609
        %v2611 = vpop.xlane.xlu0 %2610
        %v2612 = vsel %vm2581, %v2346, -inf
        %2613 = vmax.xlane.f32.xlu0 %v2612
        %v2614 = vpop.xlane.xlu0 %2613
        %v2615 = vsel %vm2581, %v2392, -inf
        %2616 = vmax.xlane.f32.xlu0 %v2615
        %v2617 = vpop.xlane.xlu0 %2616
        %v2618 = vsel %vm2581, %v2438, -inf
        %2619 = vmax.xlane.f32.xlu0 %v2618
        %v2620 = vpop.xlane.xlu0 %2619
        %v2621 = vsel %vm2581, %v2484, -inf
        %2622 = vmax.xlane.f32.xlu0 %v2621
        %v2623 = vpop.xlane.xlu0 %2622
        %v2624 = vsel %vm2581, %v2530, -inf
        %2625 = vmax.xlane.f32.xlu0 %v2624
        %v2626 = vpop.xlane.xlu0 %2625
        %v2627 = vsel %vm2581, %v2576, -inf
        %2628 = vmax.xlane.f32.xlu0 %v2627
        %v2629 = vpop.xlane.xlu0 %2628
        %v2630 = vsub.f32 -inf, %v2584
        %v2631 = vsub.f32 -inf, %v2587
        %v2632 = vsub.f32 -inf, %v2590
        %v2633 = vsub.f32 -inf, %v2593
        %v2634 = vsub.f32 -inf, %v2596
        %v2635 = vsub.f32 -inf, %v2599
        %v2636 = vsub.f32 -inf, %v2602
        %v2637 = vsub.f32 -inf, %v2605
        %v2638 = vsub.f32 -inf, %v2608
        %v2639 = vsub.f32 -inf, %v2611
        %v2640 = vsub.f32 -inf, %v2614
        %v2641 = vsub.f32 -inf, %v2617
        %v2642 = vsub.f32 -inf, %v2620
        %v2643 = vsub.f32 -inf, %v2623
        %v2644 = vsub.f32 -inf, %v2626
        %v2645 = vsub.f32 -inf, %v2629
        %v2646 = vmul.f32 %v2630, 1.442695
        %v2647 = vpow.pop %v2646
        %v2648 = vmul.f32 %v2631, 1.442695
        %v2649 = vpow.pop %v2648
        %v2650 = vmul.f32 %v2632, 1.442695
        %v2651 = vpow.pop %v2650
        %v2652 = vmul.f32 %v2633, 1.442695
        %v2653 = vpow.pop %v2652
        %v2654 = vmul.f32 %v2634, 1.442695
        %v2655 = vpow.pop %v2654
        %v2656 = vmul.f32 %v2635, 1.442695
        %v2657 = vpow.pop %v2656
        %v2658 = vmul.f32 %v2636, 1.442695
        %v2659 = vpow.pop %v2658
        %v2660 = vmul.f32 %v2637, 1.442695
        %v2661 = vpow.pop %v2660
        %v2662 = vmul.f32 %v2638, 1.442695
        %v2663 = vpow.pop %v2662
        %v2664 = vmul.f32 %v2639, 1.442695
        %v2665 = vpow.pop %v2664
        %v2666 = vmul.f32 %v2640, 1.442695
        %v2667 = vpow.pop %v2666
        %v2668 = vmul.f32 %v2641, 1.442695
        %v2669 = vpow.pop %v2668
        %v2670 = vmul.f32 %v2642, 1.442695
        %v2671 = vpow.pop %v2670
        %v2672 = vmul.f32 %v2643, 1.442695
        %v2673 = vpow.pop %v2672
        %v2674 = vmul.f32 %v2644, 1.442695
        %v2675 = vpow.pop %v2674
        %v2676 = vmul.f32 %v2645, 1.442695
        %v2677 = vpow.pop %v2676
        %v2678 = vsub.f32 %v1886, %v2584
        %v2679 = vsub.f32 %v1932, %v2587
        %v2680 = vsub.f32 %v1978, %v2590
        %v2681 = vsub.f32 %v2024, %v2593
        %v2682 = vsub.f32 %v2070, %v2596
        %v2683 = vsub.f32 %v2116, %v2599
        %v2684 = vsub.f32 %v2162, %v2602
        %v2685 = vsub.f32 %v2208, %v2605
        %v2686 = vsub.f32 %v2254, %v2608
        %v2687 = vsub.f32 %v2300, %v2611
        %v2688 = vsub.f32 %v2346, %v2614
        %v2689 = vsub.f32 %v2392, %v2617
        %v2690 = vsub.f32 %v2438, %v2620
        %v2691 = vsub.f32 %v2484, %v2623
        %v2692 = vsub.f32 %v2530, %v2626
        %v2693 = vsub.f32 %v2576, %v2629
        %v2694 = vmul.f32 %v2678, 1.442695
        %v2695 = vpow.pop %v2694
        %v2696 = vmul.f32 %v2679, 1.442695
        %v2697 = vpow.pop %v2696
        %v2698 = vmul.f32 %v2680, 1.442695
        %v2699 = vpow.pop %v2698
        %v2700 = vmul.f32 %v2681, 1.442695
        %v2701 = vpow.pop %v2700
        %v2702 = vmul.f32 %v2682, 1.442695
        %v2703 = vpow.pop %v2702
        %v2704 = vmul.f32 %v2683, 1.442695
        %v2705 = vpow.pop %v2704
        %v2706 = vmul.f32 %v2684, 1.442695
        %v2707 = vpow.pop %v2706
        %v2708 = vmul.f32 %v2685, 1.442695
        %v2709 = vpow.pop %v2708
        %v2710 = vmul.f32 %v2686, 1.442695
        %v2711 = vpow.pop %v2710
        %v2712 = vmul.f32 %v2687, 1.442695
        %v2713 = vpow.pop %v2712
        %v2714 = vmul.f32 %v2688, 1.442695
        %v2715 = vpow.pop %v2714
        %v2716 = vmul.f32 %v2689, 1.442695
        %v2717 = vpow.pop %v2716
        %v2718 = vmul.f32 %v2690, 1.442695
        %v2719 = vpow.pop %v2718
        %v2720 = vmul.f32 %v2691, 1.442695
        %v2721 = vpow.pop %v2720
        %v2722 = vmul.f32 %v2692, 1.442695
        %v2723 = vpow.pop %v2722
        %v2724 = vmul.f32 %v2693, 1.442695
        %v2725 = vpow.pop %v2724
        %v2726 = vmul.f32 %v2647, 0.0
        %v2727 = vmul.f32 %v2649, 0.0
        %v2728 = vmul.f32 %v2651, 0.0
        %v2729 = vmul.f32 %v2653, 0.0
        %v2730 = vmul.f32 %v2655, 0.0
        %v2731 = vmul.f32 %v2657, 0.0
        %v2732 = vmul.f32 %v2659, 0.0
        %v2733 = vmul.f32 %v2661, 0.0
        %v2734 = vmul.f32 %v2663, 0.0
        %v2735 = vmul.f32 %v2665, 0.0
        %v2736 = vmul.f32 %v2667, 0.0
        %v2737 = vmul.f32 %v2669, 0.0
        %v2738 = vmul.f32 %v2671, 0.0
        %v2739 = vmul.f32 %v2673, 0.0
        %v2740 = vmul.f32 %v2675, 0.0
        %v2741 = vmul.f32 %v2677, 0.0
        %v2742 = vsel %vm2581, %v2695, 0.0
        %2743 = vadd.xlane.f32.xlu0 %v2742
        %v2744 = vpop.xlane.xlu0 %2743
        %v2745 = vsel %vm2581, %v2697, 0.0
        %2746 = vadd.xlane.f32.xlu0 %v2745
        %v2747 = vpop.xlane.xlu0 %2746
        %v2748 = vsel %vm2581, %v2699, 0.0
        %2749 = vadd.xlane.f32.xlu0 %v2748
        %v2750 = vpop.xlane.xlu0 %2749
        %v2751 = vsel %vm2581, %v2701, 0.0
        %2752 = vadd.xlane.f32.xlu0 %v2751
        %v2753 = vpop.xlane.xlu0 %2752
        %v2754 = vsel %vm2581, %v2703, 0.0
        %2755 = vadd.xlane.f32.xlu0 %v2754
        %v2756 = vpop.xlane.xlu0 %2755
        %v2757 = vsel %vm2581, %v2705, 0.0
        %2758 = vadd.xlane.f32.xlu0 %v2757
        %v2759 = vpop.xlane.xlu0 %2758
        %v2760 = vsel %vm2581, %v2707, 0.0
        %2761 = vadd.xlane.f32.xlu0 %v2760
        %v2762 = vpop.xlane.xlu0 %2761
        %v2763 = vsel %vm2581, %v2709, 0.0
        %2764 = vadd.xlane.f32.xlu0 %v2763
        %v2765 = vpop.xlane.xlu0 %2764
        %v2766 = vsel %vm2581, %v2711, 0.0
        %2767 = vadd.xlane.f32.xlu0 %v2766
        %v2768 = vpop.xlane.xlu0 %2767
        %v2769 = vsel %vm2581, %v2713, 0.0
        %2770 = vadd.xlane.f32.xlu0 %v2769
        %v2771 = vpop.xlane.xlu0 %2770
        %v2772 = vsel %vm2581, %v2715, 0.0
        %2773 = vadd.xlane.f32.xlu0 %v2772
        %v2774 = vpop.xlane.xlu0 %2773
        %v2775 = vsel %vm2581, %v2717, 0.0
        %2776 = vadd.xlane.f32.xlu0 %v2775
        %v2777 = vpop.xlane.xlu0 %2776
        %v2778 = vsel %vm2581, %v2719, 0.0
        %2779 = vadd.xlane.f32.xlu0 %v2778
        %v2780 = vpop.xlane.xlu0 %2779
        %v2781 = vsel %vm2581, %v2721, 0.0
        %2782 = vadd.xlane.f32.xlu0 %v2781
        %v2783 = vpop.xlane.xlu0 %2782
        %v2784 = vsel %vm2581, %v2723, 0.0
        %2785 = vadd.xlane.f32.xlu0 %v2784
        %v2786 = vpop.xlane.xlu0 %2785
        %v2787 = vsel %vm2581, %v2725, 0.0
        %2788 = vadd.xlane.f32.xlu0 %v2787
        %v2789 = vpop.xlane.xlu0 %2788
        %v2790 = vadd.f32 %v2726, %v2744
        %v2791 = vadd.f32 %v2727, %v2747
        %v2792 = vadd.f32 %v2728, %v2750
        %v2793 = vadd.f32 %v2729, %v2753
        %v2794 = vadd.f32 %v2730, %v2756
        %v2795 = vadd.f32 %v2731, %v2759
        %v2796 = vadd.f32 %v2732, %v2762
        %v2797 = vadd.f32 %v2733, %v2765
        %v2798 = vadd.f32 %v2734, %v2768
        %v2799 = vadd.f32 %v2735, %v2771
        %v2800 = vadd.f32 %v2736, %v2774
        %v2801 = vadd.f32 %v2737, %v2777
        %v2802 = vadd.f32 %v2738, %v2780
        %v2803 = vadd.f32 %v2739, %v2783
        %v2804 = vadd.f32 %v2740, %v2786
        %v2805 = vadd.f32 %v2741, %v2789
        %v2806 = vpack.c.bf16 %v2695, %v2695
        %v2807 = vpack.c.bf16 %v2697, %v2697
        %v2808 = vpack.c.bf16 %v2699, %v2699
        %v2809 = vpack.c.bf16 %v2701, %v2701
        %v2810 = vpack.c.bf16 %v2703, %v2703
        %v2811 = vpack.c.bf16 %v2705, %v2705
        %v2812 = vpack.c.bf16 %v2707, %v2707
        %v2813 = vpack.c.bf16 %v2709, %v2709
        %v2814 = vpack.c.bf16 %v2711, %v2711
        %v2815 = vpack.c.bf16 %v2713, %v2713
        %v2816 = vpack.c.bf16 %v2715, %v2715
        %v2817 = vpack.c.bf16 %v2717, %v2717
        %v2818 = vpack.c.bf16 %v2719, %v2719
        %v2819 = vpack.c.bf16 %v2721, %v2721
        %v2820 = vpack.c.bf16 %v2723, %v2723
        %v2821 = vpack.c.bf16 %v2725, %v2725
        %v2823 = vsel %vm2581, %v2806, 0
        %vm2825 = vcmask 1043456
        %v2827 = vsel %vm2825, %v1798, 0
        %2829 = vmatprep.subr.bf16.mxu0 0
        %2830 = vmatpush1.bf16.msra.mxu0 %v2827
        %2831 = vmatprep.subr.bf16.mxu0 0
        %2832 = vmatpush1.bf16.msra.mxu0 0
        %2833 = vmatprep.subr.bf16.mxu0 0
        %2834 = vmatpush1.bf16.msra.mxu0 0
        %2835 = vmatprep.subr.bf16.mxu0 0
        %2836 = vmatpush1.bf16.msra.mxu0 0
        %2837 = vmatprep.subr.bf16.mxu0 0
        %2838 = vmatpush1.bf16.msra.mxu0 0
        %2839 = vmatprep.subr.bf16.mxu0 0
        %2840 = vmatpush1.bf16.msra.mxu0 0
        %2841 = vmatprep.subr.bf16.mxu0 0
        %2842 = vmatpush1.bf16.msra.mxu0 0
        %2843 = vmatprep.subr.bf16.mxu0 0
        %2844 = vmatpush1.bf16.msra.mxu0 0
        %2845 = vmatprep.subr.bf16.mxu0 0
        %2846 = vmatpush1.bf16.msra.mxu0 0
        %2847 = vmatprep.subr.bf16.mxu0 0
        %2848 = vmatpush1.bf16.msra.mxu0 0
        %2849 = vmatprep.subr.bf16.mxu0 0
        %2850 = vmatpush1.bf16.msra.mxu0 0
        %2851 = vmatprep.subr.bf16.mxu0 0
        %2852 = vmatpush1.bf16.msra.mxu0 0
        %2853 = vmatprep.subr.bf16.mxu0 0
        %2854 = vmatpush1.bf16.msra.mxu0 0
        %2855 = vmatprep.subr.bf16.mxu0 0
        %2856 = vmatpush1.bf16.msra.mxu0 0
        %2857 = vmatprep.subr.bf16.mxu0 0
        %2858 = vmatpush1.bf16.msra.mxu0 0
        %2859 = vmatprep.subr.bf16.mxu0 0
        %2860 = vmatpush1.bf16.msra.mxu0 0
        %2861 = vmatprep.mubr.bf16.mxu0 0
        %2862 = vmatmul.mubr.bf16.gmra.mrb[0].mxu0 %v2823
        %v2863 = vpop.f32.mrb[0].mxu0
        %v2864 = vadd.f32 0.0, %v2863
        %v2865 = vpop.f32.mrb[0].mxu0
        %v2866 = vpop.f32.mrb[0].mxu0
        %v2867 = vpop.f32.mrb[0].mxu0
        %2868 = vdwg.mxu0
        %v2870 = vsel %vm2581, %v2807, 0
        %v2873 = vsel %vm2825, %v1801, 0
        %2875 = vmatprep.subr.bf16.mxu0 0
        %2876 = vmatpush1.bf16.msra.mxu0 %v2873
        %2877 = vmatprep.subr.bf16.mxu0 0
        %2878 = vmatpush1.bf16.msra.mxu0 0
        %2879 = vmatprep.subr.bf16.mxu0 0
        %2880 = vmatpush1.bf16.msra.mxu0 0
        %2881 = vmatprep.subr.bf16.mxu0 0
        %2882 = vmatpush1.bf16.msra.mxu0 0
        %2883 = vmatprep.subr.bf16.mxu0 0
        %2884 = vmatpush1.bf16.msra.mxu0 0
        %2885 = vmatprep.subr.bf16.mxu0 0
        %2886 = vmatpush1.bf16.msra.mxu0 0
        %2887 = vmatprep.subr.bf16.mxu0 0
        %2888 = vmatpush1.bf16.msra.mxu0 0
        %2889 = vmatprep.subr.bf16.mxu0 0
        %2890 = vmatpush1.bf16.msra.mxu0 0
        %2891 = vmatprep.subr.bf16.mxu0 0
        %2892 = vmatpush1.bf16.msra.mxu0 0
        %2893 = vmatprep.subr.bf16.mxu0 0
        %2894 = vmatpush1.bf16.msra.mxu0 0
        %2895 = vmatprep.subr.bf16.mxu0 0
        %2896 = vmatpush1.bf16.msra.mxu0 0
        %2897 = vmatprep.subr.bf16.mxu0 0
        %2898 = vmatpush1.bf16.msra.mxu0 0
        %2899 = vmatprep.subr.bf16.mxu0 0
        %2900 = vmatpush1.bf16.msra.mxu0 0
        %2901 = vmatprep.subr.bf16.mxu0 0
        %2902 = vmatpush1.bf16.msra.mxu0 0
        %2903 = vmatprep.subr.bf16.mxu0 0
        %2904 = vmatpush1.bf16.msra.mxu0 0
        %2905 = vmatprep.subr.bf16.mxu0 0
        %2906 = vmatpush1.bf16.msra.mxu0 0
        %2907 = vmatprep.mubr.bf16.mxu0 0
        %2908 = vmatmul.mubr.bf16.gmra.mrb[0].mxu0 %v2870
        %v2909 = vpop.f32.mrb[0].mxu0
        %v2910 = vadd.f32 0.0, %v2909
        %v2911 = vpop.f32.mrb[0].mxu0
        %v2912 = vpop.f32.mrb[0].mxu0
        %v2913 = vpop.f32.mrb[0].mxu0
        %2914 = vdwg.mxu0
        %v2916 = vsel %vm2581, %v2808, 0
        %v2919 = vsel %vm2825, %v1804, 0
        %2921 = vmatprep.subr.bf16.mxu0 0
        %2922 = vmatpush1.bf16.msra.mxu0 %v2919
        %2923 = vmatprep.subr.bf16.mxu0 0
        %2924 = vmatpush1.bf16.msra.mxu0 0
        %2925 = vmatprep.subr.bf16.mxu0 0
        %2926 = vmatpush1.bf16.msra.mxu0 0
        %2927 = vmatprep.subr.bf16.mxu0 0
        %2928 = vmatpush1.bf16.msra.mxu0 0
        %2929 = vmatprep.subr.bf16.mxu0 0
        %2930 = vmatpush1.bf16.msra.mxu0 0
        %2931 = vmatprep.subr.bf16.mxu0 0
        %2932 = vmatpush1.bf16.msra.mxu0 0
        %2933 = vmatprep.subr.bf16.mxu0 0
        %2934 = vmatpush1.bf16.msra.mxu0 0
        %2935 = vmatprep.subr.bf16.mxu0 0
        %2936 = vmatpush1.bf16.msra.mxu0 0
        %2937 = vmatprep.subr.bf16.mxu0 0
        %2938 = vmatpush1.bf16.msra.mxu0 0
        %2939 = vmatprep.subr.bf16.mxu0 0
        %2940 = vmatpush1.bf16.msra.mxu0 0
        %2941 = vmatprep.subr.bf16.mxu0 0
        %2942 = vmatpush1.bf16.msra.mxu0 0
        %2943 = vmatprep.subr.bf16.mxu0 0
        %2944 = vmatpush1.bf16.msra.mxu0 0
        %2945 = vmatprep.subr.bf16.mxu0 0
        %2946 = vmatpush1.bf16.msra.mxu0 0
        %2947 = vmatprep.subr.bf16.mxu0 0
        %2948 = vmatpush1.bf16.msra.mxu0 0
        %2949 = vmatprep.subr.bf16.mxu0 0
        %2950 = vmatpush1.bf16.msra.mxu0 0
        %2951 = vmatprep.subr.bf16.mxu0 0
        %2952 = vmatpush1.bf16.msra.mxu0 0
        %2953 = vmatprep.mubr.bf16.mxu0 0
        %2954 = vmatmul.mubr.bf16.gmra.mrb[0].mxu0 %v2916
        %v2955 = vpop.f32.mrb[0].mxu0
        %v2956 = vadd.f32 0.0, %v2955
        %v2957 = vpop.f32.mrb[0].mxu0
        %v2958 = vpop.f32.mrb[0].mxu0
        %v2959 = vpop.f32.mrb[0].mxu0
        %2960 = vdwg.mxu0
        %v2962 = vsel %vm2581, %v2809, 0
        %v2965 = vsel %vm2825, %v1807, 0
        %2967 = vmatprep.subr.bf16.mxu0 0
        %2968 = vmatpush1.bf16.msra.mxu0 %v2965
        %2969 = vmatprep.subr.bf16.mxu0 0
        %2970 = vmatpush1.bf16.msra.mxu0 0
        %2971 = vmatprep.subr.bf16.mxu0 0
        %2972 = vmatpush1.bf16.msra.mxu0 0
        %2973 = vmatprep.subr.bf16.mxu0 0
        %2974 = vmatpush1.bf16.msra.mxu0 0
        %2975 = vmatprep.subr.bf16.mxu0 0
        %2976 = vmatpush1.bf16.msra.mxu0 0
        %2977 = vmatprep.subr.bf16.mxu0 0
        %2978 = vmatpush1.bf16.msra.mxu0 0
        %2979 = vmatprep.subr.bf16.mxu0 0
        %2980 = vmatpush1.bf16.msra.mxu0 0
        %2981 = vmatprep.subr.bf16.mxu0 0
        %2982 = vmatpush1.bf16.msra.mxu0 0
        %2983 = vmatprep.subr.bf16.mxu0 0
        %2984 = vmatpush1.bf16.msra.mxu0 0
        %2985 = vmatprep.subr.bf16.mxu0 0
        %2986 = vmatpush1.bf16.msra.mxu0 0
        %2987 = vmatprep.subr.bf16.mxu0 0
        %2988 = vmatpush1.bf16.msra.mxu0 0
        %2989 = vmatprep.subr.bf16.mxu0 0
        %2990 = vmatpush1.bf16.msra.mxu0 0
        %2991 = vmatprep.subr.bf16.mxu0 0
        %2992 = vmatpush1.bf16.msra.mxu0 0
        %2993 = vmatprep.subr.bf16.mxu0 0
        %2994 = vmatpush1.bf16.msra.mxu0 0
        %2995 = vmatprep.subr.bf16.mxu0 0
        %2996 = vmatpush1.bf16.msra.mxu0 0
        %2997 = vmatprep.subr.bf16.mxu0 0
        %2998 = vmatpush1.bf16.msra.mxu0 0
        %2999 = vmatprep.mubr.bf16.mxu0 0
        %3000 = vmatmul.mubr.bf16.gmra.mrb[0].mxu0 %v2962
        %v3001 = vpop.f32.mrb[0].mxu0
        %v3002 = vadd.f32 0.0, %v3001
        %v3003 = vpop.f32.mrb[0].mxu0
        %v3004 = vpop.f32.mrb[0].mxu0
        %v3005 = vpop.f32.mrb[0].mxu0
        %3006 = vdwg.mxu0
        %v3008 = vsel %vm2581, %v2810, 0
        %v3011 = vsel %vm2825, %v1810, 0
        %3013 = vmatprep.subr.bf16.mxu0 0
        %3014 = vmatpush1.bf16.msra.mxu0 %v3011
        %3015 = vmatprep.subr.bf16.mxu0 0
        %3016 = vmatpush1.bf16.msra.mxu0 0
        %3017 = vmatprep.subr.bf16.mxu0 0
        %3018 = vmatpush1.bf16.msra.mxu0 0
        %3019 = vmatprep.subr.bf16.mxu0 0
        %3020 = vmatpush1.bf16.msra.mxu0 0
        %3021 = vmatprep.subr.bf16.mxu0 0
        %3022 = vmatpush1.bf16.msra.mxu0 0
        %3023 = vmatprep.subr.bf16.mxu0 0
        %3024 = vmatpush1.bf16.msra.mxu0 0
        %3025 = vmatprep.subr.bf16.mxu0 0
        %3026 = vmatpush1.bf16.msra.mxu0 0
        %3027 = vmatprep.subr.bf16.mxu0 0
        %3028 = vmatpush1.bf16.msra.mxu0 0
        %3029 = vmatprep.subr.bf16.mxu0 0
        %3030 = vmatpush1.bf16.msra.mxu0 0
        %3031 = vmatprep.subr.bf16.mxu0 0
        %3032 = vmatpush1.bf16.msra.mxu0 0
        %3033 = vmatprep.subr.bf16.mxu0 0
        %3034 = vmatpush1.bf16.msra.mxu0 0
        %3035 = vmatprep.subr.bf16.mxu0 0
        %3036 = vmatpush1.bf16.msra.mxu0 0
        %3037 = vmatprep.subr.bf16.mxu0 0
        %3038 = vmatpush1.bf16.msra.mxu0 0
        %3039 = vmatprep.subr.bf16.mxu0 0
        %3040 = vmatpush1.bf16.msra.mxu0 0
        %3041 = vmatprep.subr.bf16.mxu0 0
        %3042 = vmatpush1.bf16.msra.mxu0 0
        %3043 = vmatprep.subr.bf16.mxu0 0
        %3044 = vmatpush1.bf16.msra.mxu0 0
        %3045 = vmatprep.mubr.bf16.mxu0 0
        %3046 = vmatmul.mubr.bf16.gmra.mrb[0].mxu0 %v3008
        %v3047 = vpop.f32.mrb[0].mxu0
        %v3048 = vadd.f32 0.0, %v3047
        %v3049 = vpop.f32.mrb[0].mxu0
        %v3050 = vpop.f32.mrb[0].mxu0
        %v3051 = vpop.f32.mrb[0].mxu0
        %3052 = vdwg.mxu0
        %v3054 = vsel %vm2581, %v2811, 0
        %v3057 = vsel %vm2825, %v1813, 0
        %3059 = vmatprep.subr.bf16.mxu0 0
        %3060 = vmatpush1.bf16.msra.mxu0 %v3057
        %3061 = vmatprep.subr.bf16.mxu0 0
        %3062 = vmatpush1.bf16.msra.mxu0 0
        %3063 = vmatprep.subr.bf16.mxu0 0
        %3064 = vmatpush1.bf16.msra.mxu0 0
        %3065 = vmatprep.subr.bf16.mxu0 0
        %3066 = vmatpush1.bf16.msra.mxu0 0
        %3067 = vmatprep.subr.bf16.mxu0 0
        %3068 = vmatpush1.bf16.msra.mxu0 0
        %3069 = vmatprep.subr.bf16.mxu0 0
        %3070 = vmatpush1.bf16.msra.mxu0 0
        %3071 = vmatprep.subr.bf16.mxu0 0
        %3072 = vmatpush1.bf16.msra.mxu0 0
        %3073 = vmatprep.subr.bf16.mxu0 0
        %3074 = vmatpush1.bf16.msra.mxu0 0
        %3075 = vmatprep.subr.bf16.mxu0 0
        %3076 = vmatpush1.bf16.msra.mxu0 0
        %3077 = vmatprep.subr.bf16.mxu0 0
        %3078 = vmatpush1.bf16.msra.mxu0 0
        %3079 = vmatprep.subr.bf16.mxu0 0
        %3080 = vmatpush1.bf16.msra.mxu0 0
        %3081 = vmatprep.subr.bf16.mxu0 0
        %3082 = vmatpush1.bf16.msra.mxu0 0
        %3083 = vmatprep.subr.bf16.mxu0 0
        %3084 = vmatpush1.bf16.msra.mxu0 0
        %3085 = vmatprep.subr.bf16.mxu0 0
        %3086 = vmatpush1.bf16.msra.mxu0 0
        %3087 = vmatprep.subr.bf16.mxu0 0
        %3088 = vmatpush1.bf16.msra.mxu0 0
        %3089 = vmatprep.subr.bf16.mxu0 0
        %3090 = vmatpush1.bf16.msra.mxu0 0
        %3091 = vmatprep.mubr.bf16.mxu0 0
        %3092 = vmatmul.mubr.bf16.gmra.mrb[0].mxu0 %v3054
        %v3093 = vpop.f32.mrb[0].mxu0
        %v3094 = vadd.f32 0.0, %v3093
        %v3095 = vpop.f32.mrb[0].mxu0
        %v3096 = vpop.f32.mrb[0].mxu0
        %v3097 = vpop.f32.mrb[0].mxu0
        %3098 = vdwg.mxu0
        %v3100 = vsel %vm2581, %v2812, 0
        %v3103 = vsel %vm2825, %v1816, 0
        %3105 = vmatprep.subr.bf16.mxu0 0
        %3106 = vmatpush1.bf16.msra.mxu0 %v3103
        %3107 = vmatprep.subr.bf16.mxu0 0
        %3108 = vmatpush1.bf16.msra.mxu0 0
        %3109 = vmatprep.subr.bf16.mxu0 0
        %3110 = vmatpush1.bf16.msra.mxu0 0
        %3111 = vmatprep.subr.bf16.mxu0 0
        %3112 = vmatpush1.bf16.msra.mxu0 0
        %3113 = vmatprep.subr.bf16.mxu0 0
        %3114 = vmatpush1.bf16.msra.mxu0 0
        %3115 = vmatprep.subr.bf16.mxu0 0
        %3116 = vmatpush1.bf16.msra.mxu0 0
        %3117 = vmatprep.subr.bf16.mxu0 0
        %3118 = vmatpush1.bf16.msra.mxu0 0
        %3119 = vmatprep.subr.bf16.mxu0 0
        %3120 = vmatpush1.bf16.msra.mxu0 0
        %3121 = vmatprep.subr.bf16.mxu0 0
        %3122 = vmatpush1.bf16.msra.mxu0 0
        %3123 = vmatprep.subr.bf16.mxu0 0
        %3124 = vmatpush1.bf16.msra.mxu0 0
        %3125 = vmatprep.subr.bf16.mxu0 0
        %3126 = vmatpush1.bf16.msra.mxu0 0
        %3127 = vmatprep.subr.bf16.mxu0 0
        %3128 = vmatpush1.bf16.msra.mxu0 0
        %3129 = vmatprep.subr.bf16.mxu0 0
        %3130 = vmatpush1.bf16.msra.mxu0 0
        %3131 = vmatprep.subr.bf16.mxu0 0
        %3132 = vmatpush1.bf16.msra.mxu0 0
        %3133 = vmatprep.subr.bf16.mxu0 0
        %3134 = vmatpush1.bf16.msra.mxu0 0
        %3135 = vmatprep.subr.bf16.mxu0 0
        %3136 = vmatpush1.bf16.msra.mxu0 0
        %3137 = vmatprep.mubr.bf16.mxu0 0
        %3138 = vmatmul.mubr.bf16.gmra.mrb[0].mxu0 %v3100
        %v3139 = vpop.f32.mrb[0].mxu0
        %v3140 = vadd.f32 0.0, %v3139
        %v3141 = vpop.f32.mrb[0].mxu0
        %v3142 = vpop.f32.mrb[0].mxu0
        %v3143 = vpop.f32.mrb[0].mxu0
        %3144 = vdwg.mxu0
        %v3146 = vsel %vm2581, %v2813, 0
        %v3149 = vsel %vm2825, %v1819, 0
        %3151 = vmatprep.subr.bf16.mxu0 0
        %3152 = vmatpush1.bf16.msra.mxu0 %v3149
        %3153 = vmatprep.subr.bf16.mxu0 0
        %3154 = vmatpush1.bf16.msra.mxu0 0
        %3155 = vmatprep.subr.bf16.mxu0 0
        %3156 = vmatpush1.bf16.msra.mxu0 0
        %3157 = vmatprep.subr.bf16.mxu0 0
        %3158 = vmatpush1.bf16.msra.mxu0 0
        %3159 = vmatprep.subr.bf16.mxu0 0
        %3160 = vmatpush1.bf16.msra.mxu0 0
        %3161 = vmatprep.subr.bf16.mxu0 0
        %3162 = vmatpush1.bf16.msra.mxu0 0
        %3163 = vmatprep.subr.bf16.mxu0 0
        %3164 = vmatpush1.bf16.msra.mxu0 0
        %3165 = vmatprep.subr.bf16.mxu0 0
        %3166 = vmatpush1.bf16.msra.mxu0 0
        %3167 = vmatprep.subr.bf16.mxu0 0
        %3168 = vmatpush1.bf16.msra.mxu0 0
        %3169 = vmatprep.subr.bf16.mxu0 0
        %3170 = vmatpush1.bf16.msra.mxu0 0
        %3171 = vmatprep.subr.bf16.mxu0 0
        %3172 = vmatpush1.bf16.msra.mxu0 0
        %3173 = vmatprep.subr.bf16.mxu0 0
        %3174 = vmatpush1.bf16.msra.mxu0 0
        %3175 = vmatprep.subr.bf16.mxu0 0
        %3176 = vmatpush1.bf16.msra.mxu0 0
        %3177 = vmatprep.subr.bf16.mxu0 0
        %3178 = vmatpush1.bf16.msra.mxu0 0
        %3179 = vmatprep.subr.bf16.mxu0 0
        %3180 = vmatpush1.bf16.msra.mxu0 0
        %3181 = vmatprep.subr.bf16.mxu0 0
        %3182 = vmatpush1.bf16.msra.mxu0 0
        %3183 = vmatprep.mubr.bf16.mxu0 0
        %3184 = vmatmul.mubr.bf16.gmra.mrb[0].mxu0 %v3146
        %v3185 = vpop.f32.mrb[0].mxu0
        %v3186 = vadd.f32 0.0, %v3185
        %v3187 = vpop.f32.mrb[0].mxu0
        %v3188 = vpop.f32.mrb[0].mxu0
        %v3189 = vpop.f32.mrb[0].mxu0
        %3190 = vdwg.mxu0
        %v3192 = vsel %vm2581, %v2814, 0
        %v3195 = vsel %vm2825, %v1822, 0
        %3197 = vmatprep.subr.bf16.mxu0 0
        %3198 = vmatpush1.bf16.msra.mxu0 %v3195
        %3199 = vmatprep.subr.bf16.mxu0 0
        %3200 = vmatpush1.bf16.msra.mxu0 0
        %3201 = vmatprep.subr.bf16.mxu0 0
        %3202 = vmatpush1.bf16.msra.mxu0 0
        %3203 = vmatprep.subr.bf16.mxu0 0
        %3204 = vmatpush1.bf16.msra.mxu0 0
        %3205 = vmatprep.subr.bf16.mxu0 0
        %3206 = vmatpush1.bf16.msra.mxu0 0
        %3207 = vmatprep.subr.bf16.mxu0 0
        %3208 = vmatpush1.bf16.msra.mxu0 0
        %3209 = vmatprep.subr.bf16.mxu0 0
        %3210 = vmatpush1.bf16.msra.mxu0 0
        %3211 = vmatprep.subr.bf16.mxu0 0
        %3212 = vmatpush1.bf16.msra.mxu0 0
        %3213 = vmatprep.subr.bf16.mxu0 0
        %3214 = vmatpush1.bf16.msra.mxu0 0
        %3215 = vmatprep.subr.bf16.mxu0 0
        %3216 = vmatpush1.bf16.msra.mxu0 0
        %3217 = vmatprep.subr.bf16.mxu0 0
        %3218 = vmatpush1.bf16.msra.mxu0 0
        %3219 = vmatprep.subr.bf16.mxu0 0
        %3220 = vmatpush1.bf16.msra.mxu0 0
        %3221 = vmatprep.subr.bf16.mxu0 0
        %3222 = vmatpush1.bf16.msra.mxu0 0
        %3223 = vmatprep.subr.bf16.mxu0 0
        %3224 = vmatpush1.bf16.msra.mxu0 0
        %3225 = vmatprep.subr.bf16.mxu0 0
        %3226 = vmatpush1.bf16.msra.mxu0 0
        %3227 = vmatprep.subr.bf16.mxu0 0
        %3228 = vmatpush1.bf16.msra.mxu0 0
        %3229 = vmatprep.mubr.bf16.mxu0 0
        %3230 = vmatmul.mubr.bf16.gmra.mrb[0].mxu0 %v3192
        %v3231 = vpop.f32.mrb[0].mxu0
        %v3232 = vadd.f32 0.0, %v3231
        %v3233 = vpop.f32.mrb[0].mxu0
        %v3234 = vpop.f32.mrb[0].mxu0
        %v3235 = vpop.f32.mrb[0].mxu0
        %3236 = vdwg.mxu0
        %v3238 = vsel %vm2581, %v2815, 0
        %v3241 = vsel %vm2825, %v1825, 0
        %3243 = vmatprep.subr.bf16.mxu0 0
        %3244 = vmatpush1.bf16.msra.mxu0 %v3241
        %3245 = vmatprep.subr.bf16.mxu0 0
        %3246 = vmatpush1.bf16.msra.mxu0 0
        %3247 = vmatprep.subr.bf16.mxu0 0
        %3248 = vmatpush1.bf16.msra.mxu0 0
        %3249 = vmatprep.subr.bf16.mxu0 0
        %3250 = vmatpush1.bf16.msra.mxu0 0
        %3251 = vmatprep.subr.bf16.mxu0 0
        %3252 = vmatpush1.bf16.msra.mxu0 0
        %3253 = vmatprep.subr.bf16.mxu0 0
        %3254 = vmatpush1.bf16.msra.mxu0 0
        %3255 = vmatprep.subr.bf16.mxu0 0
        %3256 = vmatpush1.bf16.msra.mxu0 0
        %3257 = vmatprep.subr.bf16.mxu0 0
        %3258 = vmatpush1.bf16.msra.mxu0 0
        %3259 = vmatprep.subr.bf16.mxu0 0
        %3260 = vmatpush1.bf16.msra.mxu0 0
        %3261 = vmatprep.subr.bf16.mxu0 0
        %3262 = vmatpush1.bf16.msra.mxu0 0
        %3263 = vmatprep.subr.bf16.mxu0 0
        %3264 = vmatpush1.bf16.msra.mxu0 0
        %3265 = vmatprep.subr.bf16.mxu0 0
        %3266 = vmatpush1.bf16.msra.mxu0 0
        %3267 = vmatprep.subr.bf16.mxu0 0
        %3268 = vmatpush1.bf16.msra.mxu0 0
        %3269 = vmatprep.subr.bf16.mxu0 0
        %3270 = vmatpush1.bf16.msra.mxu0 0
        %3271 = vmatprep.subr.bf16.mxu0 0
        %3272 = vmatpush1.bf16.msra.mxu0 0
        %3273 = vmatprep.subr.bf16.mxu0 0
        %3274 = vmatpush1.bf16.msra.mxu0 0
        %3275 = vmatprep.mubr.bf16.mxu0 0
        %3276 = vmatmul.mubr.bf16.gmra.mrb[0].mxu0 %v3238
        %v3277 = vpop.f32.mrb[0].mxu0
        %v3278 = vadd.f32 0.0, %v3277
        %v3279 = vpop.f32.mrb[0].mxu0
        %v3280 = vpop.f32.mrb[0].mxu0
        %v3281 = vpop.f32.mrb[0].mxu0
        %3282 = vdwg.mxu0
        %v3284 = vsel %vm2581, %v2816, 0
        %v3287 = vsel %vm2825, %v1828, 0
        %3289 = vmatprep.subr.bf16.mxu0 0
        %3290 = vmatpush1.bf16.msra.mxu0 %v3287
        %3291 = vmatprep.subr.bf16.mxu0 0
        %3292 = vmatpush1.bf16.msra.mxu0 0
        %3293 = vmatprep.subr.bf16.mxu0 0
        %3294 = vmatpush1.bf16.msra.mxu0 0
        %3295 = vmatprep.subr.bf16.mxu0 0
        %3296 = vmatpush1.bf16.msra.mxu0 0
        %3297 = vmatprep.subr.bf16.mxu0 0
        %3298 = vmatpush1.bf16.msra.mxu0 0
        %3299 = vmatprep.subr.bf16.mxu0 0
        %3300 = vmatpush1.bf16.msra.mxu0 0
        %3301 = vmatprep.subr.bf16.mxu0 0
        %3302 = vmatpush1.bf16.msra.mxu0 0
        %3303 = vmatprep.subr.bf16.mxu0 0
        %3304 = vmatpush1.bf16.msra.mxu0 0
        %3305 = vmatprep.subr.bf16.mxu0 0
        %3306 = vmatpush1.bf16.msra.mxu0 0
        %3307 = vmatprep.subr.bf16.mxu0 0
        %3308 = vmatpush1.bf16.msra.mxu0 0
        %3309 = vmatprep.subr.bf16.mxu0 0
        %3310 = vmatpush1.bf16.msra.mxu0 0
        %3311 = vmatprep.subr.bf16.mxu0 0
        %3312 = vmatpush1.bf16.msra.mxu0 0
        %3313 = vmatprep.subr.bf16.mxu0 0
        %3314 = vmatpush1.bf16.msra.mxu0 0
        %3315 = vmatprep.subr.bf16.mxu0 0
        %3316 = vmatpush1.bf16.msra.mxu0 0
        %3317 = vmatprep.subr.bf16.mxu0 0
        %3318 = vmatpush1.bf16.msra.mxu0 0
        %3319 = vmatprep.subr.bf16.mxu0 0
        %3320 = vmatpush1.bf16.msra.mxu0 0
        %3321 = vmatprep.mubr.bf16.mxu0 0
        %3322 = vmatmul.mubr.bf16.gmra.mrb[0].mxu0 %v3284
        %v3323 = vpop.f32.mrb[0].mxu0
        %v3324 = vadd.f32 0.0, %v3323
        %v3325 = vpop.f32.mrb[0].mxu0
        %v3326 = vpop.f32.mrb[0].mxu0
        %v3327 = vpop.f32.mrb[0].mxu0
        %3328 = vdwg.mxu0
        %v3330 = vsel %vm2581, %v2817, 0
        %v3333 = vsel %vm2825, %v1831, 0
        %3335 = vmatprep.subr.bf16.mxu0 0
        %3336 = vmatpush1.bf16.msra.mxu0 %v3333
        %3337 = vmatprep.subr.bf16.mxu0 0
        %3338 = vmatpush1.bf16.msra.mxu0 0
        %3339 = vmatprep.subr.bf16.mxu0 0
        %3340 = vmatpush1.bf16.msra.mxu0 0
        %3341 = vmatprep.subr.bf16.mxu0 0
        %3342 = vmatpush1.bf16.msra.mxu0 0
        %3343 = vmatprep.subr.bf16.mxu0 0
        %3344 = vmatpush1.bf16.msra.mxu0 0
        %3345 = vmatprep.subr.bf16.mxu0 0
        %3346 = vmatpush1.bf16.msra.mxu0 0
        %3347 = vmatprep.subr.bf16.mxu0 0
        %3348 = vmatpush1.bf16.msra.mxu0 0
        %3349 = vmatprep.subr.bf16.mxu0 0
        %3350 = vmatpush1.bf16.msra.mxu0 0
        %3351 = vmatprep.subr.bf16.mxu0 0
        %3352 = vmatpush1.bf16.msra.mxu0 0
        %3353 = vmatprep.subr.bf16.mxu0 0
        %3354 = vmatpush1.bf16.msra.mxu0 0
        %3355 = vmatprep.subr.bf16.mxu0 0
        %3356 = vmatpush1.bf16.msra.mxu0 0
        %3357 = vmatprep.subr.bf16.mxu0 0
        %3358 = vmatpush1.bf16.msra.mxu0 0
        %3359 = vmatprep.subr.bf16.mxu0 0
        %3360 = vmatpush1.bf16.msra.mxu0 0
        %3361 = vmatprep.subr.bf16.mxu0 0
        %3362 = vmatpush1.bf16.msra.mxu0 0
        %3363 = vmatprep.subr.bf16.mxu0 0
        %3364 = vmatpush1.bf16.msra.mxu0 0
        %3365 = vmatprep.subr.bf16.mxu0 0
        %3366 = vmatpush1.bf16.msra.mxu0 0
        %3367 = vmatprep.mubr.bf16.mxu0 0
        %3368 = vmatmul.mubr.bf16.gmra.mrb[0].mxu0 %v3330
        %v3369 = vpop.f32.mrb[0].mxu0
        %v3370 = vadd.f32 0.0, %v3369
        %v3371 = vpop.f32.mrb[0].mxu0
        %v3372 = vpop.f32.mrb[0].mxu0
        %v3373 = vpop.f32.mrb[0].mxu0
        %3374 = vdwg.mxu0
        %v3376 = vsel %vm2581, %v2818, 0
        %v3379 = vsel %vm2825, %v1834, 0
        %3381 = vmatprep.subr.bf16.mxu0 0
        %3382 = vmatpush1.bf16.msra.mxu0 %v3379
        %3383 = vmatprep.subr.bf16.mxu0 0
        %3384 = vmatpush1.bf16.msra.mxu0 0
        %3385 = vmatprep.subr.bf16.mxu0 0
        %3386 = vmatpush1.bf16.msra.mxu0 0
        %3387 = vmatprep.subr.bf16.mxu0 0
        %3388 = vmatpush1.bf16.msra.mxu0 0
        %3389 = vmatprep.subr.bf16.mxu0 0
        %3390 = vmatpush1.bf16.msra.mxu0 0
        %3391 = vmatprep.subr.bf16.mxu0 0
        %3392 = vmatpush1.bf16.msra.mxu0 0
        %3393 = vmatprep.subr.bf16.mxu0 0
        %3394 = vmatpush1.bf16.msra.mxu0 0
        %3395 = vmatprep.subr.bf16.mxu0 0
        %3396 = vmatpush1.bf16.msra.mxu0 0
        %3397 = vmatprep.subr.bf16.mxu0 0
        %3398 = vmatpush1.bf16.msra.mxu0 0
        %3399 = vmatprep.subr.bf16.mxu0 0
        %3400 = vmatpush1.bf16.msra.mxu0 0
        %3401 = vmatprep.subr.bf16.mxu0 0
        %3402 = vmatpush1.bf16.msra.mxu0 0
        %3403 = vmatprep.subr.bf16.mxu0 0
        %3404 = vmatpush1.bf16.msra.mxu0 0
        %3405 = vmatprep.subr.bf16.mxu0 0
        %3406 = vmatpush1.bf16.msra.mxu0 0
        %3407 = vmatprep.subr.bf16.mxu0 0
        %3408 = vmatpush1.bf16.msra.mxu0 0
        %3409 = vmatprep.subr.bf16.mxu0 0
        %3410 = vmatpush1.bf16.msra.mxu0 0
        %3411 = vmatprep.subr.bf16.mxu0 0
        %3412 = vmatpush1.bf16.msra.mxu0 0
        %3413 = vmatprep.mubr.bf16.mxu0 0
        %3414 = vmatmul.mubr.bf16.gmra.mrb[0].mxu0 %v3376
        %v3415 = vpop.f32.mrb[0].mxu0
        %v3416 = vadd.f32 0.0, %v3415
        %v3417 = vpop.f32.mrb[0].mxu0
        %v3418 = vpop.f32.mrb[0].mxu0
        %v3419 = vpop.f32.mrb[0].mxu0
        %3420 = vdwg.mxu0
        %v3422 = vsel %vm2581, %v2819, 0
        %v3425 = vsel %vm2825, %v1837, 0
        %3427 = vmatprep.subr.bf16.mxu0 0
        %3428 = vmatpush1.bf16.msra.mxu0 %v3425
        %3429 = vmatprep.subr.bf16.mxu0 0
        %3430 = vmatpush1.bf16.msra.mxu0 0
        %3431 = vmatprep.subr.bf16.mxu0 0
        %3432 = vmatpush1.bf16.msra.mxu0 0
        %3433 = vmatprep.subr.bf16.mxu0 0
        %3434 = vmatpush1.bf16.msra.mxu0 0
        %3435 = vmatprep.subr.bf16.mxu0 0
        %3436 = vmatpush1.bf16.msra.mxu0 0
        %3437 = vmatprep.subr.bf16.mxu0 0
        %3438 = vmatpush1.bf16.msra.mxu0 0
        %3439 = vmatprep.subr.bf16.mxu0 0
        %3440 = vmatpush1.bf16.msra.mxu0 0
        %3441 = vmatprep.subr.bf16.mxu0 0
        %3442 = vmatpush1.bf16.msra.mxu0 0
        %3443 = vmatprep.subr.bf16.mxu0 0
        %3444 = vmatpush1.bf16.msra.mxu0 0
        %3445 = vmatprep.subr.bf16.mxu0 0
        %3446 = vmatpush1.bf16.msra.mxu0 0
        %3447 = vmatprep.subr.bf16.mxu0 0
        %3448 = vmatpush1.bf16.msra.mxu0 0
        %3449 = vmatprep.subr.bf16.mxu0 0
        %3450 = vmatpush1.bf16.msra.mxu0 0
        %3451 = vmatprep.subr.bf16.mxu0 0
        %3452 = vmatpush1.bf16.msra.mxu0 0
        %3453 = vmatprep.subr.bf16.mxu0 0
        %3454 = vmatpush1.bf16.msra.mxu0 0
        %3455 = vmatprep.subr.bf16.mxu0 0
        %3456 = vmatpush1.bf16.msra.mxu0 0
        %3457 = vmatprep.subr.bf16.mxu0 0
        %3458 = vmatpush1.bf16.msra.mxu0 0
        %3459 = vmatprep.mubr.bf16.mxu0 0
        %3460 = vmatmul.mubr.bf16.gmra.mrb[0].mxu0 %v3422
        %v3461 = vpop.f32.mrb[0].mxu0
        %v3462 = vadd.f32 0.0, %v3461
        %v3463 = vpop.f32.mrb[0].mxu0
        %v3464 = vpop.f32.mrb[0].mxu0
        %v3465 = vpop.f32.mrb[0].mxu0
        %3466 = vdwg.mxu0
        %v3468 = vsel %vm2581, %v2820, 0
        %v3471 = vsel %vm2825, %v1840, 0
        %3473 = vmatprep.subr.bf16.mxu0 0
        %3474 = vmatpush1.bf16.msra.mxu0 %v3471
        %3475 = vmatprep.subr.bf16.mxu0 0
        %3476 = vmatpush1.bf16.msra.mxu0 0
        %3477 = vmatprep.subr.bf16.mxu0 0
        %3478 = vmatpush1.bf16.msra.mxu0 0
        %3479 = vmatprep.subr.bf16.mxu0 0
        %3480 = vmatpush1.bf16.msra.mxu0 0
        %3481 = vmatprep.subr.bf16.mxu0 0
        %3482 = vmatpush1.bf16.msra.mxu0 0
        %3483 = vmatprep.subr.bf16.mxu0 0
        %3484 = vmatpush1.bf16.msra.mxu0 0
        %3485 = vmatprep.subr.bf16.mxu0 0
        %3486 = vmatpush1.bf16.msra.mxu0 0
        %3487 = vmatprep.subr.bf16.mxu0 0
        %3488 = vmatpush1.bf16.msra.mxu0 0
        %3489 = vmatprep.subr.bf16.mxu0 0
        %3490 = vmatpush1.bf16.msra.mxu0 0
        %3491 = vmatprep.subr.bf16.mxu0 0
        %3492 = vmatpush1.bf16.msra.mxu0 0
        %3493 = vmatprep.subr.bf16.mxu0 0
        %3494 = vmatpush1.bf16.msra.mxu0 0
        %3495 = vmatprep.subr.bf16.mxu0 0
        %3496 = vmatpush1.bf16.msra.mxu0 0
        %3497 = vmatprep.subr.bf16.mxu0 0
        %3498 = vmatpush1.bf16.msra.mxu0 0
        %3499 = vmatprep.subr.bf16.mxu0 0
        %3500 = vmatpush1.bf16.msra.mxu0 0
        %3501 = vmatprep.subr.bf16.mxu0 0
        %3502 = vmatpush1.bf16.msra.mxu0 0
        %3503 = vmatprep.subr.bf16.mxu0 0
        %3504 = vmatpush1.bf16.msra.mxu0 0
        %3505 = vmatprep.mubr.bf16.mxu0 0
        %3506 = vmatmul.mubr.bf16.gmra.mrb[0].mxu0 %v3468
        %v3507 = vpop.f32.mrb[0].mxu0
        %v3508 = vadd.f32 0.0, %v3507
        %v3509 = vpop.f32.mrb[0].mxu0
        %v3510 = vpop.f32.mrb[0].mxu0
        %v3511 = vpop.f32.mrb[0].mxu0
        %3512 = vdwg.mxu0
        %v3514 = vsel %vm2581, %v2821, 0
        %v3517 = vsel %vm2825, %v1843, 0
        %3519 = vmatprep.subr.bf16.mxu0 0
        %3520 = vmatpush1.bf16.msra.mxu0 %v3517
        %3521 = vmatprep.subr.bf16.mxu0 0
        %3522 = vmatpush1.bf16.msra.mxu0 0
        %3523 = vmatprep.subr.bf16.mxu0 0
        %3524 = vmatpush1.bf16.msra.mxu0 0
        %3525 = vmatprep.subr.bf16.mxu0 0
        %3526 = vmatpush1.bf16.msra.mxu0 0
        %3527 = vmatprep.subr.bf16.mxu0 0
        %3528 = vmatpush1.bf16.msra.mxu0 0
        %3529 = vmatprep.subr.bf16.mxu0 0
        %3530 = vmatpush1.bf16.msra.mxu0 0
        %3531 = vmatprep.subr.bf16.mxu0 0
        %3532 = vmatpush1.bf16.msra.mxu0 0
        %3533 = vmatprep.subr.bf16.mxu0 0
        %3534 = vmatpush1.bf16.msra.mxu0 0
        %3535 = vmatprep.subr.bf16.mxu0 0
        %3536 = vmatpush1.bf16.msra.mxu0 0
        %3537 = vmatprep.subr.bf16.mxu0 0
        %3538 = vmatpush1.bf16.msra.mxu0 0
        %3539 = vmatprep.subr.bf16.mxu0 0
        %3540 = vmatpush1.bf16.msra.mxu0 0
        %3541 = vmatprep.subr.bf16.mxu0 0
        %3542 = vmatpush1.bf16.msra.mxu0 0
        %3543 = vmatprep.subr.bf16.mxu0 0
        %3544 = vmatpush1.bf16.msra.mxu0 0
        %3545 = vmatprep.subr.bf16.mxu0 0
        %3546 = vmatpush1.bf16.msra.mxu0 0
        %3547 = vmatprep.subr.bf16.mxu0 0
        %3548 = vmatpush1.bf16.msra.mxu0 0
        %3549 = vmatprep.subr.bf16.mxu0 0
        %3550 = vmatpush1.bf16.msra.mxu0 0
        %3551 = vmatprep.mubr.bf16.mxu0 0
        %3552 = vmatmul.mubr.bf16.gmra.mrb[0].mxu0 %v3514
        %v3553 = vpop.f32.mrb[0].mxu0
        %v3554 = vadd.f32 0.0, %v3553
        %v3555 = vpop.f32.mrb[0].mxu0
        %v3556 = vpop.f32.mrb[0].mxu0
        %v3557 = vpop.f32.mrb[0].mxu0
        %3558 = vdwg.mxu0
        %v3559 = vadd.f32 %v2726, %v2864
        %v3560 = vadd.f32 %v2727, %v2910
        %v3561 = vadd.f32 %v2728, %v2956
        %v3562 = vadd.f32 %v2729, %v3002
        %v3563 = vadd.f32 %v2730, %v3048
        %v3564 = vadd.f32 %v2731, %v3094
        %v3565 = vadd.f32 %v2732, %v3140
        %v3566 = vadd.f32 %v2733, %v3186
        %v3567 = vadd.f32 %v2734, %v3232
        %v3568 = vadd.f32 %v2735, %v3278
        %v3569 = vadd.f32 %v2736, %v3324
        %v3570 = vadd.f32 %v2737, %v3370
        %v3571 = vadd.f32 %v2738, %v3416
        %v3572 = vadd.f32 %v2739, %v3462
        %v3573 = vadd.f32 %v2740, %v3508
        %v3574 = vadd.f32 %v2741, %v3554
        %v3575 = vrcp.pop %v2790
        %v3576 = vrcp.pop %v2791
        %v3577 = vrcp.pop %v2792
        %v3578 = vrcp.pop %v2793
        %v3579 = vrcp.pop %v2794
        %v3580 = vrcp.pop %v2795
        %v3581 = vrcp.pop %v2796
        %v3582 = vrcp.pop %v2797
        %v3583 = vrcp.pop %v2798
        %v3584 = vrcp.pop %v2799
        %v3585 = vrcp.pop %v2800
        %v3586 = vrcp.pop %v2801
        %v3587 = vrcp.pop %v2802
        %v3588 = vrcp.pop %v2803
        %v3589 = vrcp.pop %v2804
        %v3590 = vrcp.pop %v2805
        %v3591 = vmul.f32 %v3559, %v3575
        %v3592 = vmul.f32 %v3560, %v3576
        %v3593 = vmul.f32 %v3561, %v3577
        %v3594 = vmul.f32 %v3562, %v3578
        %v3595 = vmul.f32 %v3563, %v3579
        %v3596 = vmul.f32 %v3564, %v3580
        %v3597 = vmul.f32 %v3565, %v3581
        %v3598 = vmul.f32 %v3566, %v3582
        %v3599 = vmul.f32 %v3567, %v3583
        %v3600 = vmul.f32 %v3568, %v3584
        %v3601 = vmul.f32 %v3569, %v3585
        %v3602 = vmul.f32 %v3570, %v3586
        %v3603 = vmul.f32 %v3571, %v3587
        %v3604 = vmul.f32 %v3572, %v3588
        %v3605 = vmul.f32 %v3573, %v3589
        %v3606 = vmul.f32 %v3574, %v3590
        %v3607 = vcombine.low %v3591, %v3593
        %v3608 = vcombine.high %v3591, %v3593
        %v3610 = vunpack.c.l.s4 1983009808
        %v3611 = vunpack.c.0.s8 %v3610
        %v3612 = vlaneseq
        %v3613 = vshrl.u32 %v3612, 7
        %v3614 = vsub.s32 %v3611, %v3613
        %v3615 = vrot.slane %v3607, %v3614
        %v3617 = vunpack.c.l.s4 1983009808
        %v3618 = vunpack.c.0.s8 %v3617
        %v3619 = vlaneseq
        %v3620 = vshrl.u32 %v3619, 7
        %v3621 = vsub.s32 %v3618, %v3620
        %v3622 = vrot.slane %v3608, %v3621
        %v3623 = vcombine.low %v3592, %v3594
        %v3624 = vcombine.high %v3592, %v3594
        %v3626 = vunpack.c.l.s4 1983009808
        %v3627 = vunpack.c.0.s8 %v3626
        %v3628 = vlaneseq
        %v3629 = vshrl.u32 %v3628, 7
        %v3630 = vsub.s32 %v3627, %v3629
        %v3631 = vrot.slane %v3623, %v3630
        %v3633 = vunpack.c.l.s4 1983009808
        %v3634 = vunpack.c.0.s8 %v3633
        %v3635 = vlaneseq
        %v3636 = vshrl.u32 %v3635, 7
        %v3637 = vsub.s32 %v3634, %v3636
        %v3638 = vrot.slane %v3624, %v3637
        %v3639 = vcombine.low %v3595, %v3597
        %v3640 = vcombine.high %v3595, %v3597
        %v3642 = vunpack.c.l.s4 1983009808
        %v3643 = vunpack.c.0.s8 %v3642
        %v3644 = vlaneseq
        %v3645 = vshrl.u32 %v3644, 7
        %v3646 = vsub.s32 %v3643, %v3645
        %v3647 = vrot.slane %v3639, %v3646
        %v3649 = vunpack.c.l.s4 1983009808
        %v3650 = vunpack.c.0.s8 %v3649
        %v3651 = vlaneseq
        %v3652 = vshrl.u32 %v3651, 7
        %v3653 = vsub.s32 %v3650, %v3652
        %v3654 = vrot.slane %v3640, %v3653
        %v3655 = vcombine.low %v3596, %v3598
        %v3656 = vcombine.high %v3596, %v3598
        %v3658 = vunpack.c.l.s4 1983009808
        %v3659 = vunpack.c.0.s8 %v3658
        %v3660 = vlaneseq
        %v3661 = vshrl.u32 %v3660, 7
        %v3662 = vsub.s32 %v3659, %v3661
        %v3663 = vrot.slane %v3655, %v3662
        %v3665 = vunpack.c.l.s4 1983009808
        %v3666 = vunpack.c.0.s8 %v3665
        %v3667 = vlaneseq
        %v3668 = vshrl.u32 %v3667, 7
        %v3669 = vsub.s32 %v3666, %v3668
        %v3670 = vrot.slane %v3656, %v3669
        %v3671 = vcombine.low %v3615, %v3631
        %v3672 = vcombine.high %v3615, %v3631
        %v3674 = vunpack.c.l.s4 1934713408
        %v3675 = vunpack.c.0.s8 %v3674
        %v3676 = vlaneseq
        %v3677 = vshrl.u32 %v3676, 7
        %v3678 = vsub.s32 %v3675, %v3677
        %v3679 = vrot.slane %v3671, %v3678
        %v3681 = vunpack.c.l.s4 1934713408
        %v3682 = vunpack.c.0.s8 %v3681
        %v3683 = vlaneseq
        %v3684 = vshrl.u32 %v3683, 7
        %v3685 = vsub.s32 %v3682, %v3684
        %v3686 = vrot.slane %v3672, %v3685
        %v3687 = vcombine.low %v3622, %v3638
        %v3688 = vcombine.high %v3622, %v3638
        %v3690 = vunpack.c.l.s4 1934713408
        %v3691 = vunpack.c.0.s8 %v3690
        %v3692 = vlaneseq
        %v3693 = vshrl.u32 %v3692, 7
        %v3694 = vsub.s32 %v3691, %v3693
        %v3695 = vrot.slane %v3687, %v3694
        %v3697 = vunpack.c.l.s4 1934713408
        %v3698 = vunpack.c.0.s8 %v3697
        %v3699 = vlaneseq
        %v3700 = vshrl.u32 %v3699, 7
        %v3701 = vsub.s32 %v3698, %v3700
        %v3702 = vrot.slane %v3688, %v3701
        %v3703 = vcombine.low %v3647, %v3663
        %v3704 = vcombine.high %v3647, %v3663
        %v3706 = vunpack.c.l.s4 1934713408
        %v3707 = vunpack.c.0.s8 %v3706
        %v3708 = vlaneseq
        %v3709 = vshrl.u32 %v3708, 7
        %v3710 = vsub.s32 %v3707, %v3709
        %v3711 = vrot.slane %v3703, %v3710
        %v3713 = vunpack.c.l.s4 1934713408
        %v3714 = vunpack.c.0.s8 %v3713
        %v3715 = vlaneseq
        %v3716 = vshrl.u32 %v3715, 7
        %v3717 = vsub.s32 %v3714, %v3716
        %v3718 = vrot.slane %v3704, %v3717
        %v3719 = vcombine.low %v3654, %v3670
        %v3720 = vcombine.high %v3654, %v3670
        %v3722 = vunpack.c.l.s4 1934713408
        %v3723 = vunpack.c.0.s8 %v3722
        %v3724 = vlaneseq
        %v3725 = vshrl.u32 %v3724, 7
        %v3726 = vsub.s32 %v3723, %v3725
        %v3727 = vrot.slane %v3719, %v3726
        %v3729 = vunpack.c.l.s4 1934713408
        %v3730 = vunpack.c.0.s8 %v3729
        %v3731 = vlaneseq
        %v3732 = vshrl.u32 %v3731, 7
        %v3733 = vsub.s32 %v3730, %v3732
        %v3734 = vrot.slane %v3720, %v3733
        %v3735 = vcombine.low %v3679, %v3711
        %v3736 = vcombine.high %v3679, %v3711
        %v3737 = vcombine.low %v3686, %v3718
        %v3738 = vcombine.high %v3686, %v3718
        %v3739 = vcombine.low %v3695, %v3727
        %v3740 = vcombine.high %v3695, %v3727
        %v3741 = vcombine.low %v3702, %v3734
        %v3742 = vcombine.high %v3702, %v3734
        %v3743 = vcombine.low %v3599, %v3601
        %v3744 = vcombine.high %v3599, %v3601
        %v3746 = vunpack.c.l.s4 1983009808
        %v3747 = vunpack.c.0.s8 %v3746
        %v3748 = vlaneseq
        %v3749 = vshrl.u32 %v3748, 7
        %v3750 = vsub.s32 %v3747, %v3749
        %v3751 = vrot.slane %v3743, %v3750
        %v3753 = vunpack.c.l.s4 1983009808
        %v3754 = vunpack.c.0.s8 %v3753
        %v3755 = vlaneseq
        %v3756 = vshrl.u32 %v3755, 7
        %v3757 = vsub.s32 %v3754, %v3756
        %v3758 = vrot.slane %v3744, %v3757
        %v3759 = vcombine.low %v3600, %v3602
        %v3760 = vcombine.high %v3600, %v3602
        %v3762 = vunpack.c.l.s4 1983009808
        %v3763 = vunpack.c.0.s8 %v3762
        %v3764 = vlaneseq
        %v3765 = vshrl.u32 %v3764, 7
        %v3766 = vsub.s32 %v3763, %v3765
        %v3767 = vrot.slane %v3759, %v3766
        %v3769 = vunpack.c.l.s4 1983009808
        %v3770 = vunpack.c.0.s8 %v3769
        %v3771 = vlaneseq
        %v3772 = vshrl.u32 %v3771, 7
        %v3773 = vsub.s32 %v3770, %v3772
        %v3774 = vrot.slane %v3760, %v3773
        %v3775 = vcombine.low %v3603, %v3605
        %v3776 = vcombine.high %v3603, %v3605
        %v3778 = vunpack.c.l.s4 1983009808
        %v3779 = vunpack.c.0.s8 %v3778
        %v3780 = vlaneseq
        %v3781 = vshrl.u32 %v3780, 7
        %v3782 = vsub.s32 %v3779, %v3781
        %v3783 = vrot.slane %v3775, %v3782
        %v3785 = vunpack.c.l.s4 1983009808
        %v3786 = vunpack.c.0.s8 %v3785
        %v3787 = vlaneseq
        %v3788 = vshrl.u32 %v3787, 7
        %v3789 = vsub.s32 %v3786, %v3788
        %v3790 = vrot.slane %v3776, %v3789
        %v3791 = vcombine.low %v3604, %v3606
        %v3792 = vcombine.high %v3604, %v3606
        %v3794 = vunpack.c.l.s4 1983009808
        %v3795 = vunpack.c.0.s8 %v3794
        %v3796 = vlaneseq
        %v3797 = vshrl.u32 %v3796, 7
        %v3798 = vsub.s32 %v3795, %v3797
        %v3799 = vrot.slane %v3791, %v3798
        %v3801 = vunpack.c.l.s4 1983009808
        %v3802 = vunpack.c.0.s8 %v3801
        %v3803 = vlaneseq
        %v3804 = vshrl.u32 %v3803, 7
        %v3805 = vsub.s32 %v3802, %v3804
        %v3806 = vrot.slane %v3792, %v3805
        %v3807 = vcombine.low %v3751, %v3767
        %v3808 = vcombine.high %v3751, %v3767
        %v3810 = vunpack.c.l.s4 1934713408
        %v3811 = vunpack.c.0.s8 %v3810
        %v3812 = vlaneseq
        %v3813 = vshrl.u32 %v3812, 7
        %v3814 = vsub.s32 %v3811, %v3813
        %v3815 = vrot.slane %v3807, %v3814
        %v3817 = vunpack.c.l.s4 1934713408
        %v3818 = vunpack.c.0.s8 %v3817
        %v3819 = vlaneseq
        %v3820 = vshrl.u32 %v3819, 7
        %v3821 = vsub.s32 %v3818, %v3820
        %v3822 = vrot.slane %v3808, %v3821
        %v3823 = vcombine.low %v3758, %v3774
        %v3824 = vcombine.high %v3758, %v3774
        %v3826 = vunpack.c.l.s4 1934713408
        %v3827 = vunpack.c.0.s8 %v3826
        %v3828 = vlaneseq
        %v3829 = vshrl.u32 %v3828, 7
        %v3830 = vsub.s32 %v3827, %v3829
        %v3831 = vrot.slane %v3823, %v3830
        %v3833 = vunpack.c.l.s4 1934713408
        %v3834 = vunpack.c.0.s8 %v3833
        %v3835 = vlaneseq
        %v3836 = vshrl.u32 %v3835, 7
        %v3837 = vsub.s32 %v3834, %v3836
        %v3838 = vrot.slane %v3824, %v3837
        %v3839 = vcombine.low %v3783, %v3799
        %v3840 = vcombine.high %v3783, %v3799
        %v3842 = vunpack.c.l.s4 1934713408
        %v3843 = vunpack.c.0.s8 %v3842
        %v3844 = vlaneseq
        %v3845 = vshrl.u32 %v3844, 7
        %v3846 = vsub.s32 %v3843, %v3845
        %v3847 = vrot.slane %v3839, %v3846
        %v3849 = vunpack.c.l.s4 1934713408
        %v3850 = vunpack.c.0.s8 %v3849
        %v3851 = vlaneseq
        %v3852 = vshrl.u32 %v3851, 7
        %v3853 = vsub.s32 %v3850, %v3852
        %v3854 = vrot.slane %v3840, %v3853
        %v3855 = vcombine.low %v3790, %v3806
        %v3856 = vcombine.high %v3790, %v3806
        %v3858 = vunpack.c.l.s4 1934713408
        %v3859 = vunpack.c.0.s8 %v3858
        %v3860 = vlaneseq
        %v3861 = vshrl.u32 %v3860, 7
        %v3862 = vsub.s32 %v3859, %v3861
        %v3863 = vrot.slane %v3855, %v3862
        %v3865 = vunpack.c.l.s4 1934713408
        %v3866 = vunpack.c.0.s8 %v3865
        %v3867 = vlaneseq
        %v3868 = vshrl.u32 %v3867, 7
        %v3869 = vsub.s32 %v3866, %v3868
        %v3870 = vrot.slane %v3856, %v3869
        %v3871 = vcombine.low %v3815, %v3847
        %v3872 = vcombine.high %v3815, %v3847
        %v3873 = vcombine.low %v3822, %v3854
        %v3874 = vcombine.high %v3822, %v3854
        %v3875 = vcombine.low %v3831, %v3863
        %v3876 = vcombine.high %v3831, %v3863
        %v3877 = vcombine.low %v3838, %v3870
        %v3878 = vcombine.high %v3838, %v3870
        %v3879 = vcombine.low %v3735, %v3737
        %v3880 = vcombine.high %v3735, %v3737
        %v3882 = vunpack.c.l.s4 1983009808
        %v3883 = vunpack.c.0.s8 %v3882
        %v3884 = vlaneseq
        %v3885 = vshrl.u32 %v3884, 7
        %v3886 = vsub.s32 %v3883, %v3885
        %v3887 = vrot.slane %v3879, %v3886
        %v3889 = vunpack.c.l.s4 1983009808
        %v3890 = vunpack.c.0.s8 %v3889
        %v3891 = vlaneseq
        %v3892 = vshrl.u32 %v3891, 7
        %v3893 = vsub.s32 %v3890, %v3892
        %v3894 = vrot.slane %v3880, %v3893
        %v3895 = vcombine.low %v3736, %v3738
        %v3896 = vcombine.high %v3736, %v3738
        %v3898 = vunpack.c.l.s4 1983009808
        %v3899 = vunpack.c.0.s8 %v3898
        %v3900 = vlaneseq
        %v3901 = vshrl.u32 %v3900, 7
        %v3902 = vsub.s32 %v3899, %v3901
        %v3903 = vrot.slane %v3895, %v3902
        %v3905 = vunpack.c.l.s4 1983009808
        %v3906 = vunpack.c.0.s8 %v3905
        %v3907 = vlaneseq
        %v3908 = vshrl.u32 %v3907, 7
        %v3909 = vsub.s32 %v3906, %v3908
        %v3910 = vrot.slane %v3896, %v3909
        %v3911 = vcombine.low %v3739, %v3741
        %v3912 = vcombine.high %v3739, %v3741
        %v3914 = vunpack.c.l.s4 1983009808
        %v3915 = vunpack.c.0.s8 %v3914
        %v3916 = vlaneseq
        %v3917 = vshrl.u32 %v3916, 7
        %v3918 = vsub.s32 %v3915, %v3917
        %v3919 = vrot.slane %v3911, %v3918
        %v3921 = vunpack.c.l.s4 1983009808
        %v3922 = vunpack.c.0.s8 %v3921
        %v3923 = vlaneseq
        %v3924 = vshrl.u32 %v3923, 7
        %v3925 = vsub.s32 %v3922, %v3924
        %v3926 = vrot.slane %v3912, %v3925
        %v3927 = vcombine.low %v3740, %v3742
        %v3928 = vcombine.high %v3740, %v3742
        %v3930 = vunpack.c.l.s4 1983009808
        %v3931 = vunpack.c.0.s8 %v3930
        %v3932 = vlaneseq
        %v3933 = vshrl.u32 %v3932, 7
        %v3934 = vsub.s32 %v3931, %v3933
        %v3935 = vrot.slane %v3927, %v3934
        %v3937 = vunpack.c.l.s4 1983009808
        %v3938 = vunpack.c.0.s8 %v3937
        %v3939 = vlaneseq
        %v3940 = vshrl.u32 %v3939, 7
        %v3941 = vsub.s32 %v3938, %v3940
        %v3942 = vrot.slane %v3928, %v3941
        %v3943 = vcombine.low %v3887, %v3903
        %v3944 = vcombine.high %v3887, %v3903
        %v3946 = vunpack.c.l.s4 1934713408
        %v3947 = vunpack.c.0.s8 %v3946
        %v3948 = vlaneseq
        %v3949 = vshrl.u32 %v3948, 7
        %v3950 = vsub.s32 %v3947, %v3949
        %v3951 = vrot.slane %v3943, %v3950
        %v3953 = vunpack.c.l.s4 1934713408
        %v3954 = vunpack.c.0.s8 %v3953
        %v3955 = vlaneseq
        %v3956 = vshrl.u32 %v3955, 7
        %v3957 = vsub.s32 %v3954, %v3956
        %v3958 = vrot.slane %v3944, %v3957
        %v3959 = vcombine.low %v3894, %v3910
        %v3960 = vcombine.high %v3894, %v3910
        %v3962 = vunpack.c.l.s4 1934713408
        %v3963 = vunpack.c.0.s8 %v3962
        %v3964 = vlaneseq
        %v3965 = vshrl.u32 %v3964, 7
        %v3966 = vsub.s32 %v3963, %v3965
        %v3967 = vrot.slane %v3959, %v3966
        %v3969 = vunpack.c.l.s4 1934713408
        %v3970 = vunpack.c.0.s8 %v3969
        %v3971 = vlaneseq
        %v3972 = vshrl.u32 %v3971, 7
        %v3973 = vsub.s32 %v3970, %v3972
        %v3974 = vrot.slane %v3960, %v3973
        %v3975 = vcombine.low %v3919, %v3935
        %v3976 = vcombine.high %v3919, %v3935
        %v3978 = vunpack.c.l.s4 1934713408
        %v3979 = vunpack.c.0.s8 %v3978
        %v3980 = vlaneseq
        %v3981 = vshrl.u32 %v3980, 7
        %v3982 = vsub.s32 %v3979, %v3981
        %v3983 = vrot.slane %v3975, %v3982
        %v3985 = vunpack.c.l.s4 1934713408
        %v3986 = vunpack.c.0.s8 %v3985
        %v3987 = vlaneseq
        %v3988 = vshrl.u32 %v3987, 7
        %v3989 = vsub.s32 %v3986, %v3988
        %v3990 = vrot.slane %v3976, %v3989
        %v3991 = vcombine.low %v3926, %v3942
        %v3992 = vcombine.high %v3926, %v3942
        %v3994 = vunpack.c.l.s4 1934713408
        %v3995 = vunpack.c.0.s8 %v3994
        %v3996 = vlaneseq
        %v3997 = vshrl.u32 %v3996, 7
        %v3998 = vsub.s32 %v3995, %v3997
        %v3999 = vrot.slane %v3991, %v3998
        %v4001 = vunpack.c.l.s4 1934713408
        %v4002 = vunpack.c.0.s8 %v4001
        %v4003 = vlaneseq
        %v4004 = vshrl.u32 %v4003, 7
        %v4005 = vsub.s32 %v4002, %v4004
        %v4006 = vrot.slane %v3992, %v4005
        %v4007 = vcombine.low %v3951, %v3983
        %v4008 = vcombine.high %v3951, %v3983
        %v4009 = vcombine.low %v3958, %v3990
        %v4010 = vcombine.high %v3958, %v3990
        %v4011 = vcombine.low %v3967, %v3999
        %v4012 = vcombine.high %v3967, %v3999
        %v4013 = vcombine.low %v3974, %v4006
        %v4014 = vcombine.high %v3974, %v4006
        %v4015 = vcombine.low %v3871, %v3873
        %v4016 = vcombine.high %v3871, %v3873
        %v4018 = vunpack.c.l.s4 1983009808
        %v4019 = vunpack.c.0.s8 %v4018
        %v4020 = vlaneseq
        %v4021 = vshrl.u32 %v4020, 7
        %v4022 = vsub.s32 %v4019, %v4021
        %v4023 = vrot.slane %v4015, %v4022
        %v4025 = vunpack.c.l.s4 1983009808
        %v4026 = vunpack.c.0.s8 %v4025
        %v4027 = vlaneseq
        %v4028 = vshrl.u32 %v4027, 7
        %v4029 = vsub.s32 %v4026, %v4028
        %v4030 = vrot.slane %v4016, %v4029
        %v4031 = vcombine.low %v3872, %v3874
        %v4032 = vcombine.high %v3872, %v3874
        %v4034 = vunpack.c.l.s4 1983009808
        %v4035 = vunpack.c.0.s8 %v4034
        %v4036 = vlaneseq
        %v4037 = vshrl.u32 %v4036, 7
        %v4038 = vsub.s32 %v4035, %v4037
        %v4039 = vrot.slane %v4031, %v4038
        %v4041 = vunpack.c.l.s4 1983009808
        %v4042 = vunpack.c.0.s8 %v4041
        %v4043 = vlaneseq
        %v4044 = vshrl.u32 %v4043, 7
        %v4045 = vsub.s32 %v4042, %v4044
        %v4046 = vrot.slane %v4032, %v4045
        %v4047 = vcombine.low %v3875, %v3877
        %v4048 = vcombine.high %v3875, %v3877
        %v4050 = vunpack.c.l.s4 1983009808
        %v4051 = vunpack.c.0.s8 %v4050
        %v4052 = vlaneseq
        %v4053 = vshrl.u32 %v4052, 7
        %v4054 = vsub.s32 %v4051, %v4053
        %v4055 = vrot.slane %v4047, %v4054
        %v4057 = vunpack.c.l.s4 1983009808
        %v4058 = vunpack.c.0.s8 %v4057
        %v4059 = vlaneseq
        %v4060 = vshrl.u32 %v4059, 7
        %v4061 = vsub.s32 %v4058, %v4060
        %v4062 = vrot.slane %v4048, %v4061
        %v4063 = vcombine.low %v3876, %v3878
        %v4064 = vcombine.high %v3876, %v3878
        %v4066 = vunpack.c.l.s4 1983009808
        %v4067 = vunpack.c.0.s8 %v4066
        %v4068 = vlaneseq
        %v4069 = vshrl.u32 %v4068, 7
        %v4070 = vsub.s32 %v4067, %v4069
        %v4071 = vrot.slane %v4063, %v4070
        %v4073 = vunpack.c.l.s4 1983009808
        %v4074 = vunpack.c.0.s8 %v4073
        %v4075 = vlaneseq
        %v4076 = vshrl.u32 %v4075, 7
        %v4077 = vsub.s32 %v4074, %v4076
        %v4078 = vrot.slane %v4064, %v4077
        %v4079 = vcombine.low %v4023, %v4039
        %v4080 = vcombine.high %v4023, %v4039
        %v4082 = vunpack.c.l.s4 1934713408
        %v4083 = vunpack.c.0.s8 %v4082
        %v4084 = vlaneseq
        %v4085 = vshrl.u32 %v4084, 7
        %v4086 = vsub.s32 %v4083, %v4085
        %v4087 = vrot.slane %v4079, %v4086
        %v4089 = vunpack.c.l.s4 1934713408
        %v4090 = vunpack.c.0.s8 %v4089
        %v4091 = vlaneseq
        %v4092 = vshrl.u32 %v4091, 7
        %v4093 = vsub.s32 %v4090, %v4092
        %v4094 = vrot.slane %v4080, %v4093
        %v4095 = vcombine.low %v4030, %v4046
        %v4096 = vcombine.high %v4030, %v4046
        %v4098 = vunpack.c.l.s4 1934713408
        %v4099 = vunpack.c.0.s8 %v4098
        %v4100 = vlaneseq
        %v4101 = vshrl.u32 %v4100, 7
        %v4102 = vsub.s32 %v4099, %v4101
        %v4103 = vrot.slane %v4095, %v4102
        %v4105 = vunpack.c.l.s4 1934713408
        %v4106 = vunpack.c.0.s8 %v4105
        %v4107 = vlaneseq
        %v4108 = vshrl.u32 %v4107, 7
        %v4109 = vsub.s32 %v4106, %v4108
        %v4110 = vrot.slane %v4096, %v4109
        %v4111 = vcombine.low %v4055, %v4071
        %v4112 = vcombine.high %v4055, %v4071
        %v4114 = vunpack.c.l.s4 1934713408
        %v4115 = vunpack.c.0.s8 %v4114
        %v4116 = vlaneseq
        %v4117 = vshrl.u32 %v4116, 7
        %v4118 = vsub.s32 %v4115, %v4117
        %v4119 = vrot.slane %v4111, %v4118
        %v4121 = vunpack.c.l.s4 1934713408
        %v4122 = vunpack.c.0.s8 %v4121
        %v4123 = vlaneseq
        %v4124 = vshrl.u32 %v4123, 7
        %v4125 = vsub.s32 %v4122, %v4124
        %v4126 = vrot.slane %v4112, %v4125
        %v4127 = vcombine.low %v4062, %v4078
        %v4128 = vcombine.high %v4062, %v4078
        %v4130 = vunpack.c.l.s4 1934713408
        %v4131 = vunpack.c.0.s8 %v4130
        %v4132 = vlaneseq
        %v4133 = vshrl.u32 %v4132, 7
        %v4134 = vsub.s32 %v4131, %v4133
        %v4135 = vrot.slane %v4127, %v4134
        %v4137 = vunpack.c.l.s4 1934713408
        %v4138 = vunpack.c.0.s8 %v4137
        %v4139 = vlaneseq
        %v4140 = vshrl.u32 %v4139, 7
        %v4141 = vsub.s32 %v4138, %v4140
        %v4142 = vrot.slane %v4128, %v4141
        %v4143 = vcombine.low %v4087, %v4119
        %v4144 = vcombine.high %v4087, %v4119
        %v4145 = vcombine.low %v4094, %v4126
        %v4146 = vcombine.high %v4094, %v4126
        %v4147 = vcombine.low %v4103, %v4135
        %v4148 = vcombine.high %v4103, %v4135
        %v4149 = vcombine.low %v4110, %v4142
        %v4150 = vcombine.high %v4110, %v4142
        %4153 = vrot.lane.b32.xlu0 %v4008, 4
        %v4154 = vpop.permute.xlu0 %4153
        %4155 = vrot.lane.b32.xlu0 %v4144, 4
        %v4156 = vpop.permute.xlu0 %4155
        %4161 = vrot.lane.b32.xlu0 %v4009, 8
        %v4162 = vpop.permute.xlu0 %4161
        %4163 = vrot.lane.b32.xlu0 %v4145, 8
        %v4164 = vpop.permute.xlu0 %4163
        %4169 = vrot.lane.b32.xlu0 %v4010, 12
        %v4170 = vpop.permute.xlu0 %4169
        %4171 = vrot.lane.b32.xlu0 %v4146, 12
        %v4172 = vpop.permute.xlu0 %4171
        %4177 = vrot.lane.b32.xlu0 %v4011, 16
        %v4178 = vpop.permute.xlu0 %4177
        %4179 = vrot.lane.b32.xlu0 %v4147, 16
        %v4180 = vpop.permute.xlu0 %4179
        %4185 = vrot.lane.b32.xlu0 %v4012, 20
        %v4186 = vpop.permute.xlu0 %4185
        %4187 = vrot.lane.b32.xlu0 %v4148, 20
        %v4188 = vpop.permute.xlu0 %4187
        %4193 = vrot.lane.b32.xlu0 %v4013, 24
        %v4194 = vpop.permute.xlu0 %4193
        %4195 = vrot.lane.b32.xlu0 %v4149, 24
        %v4196 = vpop.permute.xlu0 %4195
        %4201 = vrot.lane.b32.xlu0 %v4014, 28
        %v4202 = vpop.permute.xlu0 %4201
        %4203 = vrot.lane.b32.xlu0 %v4150, 28
        %v4204 = vpop.permute.xlu0 %4203
        %v4207 = vsel %vm1844, %v4007, %v4154
        %v4208 = vsel %vm1844, %v4143, %v4156
        %v4209 = vsel %vm2581, %v4207, %v4162
        %v4210 = vsel %vm2581, %v4208, %v4164
        %vm4211 = vcmask 97280
        %v4212 = vsel %vm4211, %v4209, %v4170
        %v4213 = vsel %vm4211, %v4210, %v4172
        %vm4214 = vcmask 130048
        %v4215 = vsel %vm4214, %v4212, %v4178
        %v4216 = vsel %vm4214, %v4213, %v4180
        %vm4217 = vcmask 162816
        %v4218 = vsel %vm4217, %v4215, %v4186
        %v4219 = vsel %vm4217, %v4216, %v4188
        %vm4220 = vcmask 195584
        %v4221 = vsel %vm4220, %v4218, %v4194
        %v4222 = vsel %vm4220, %v4219, %v4196
        %vm4223 = vcmask 228352
        %v4224 = vsel %vm4223, %v4221, %v4202
        %v4225 = vsel %vm4223, %v4222, %v4204
        %v4226 = vpack.c.bf16 %v4225, %v4224
        %v4227 = vld [vmem:[%s606] sm:$0xf]
        %v4228 = vld [vmem:[%s606 + $0x4] sm:$0xf]
        %v4229 = vld [vmem:[%s606 + $0x8] sm:$0xf]
        %v4230 = vld [vmem:[%s606 + $0xc] sm:$0xf]
        %v4231 = vld [vmem:[%s609] sm:$0x1]
        %v4233 = vlaneseq
        %v4234 = vshrl.u32 %v4233, 7
        %v4235 = vsub.s32 0, %v4234
        %v4236 = vrot.slane %v4231, %v4235
        %v4242 = vunpack.c.l.b16 %v4227
        %v4243 = vunpack.c.l.b16 %v4228
        %v4244 = vunpack.c.l.b16 %v4229
        %v4245 = vunpack.c.l.b16 %v4230
        %v4246 = vpack.c.b16 %v4243, %v4242
        %v4247 = vpack.c.b16 %v4245, %v4244
        %v4251 = vsel %vm677, %v4226, 0
        %4253 = vmatprep.subr.bf16.mxu0 0
        %4254 = vmatpush1.bf16.msra.mxu0 %v4246
        %4255 = vmatprep.subr.bf16.mxu0 0
        %4256 = vmatpush1.bf16.msra.mxu0 %v4247
        %4257 = vmatprep.subr.bf16.mxu0 0
        %4258 = vmatpush1.bf16.msra.mxu0 0
        %4259 = vmatprep.subr.bf16.mxu0 0
        %4260 = vmatpush1.bf16.msra.mxu0 0
        %4261 = vmatprep.subr.bf16.mxu0 0
        %4262 = vmatpush1.bf16.msra.mxu0 0
        %4263 = vmatprep.subr.bf16.mxu0 0
        %4264 = vmatpush1.bf16.msra.mxu0 0
        %4265 = vmatprep.subr.bf16.mxu0 0
        %4266 = vmatpush1.bf16.msra.mxu0 0
        %4267 = vmatprep.subr.bf16.mxu0 0
        %4268 = vmatpush1.bf16.msra.mxu0 0
        %4269 = vmatprep.subr.bf16.mxu0 0
        %4270 = vmatpush1.bf16.msra.mxu0 0
        %4271 = vmatprep.subr.bf16.mxu0 0
        %4272 = vmatpush1.bf16.msra.mxu0 0
        %4273 = vmatprep.subr.bf16.mxu0 0
        %4274 = vmatpush1.bf16.msra.mxu0 0
        %4275 = vmatprep.subr.bf16.mxu0 0
        %4276 = vmatpush1.bf16.msra.mxu0 0
        %4277 = vmatprep.subr.bf16.mxu0 0
        %4278 = vmatpush1.bf16.msra.mxu0 0
        %4279 = vmatprep.subr.bf16.mxu0 0
        %4280 = vmatpush1.bf16.msra.mxu0 0
        %4281 = vmatprep.subr.bf16.mxu0 0
        %4282 = vmatpush1.bf16.msra.mxu0 0
        %4283 = vmatprep.subr.bf16.mxu0 0
        %4284 = vmatpush1.bf16.msra.mxu0 0
        %4285 = vmatprep.mubr.bf16.mxu0 0
        %4286 = vmatmul.mubr.bf16.gmra.mrb[0].mxu0 %v4251
        %v4287 = vpop.f32.mrb[0].mxu0
        %v4288 = vadd.f32 %v4236, %v4287
        %v4289 = vpop.f32.mrb[0].mxu0
        %v4290 = vpop.f32.mrb[0].mxu0
        %v4291 = vadd.f32 %v4236, %v4290
        %v4292 = vpop.f32.mrb[0].mxu0
        %4293 = vdwg.mxu0
        %v4294 = vadd.f32 %v651, %v4288
        %v4295 = vadd.f32 %v652, %v4291
        %v4296 = vsel %vm677, %v4294, 0.0
        %4297 = vadd.xlane.f32.xlu0 %v4296
        %v4298 = vpop.xlane.xlu0 %4297
        %v4299 = vsel %vm677, %v4295, 0.0
        %4300 = vadd.xlane.f32.xlu0 %v4299
        %v4301 = vpop.xlane.xlu0 %4300
        %v4302 = vrcp.pop 32.0
        %v4303 = vmul.f32 %v4298, %v4302
        %v4304 = vmul.f32 %v4301, %v4302
        %v4305 = vsub.f32 %v4294, %v4303
        %v4306 = vsub.f32 %v4295, %v4304
        %v4307 = vmul.f32 %v4305, %v4305
        %v4308 = vmul.f32 %v4306, %v4306
        %v4309 = vsel %vm677, %v4307, 0.0
        %4310 = vadd.xlane.f32.xlu0 %v4309
        %v4311 = vpop.xlane.xlu0 %4310
        %v4312 = vsel %vm677, %v4308, 0.0
        %4313 = vadd.xlane.f32.xlu0 %v4312
        %v4314 = vpop.xlane.xlu0 %4313
        %v4315 = vmul.f32 %v4311, %v4302
        %v4316 = vmul.f32 %v4314, %v4302
        %v4317 = vadd.f32 %v4315, 1e-05
        %v4318 = vadd.f32 %v4316, 1e-05
        %v4319 = vrsqrt.pop %v4317
        %v4320 = vrsqrt.pop %v4318
        %v4321 = vmul.f32 %v4305, %v4319
        %v4322 = vmul.f32 %v4306, %v4320
        %v4323 = vld [vmem:[%s628] sm:$0x1]
        %v4325 = vlaneseq
        %v4326 = vshrl.u32 %v4325, 7
        %v4327 = vsub.s32 0, %v4326
        %v4328 = vrot.slane %v4323, %v4327
        %v4330 = vmul.f32 %v4321, %v4328
        %v4331 = vmul.f32 %v4322, %v4328
        %v4332 = vld [vmem:[%s631] sm:$0x1]
        %v4334 = vlaneseq
        %v4335 = vshrl.u32 %v4334, 7
        %v4336 = vsub.s32 0, %v4335
        %v4337 = vrot.slane %v4332, %v4336
        %v4339 = vadd.f32 %v4330, %v4337
        %v4340 = vadd.f32 %v4331, %v4337
        %v4341 = vpack.c.bf16 %v4340, %v4339
        %v4342 = vld [vmem:[%s614] sm:$0xf]
        %v4343 = vld [vmem:[%s614 + $0x4] sm:$0xf]
        %v4344 = vld [vmem:[%s614 + $0x8] sm:$0xf]
        %v4345 = vld [vmem:[%s614 + $0xc] sm:$0xf]
        %v4346 = vld [vmem:[%s617] sm:$0x1]
        %v4348 = vlaneseq
        %v4349 = vshrl.u32 %v4348, 7
        %v4350 = vsub.s32 0, %v4349
        %v4351 = vrot.slane %v4346, %v4350
        %v4357 = vunpack.c.l.b16 %v4342
        %v4358 = vunpack.c.l.b16 %v4343
        %v4359 = vunpack.c.l.b16 %v4344
        %v4360 = vunpack.c.l.b16 %v4345
        %v4361 = vpack.c.b16 %v4358, %v4357
        %v4362 = vpack.c.b16 %v4360, %v4359
        %v4366 = vsel %vm677, %v4341, 0
        %4368 = vmatprep.subr.bf16.mxu0 0
        %4369 = vmatpush1.bf16.msra.mxu0 %v4361
        %4370 = vmatprep.subr.bf16.mxu0 0
        %4371 = vmatpush1.bf16.msra.mxu0 %v4362
        %4372 = vmatprep.subr.bf16.mxu0 0
        %4373 = vmatpush1.bf16.msra.mxu0 0
        %4374 = vmatprep.subr.bf16.mxu0 0
        %4375 = vmatpush1.bf16.msra.mxu0 0
        %4376 = vmatprep.subr.bf16.mxu0 0
        %4377 = vmatpush1.bf16.msra.mxu0 0
        %4378 = vmatprep.subr.bf16.mxu0 0
        %4379 = vmatpush1.bf16.msra.mxu0 0
        %4380 = vmatprep.subr.bf16.mxu0 0
        %4381 = vmatpush1.bf16.msra.mxu0 0
        %4382 = vmatprep.subr.bf16.mxu0 0
        %4383 = vmatpush1.bf16.msra.mxu0 0
        %4384 = vmatprep.subr.bf16.mxu0 0
        %4385 = vmatpush1.bf16.msra.mxu0 0
        %4386 = vmatprep.subr.bf16.mxu0 0
        %4387 = vmatpush1.bf16.msra.mxu0 0
        %4388 = vmatprep.subr.bf16.mxu0 0
        %4389 = vmatpush1.bf16.msra.mxu0 0
        %4390 = vmatprep.subr.bf16.mxu0 0
        %4391 = vmatpush1.bf16.msra.mxu0 0
        %4392 = vmatprep.subr.bf16.mxu0 0
        %4393 = vmatpush1.bf16.msra.mxu0 0
        %4394 = vmatprep.subr.bf16.mxu0 0
        %4395 = vmatpush1.bf16.msra.mxu0 0
        %4396 = vmatprep.subr.bf16.mxu0 0
        %4397 = vmatpush1.bf16.msra.mxu0 0
        %4398 = vmatprep.subr.bf16.mxu0 0
        %4399 = vmatpush1.bf16.msra.mxu0 0
        %4400 = vmatprep.mubr.bf16.mxu0 0
        %4401 = vmatmul.mubr.bf16.gmra.mrb[0].mxu0 %v4366
        %v4402 = vpop.f32.mrb[0].mxu0
        %v4403 = vadd.f32 %v4351, %v4402
        %v4404 = vpop.f32.mrb[0].mxu0
        %v4405 = vpop.f32.mrb[0].mxu0
        %v4406 = vadd.f32 %v4351, %v4405
        %v4407 = vpop.f32.mrb[0].mxu0
        %4408 = vdwg.mxu0
        %v4409 = vmax.f32 %v4403, 0.0
        %v4410 = vmax.f32 %v4406, 0.0
        %v4411 = vpack.c.bf16 %v4410, %v4409
        %v4412 = vld [vmem:[%s622] sm:$0xf]
        %v4413 = vld [vmem:[%s622 + $0x4] sm:$0xf]
        %v4414 = vld [vmem:[%s622 + $0x8] sm:$0xf]
        %v4415 = vld [vmem:[%s622 + $0xc] sm:$0xf]
        %v4416 = vld [vmem:[%s622 + $0x10] sm:$0xf]
        %v4417 = vld [vmem:[%s622 + $0x14] sm:$0xf]
        %v4418 = vld [vmem:[%s622 + $0x18] sm:$0xf]
        %v4419 = vld [vmem:[%s622 + $0x1c] sm:$0xf]
        %v4420 = vld [vmem:[%s622 + $0x20] sm:$0xf]
        %v4421 = vld [vmem:[%s622 + $0x24] sm:$0xf]
        %v4422 = vld [vmem:[%s622 + $0x28] sm:$0xf]
        %v4423 = vld [vmem:[%s622 + $0x2c] sm:$0xf]
        %v4424 = vld [vmem:[%s622 + $0x30] sm:$0xf]
        %v4425 = vld [vmem:[%s622 + $0x34] sm:$0xf]
        %v4426 = vld [vmem:[%s622 + $0x38] sm:$0xf]
        %v4427 = vld [vmem:[%s622 + $0x3c] sm:$0xf]
        %v4444 = vunpack.c.l.b16 %v4412
        %v4445 = vunpack.c.l.b16 %v4413
        %v4446 = vunpack.c.l.b16 %v4414
        %v4447 = vunpack.c.l.b16 %v4415
        %v4448 = vunpack.c.l.b16 %v4416
        %v4449 = vunpack.c.l.b16 %v4417
        %v4450 = vunpack.c.l.b16 %v4418
        %v4451 = vunpack.c.l.b16 %v4419
        %v4452 = vunpack.c.l.b16 %v4420
        %v4453 = vunpack.c.l.b16 %v4421
        %v4454 = vunpack.c.l.b16 %v4422
        %v4455 = vunpack.c.l.b16 %v4423
        %v4456 = vunpack.c.l.b16 %v4424
        %v4457 = vunpack.c.l.b16 %v4425
        %v4458 = vunpack.c.l.b16 %v4426
        %v4459 = vunpack.c.l.b16 %v4427
        %v4460 = vpack.c.b16 %v4445, %v4444
        %v4461 = vpack.c.b16 %v4447, %v4446
        %v4462 = vpack.c.b16 %v4449, %v4448
        %v4463 = vpack.c.b16 %v4451, %v4450
        %v4464 = vpack.c.b16 %v4453, %v4452
        %v4465 = vpack.c.b16 %v4455, %v4454
        %v4466 = vpack.c.b16 %v4457, %v4456
        %v4467 = vpack.c.b16 %v4459, %v4458
        %4476 = vmatprep.subr.bf16.mxu0 0
        %4477 = vmatpush1.bf16.msra.mxu0 %v4460
        %4478 = vmatprep.subr.bf16.mxu0 0
        %4479 = vmatpush1.bf16.msra.mxu0 %v4461
        %4480 = vmatprep.subr.bf16.mxu0 0
        %4481 = vmatpush1.bf16.msra.mxu0 %v4462
        %4482 = vmatprep.subr.bf16.mxu0 0
        %4483 = vmatpush1.bf16.msra.mxu0 %v4463
        %4484 = vmatprep.subr.bf16.mxu0 0
        %4485 = vmatpush1.bf16.msra.mxu0 %v4464
        %4486 = vmatprep.subr.bf16.mxu0 0
        %4487 = vmatpush1.bf16.msra.mxu0 %v4465
        %4488 = vmatprep.subr.bf16.mxu0 0
        %4489 = vmatpush1.bf16.msra.mxu0 %v4466
        %4490 = vmatprep.subr.bf16.mxu0 0
        %4491 = vmatpush1.bf16.msra.mxu0 %v4467
        %4492 = vmatprep.subr.bf16.mxu0 0
        %4493 = vmatpush1.bf16.msra.mxu0 0
        %4494 = vmatprep.subr.bf16.mxu0 0
        %4495 = vmatpush1.bf16.msra.mxu0 0
        %4496 = vmatprep.subr.bf16.mxu0 0
        %4497 = vmatpush1.bf16.msra.mxu0 0
        %4498 = vmatprep.subr.bf16.mxu0 0
        %4499 = vmatpush1.bf16.msra.mxu0 0
        %4500 = vmatprep.subr.bf16.mxu0 0
        %4501 = vmatpush1.bf16.msra.mxu0 0
        %4502 = vmatprep.subr.bf16.mxu0 0
        %4503 = vmatpush1.bf16.msra.mxu0 0
        %4504 = vmatprep.subr.bf16.mxu0 0
        %4505 = vmatpush1.bf16.msra.mxu0 0
        %4506 = vmatprep.subr.bf16.mxu0 0
        %4507 = vmatpush1.bf16.msra.mxu0 0
        %4508 = vmatprep.mubr.bf16.mxu0 0
        %4509 = vmatmul.mubr.bf16.gmra.mrb[0].mxu0 %v4411
        %v4510 = vpop.f32.mrb[0].mxu0
        %v4511 = vadd.f32 0.0, %v4510
        %v4512 = vpop.f32.mrb[0].mxu0
        %v4513 = vpop.f32.mrb[0].mxu0
        %v4514 = vadd.f32 0.0, %v4513
        %v4515 = vpop.f32.mrb[0].mxu0
        %4516 = vdwg.mxu0
        %v4517 = vadd.f32 %v4339, %v4511
        %v4518 = vadd.f32 %v4340, %v4514
        %v4519 = vld [vmem:[%s625] sm:$0x1]
        %v4521 = vlaneseq
        %v4522 = vshrl.u32 %v4521, 7
        %v4523 = vsub.s32 0, %v4522
        %v4524 = vrot.slane %v4519, %v4523
        %v4526 = vadd.f32 %v4517, %v4524
        %v4527 = vadd.f32 %v4518, %v4524
        %v4528 = vsel %vm677, %v4526, 0.0
        %4529 = vadd.xlane.f32.xlu0 %v4528
        %v4530 = vpop.xlane.xlu0 %4529
        %v4531 = vsel %vm677, %v4527, 0.0
        %4532 = vadd.xlane.f32.xlu0 %v4531
        %v4533 = vpop.xlane.xlu0 %4532
        %v4534 = vmul.f32 %v4530, %v4302
        %v4535 = vmul.f32 %v4533, %v4302
        %v4536 = vsub.f32 %v4526, %v4534
        %v4537 = vsub.f32 %v4527, %v4535
        %v4538 = vmul.f32 %v4536, %v4536
        %v4539 = vmul.f32 %v4537, %v4537
        %v4540 = vsel %vm677, %v4538, 0.0
        %4541 = vadd.xlane.f32.xlu0 %v4540
        %v4542 = vpop.xlane.xlu0 %4541
        %v4543 = vsel %vm677, %v4539, 0.0
        %4544 = vadd.xlane.f32.xlu0 %v4543
        %v4545 = vpop.xlane.xlu0 %4544
        %v4546 = vmul.f32 %v4542, %v4302
        %v4547 = vmul.f32 %v4545, %v4302
        %v4548 = vadd.f32 %v4546, 1e-05
        %v4549 = vadd.f32 %v4547, 1e-05
        %v4550 = vrsqrt.pop %v4548
        %v4551 = vrsqrt.pop %v4549
        %v4552 = vmul.f32 %v4536, %v4550
        %v4553 = vmul.f32 %v4537, %v4551
        %v4554 = vld [vmem:[%s634] sm:$0x1]
        %v4556 = vlaneseq
        %v4557 = vshrl.u32 %v4556, 7
        %v4558 = vsub.s32 0, %v4557
        %v4559 = vrot.slane %v4554, %v4558
        %v4561 = vmul.f32 %v4552, %v4559
        %v4562 = vmul.f32 %v4553, %v4559
        %v4563 = vld [vmem:[%s637] sm:$0x1]
        %v4565 = vlaneseq
        %v4566 = vshrl.u32 %v4565, 7
        %v4567 = vsub.s32 0, %v4566
        %v4568 = vrot.slane %v4563, %v4567
        %v4570 = vadd.f32 %v4561, %v4568
        %v4571 = vadd.f32 %v4562, %v4568
        %p4572 = scmp.lt.s32.totalorder %s30, 1
        // Predicated region
        $region77: #{tpu_custom_call.1} parent=71 // pred_check
          %p4573 = pneg %p4572
        $region78: #{tpu_custom_call.1} parent=71 // pred_check_branch
          %4575 = sbr.rel (%p4573) target = $region80
        $region79: #{tpu_custom_call.1} parent=71 // pred_region
          %4576 = vst.msk [vmem:[#allocation2] sm:$0xff] %vm677, %v4570
          %4577 = vst.msk [vmem:[#allocation2 + $0x8] sm:$0xff] %vm677, %v4571
        $region80: #{tpu_custom_call.1} parent=71 // pred_fallthru
          _
        %p4578 = scmp.eq.s32.totalorder %s30, 1
        // Predicated region
        $region81: #{tpu_custom_call.1} parent=71 // pred_check
          %p4579 = pneg %p4578
        $region82: #{tpu_custom_call.1} parent=71 // pred_check_branch
          %4581 = sbr.rel (%p4579) target = $region84
        $region83: #{tpu_custom_call.1} parent=71 // pred_region
          %v4582 = vpack.c.bf16 %v4570, %v4570
          %v4583 = vpack.c.bf16 %v4571, %v4571
          %vm4584 = vcmask 257024
          %4585 = vst.msk [vmem:[#allocation3] sm:$0xf] %vm4584, %v4582
          %4586 = vst.msk [vmem:[#allocation3 + $0x4] sm:$0xf] %vm4584, %v4583
        $region84: #{tpu_custom_call.1} parent=71 // pred_fallthru
          _
        // Predicated region
        $region85: #{tpu_custom_call.1} parent=71 // pred_check
          %p4587 = pneg %p393
        $region86: #{tpu_custom_call.1} parent=71 // pred_check_branch
          %4589 = sbr.rel (%p4587) target = $region88
        $region87: #{tpu_custom_call.1} parent=71 // pred_region
          %s4590 = smul.u32 2, %s29
          %s4592 = ssub.s32 128, 128
          %4593 = vsyncadd [#allocation4], %s4592
          %s4594 = smul.addr %s4590, 64
          %s4595 = scalar_lea.hbm %s13, %s4594
          %s4596 = sshll.u32 [#allocation3], 4
          %s4597 = int_to_ptr.vmem [resolvable:$true] %s4596
          %4602 = dma.vmem_to_hbm [thread:$0]  %s4597, 128, %s4595, [#allocation4], 64, 64, 4
        $region88: #{tpu_custom_call.1} parent=71 // pred_fallthru
          _
        // Predicated region
        $region89: #{tpu_custom_call.1} parent=71 // pred_check
          %p4603 = pneg %p393
        $region90: #{tpu_custom_call.1} parent=71 // pred_check_branch
          %4605 = sbr.rel (%p4603) target = $region92
        $region91: #{tpu_custom_call.1} parent=71 // pred_region
          %4606 = dma.done [#allocation4], 128
        $region92: #{tpu_custom_call.1} parent=71 // pred_fallthru
          _
      $region72: #{tpu_custom_call.1} parent=5 // pred_fallthru
        _
      %p4607 = scmp.le.s32.totalorder 2, %s20
      // Predicated region
      $region93: #{tpu_custom_call.1} parent=5 // pred_check
        %p4608 = pneg %p4607
      $region94: #{tpu_custom_call.1} parent=5 // pred_check_branch
        %4610 = sbr.rel (%p4608) target = $region96
      $region95: #{tpu_custom_call.1} parent=5 // pred_region
        %s4611 = ssub.s32 %s20, 2
      $region96: #{tpu_custom_call.1} parent=5 // pred_fallthru
        _
    $region6: #{tpu_custom_call.1} parent=1 // loop_footer
      %s24 = sadd.s32 1, %s20
    $region7: #{tpu_custom_call.1} parent=1 // loop_footer_branch
      %19 = sbr.rel target = $region3
    $region8: #{tpu_custom_call.1} parent=1 // loop_exit
      _
    %4612 = vsyncpa [#allocation4], 1
    %s4613 = scalar_lea.sflag [#allocation4], 1
    %4614 = vsyncpa %s4613, 1

</llo_original>
